<compile_context>
chip_gen: v7x
topology: tpu7x:2x2x1
jax: 0.10.0
libtpu: 0.0.40
codegen_flags: <defaults>
</compile_context>

<pallas_src>
import functools

import jax
import jax.numpy as jnp
from jax.experimental import pallas as pl
from jax.experimental.pallas import tpu as pltpu


# Explicit scoped-VMEM budget: > default (16 MiB v5e / 32 MiB v6e,v7x) so large
# tiles are allowed, with headroom under v7x's 64 MiB physical VMEM per TC.
_VMEM_LIMIT = 48 * 1024 * 1024


def _round_up(v, m):
    return ((v + m - 1) // m) * m


def _pick_chunk(n, target):
    c = max(1, min(target, n))
    while n % c:
        c -= 1
    return c


def _pad_gate_cols(a, H, Hp):
    """Re-lay a (..., 4H) gate-stacked array onto (..., 4Hp): gate k occupies
    lanes [k*Hp, k*Hp+H); padded lanes are zero."""
    a4 = a.reshape(a.shape[:-1] + (4, H))
    pad = [(0, 0)] * (a4.ndim - 1) + [(0, Hp - H)]
    return jnp.pad(a4, pad).reshape(a.shape[:-1] + (4 * Hp,))


# ---------------------------------------------------------------------------
# Parallel projection kernel:  out = x2d @ W + b   (gates_x = x @ Wi + bi)
# Tiled over (M, N, K) with an f32 VMEM accumulator.
# ---------------------------------------------------------------------------
def _proj_kernel(x_ref, w_ref, b_ref, o_ref, acc_ref):
    @pl.when(pl.program_id(2) == 0)
    def _():
        acc_ref[...] = jnp.zeros_like(acc_ref)

    w = w_ref[...]
    acc_ref[...] += jnp.dot(x_ref[...].astype(w.dtype), w,
                            preferred_element_type=jnp.float32)

    @pl.when(pl.program_id(2) == pl.num_programs(2) - 1)
    def _():
        o_ref[...] = (acc_ref[...] + b_ref[...]).astype(o_ref.dtype)


def _project(x2d, W, b, *, tm=512, tn=512, tk=512):
    M, K = x2d.shape
    N = W.shape[1]
    tm = min(tm, M)
    tn = min(tn, N)
    tk = min(tk, K)
    b2 = b.reshape(1, N).astype(jnp.float32)
    return pl.pallas_call(
        _proj_kernel,
        out_shape=jax.ShapeDtypeStruct((M, N), jnp.float32),
        grid_spec=pltpu.PrefetchScalarGridSpec(
            num_scalar_prefetch=0,
            grid=(pl.cdiv(M, tm), pl.cdiv(N, tn), pl.cdiv(K, tk)),
            in_specs=[
                pl.BlockSpec((tm, tk), lambda i, j, k: (i, k)),
                pl.BlockSpec((tk, tn), lambda i, j, k: (k, j)),
                pl.BlockSpec((1, tn), lambda i, j, k: (0, j)),
            ],
            out_specs=pl.BlockSpec((tm, tn), lambda i, j, k: (i, j)),
            scratch_shapes=[pltpu.VMEM((tm, tn), jnp.float32)],
        ),
        compiler_params=pltpu.CompilerParams(
            dimension_semantics=("parallel", "parallel", "arbitrary"),
            vmem_limit_bytes=_VMEM_LIMIT),
    )(x2d, W, b2)


# ---------------------------------------------------------------------------
# Serial recurrence kernel (time chunked, batch-block parallel) with the
# output projection fused per chunk.
#   grid = (B // b_block  [parallel],  S // tc  [arbitrary])
# ---------------------------------------------------------------------------
def _lstm2_recurrent_kernel(gx_ref, h0_ref, wh_ref, wo_ref, bo_ref,
                            out_ref, hT_ref, h_sc, c_sc, h_buf, *, unroll):
    t = pl.program_id(1)

    # First time-chunk of each batch block: init h and c from h0 (c_t = h_t).
    @pl.when(t == 0)
    def _():
        h_sc[...] = h0_ref[...]
        c_sc[...] = h0_ref[...]

    tc = gx_ref.shape[0]          # static chunk length
    Hp = h_sc.shape[-1]           # padded hidden size (multiple of 128)
    wh = wh_ref[...]              # hoisted weight load (possibly bf16)

    def step(s, carry):
        h, c = carry
        gates = gx_ref[s] + jnp.dot(h.astype(wh.dtype), wh,
                                    preferred_element_type=jnp.float32)
        # Hp is a multiple of 128, so every slice below is lane-dense.
        i_g = jax.nn.sigmoid(gates[:, 0 * Hp:1 * Hp])
        f_g = jax.nn.sigmoid(gates[:, 1 * Hp:2 * Hp])
        g_g = jnp.tanh(gates[:, 2 * Hp:3 * Hp])
        o_g = jax.nn.sigmoid(gates[:, 3 * Hp:4 * Hp])
        c_new = c * f_g + i_g * g_g
        h_new = o_g * jnp.tanh(c_new)
        h_buf[s] = h_new          # lane-dense VMEM store (never hits HBM)
        return h_new, c_new

    h_fin, c_fin = jax.lax.fori_loop(0, tc, step, (h_sc[...], c_sc[...]),
                                     unroll=unroll)
    h_sc[...] = h_fin
    c_sc[...] = c_fin
    # Same block index across t -> stays VMEM-resident, written back once.
    hT_ref[...] = h_fin

    # Fused output projection for this chunk: one MXU-dense matmul that
    # overlaps with the next chunk's gates_x DMA.
    bsz = h_buf.shape[1]
    wo = wo_ref[...]
    h_chunk = h_buf[...].reshape(tc * bsz, Hp)
    outs = jnp.dot(h_chunk.astype(wo.dtype), wo,
                   preferred_element_type=jnp.float32) + bo_ref[...]
    out_ref[...] = outs.reshape(tc, bsz, -1).astype(out_ref.dtype)


def lstm2_forward(x, h0, Wi, Wh, bi, Wo, bo, *, t_chunk=16, unroll=8,
                  b_block=None, weights_dtype=jnp.float32):
    """test=False branch of LSTM2.forward. Returns (outputs, h_T).

    weights_dtype=jnp.bfloat16 is the recommended production setting on
    v6e/v7x (bf16 MXU path, half the weight VMEM); gate math and all matmul
    accumulation stay in float32.
    """
    S, B, E = x.shape
    H = Wh.shape[0]
    O = Wo.shape[1]
    Hp = _round_up(H, 128)
    Op = _round_up(O, 128)

    # --- pad weights/bias/state so gate slices and all stores are lane-dense.
    Wi_p = _pad_gate_cols(Wi, H, Hp).astype(weights_dtype)
    Wh_p = jnp.pad(_pad_gate_cols(Wh, H, Hp),
                   ((0, Hp - H), (0, 0))).astype(weights_dtype)
    bi_p = _pad_gate_cols(bi, H, Hp).astype(jnp.float32)
    Wo_p = jnp.pad(Wo, ((0, Hp - H), (0, Op - O))).astype(weights_dtype)
    bo_p = jnp.pad(bo, (0, Op - O)).astype(jnp.float32).reshape(1, Op)
    h0_p = jnp.pad(h0.astype(jnp.float32), ((0, 0), (0, Hp - H)))

    # 1) Bulk input projection (parallel, MXU-dense): gates_x = x @ Wi + bi.
    gx = _project(x.reshape(S * B, E).astype(jnp.float32), Wi_p, bi_p)
    gx = gx.reshape(S, B, 4 * Hp)

    # 2) Serial recurrence over time (chunked) with fused output projection.
    tc = _pick_chunk(S, t_chunk)
    if b_block is None:
        b_block = 8 if (B % 8 == 0) else B   # >=2 blocks lets v7x use both TCs
    assert B % b_block == 0, "b_block must divide batch"
    nb = B // b_block

    single = dict(pipeline_mode=pl.Buffered(1))   # grid-invariant operands
    outs_p, hT_p = pl.pallas_call(
        functools.partial(_lstm2_recurrent_kernel, unroll=min(unroll, tc)),
        out_shape=(jax.ShapeDtypeStruct((S, B, Op), jnp.float32),
                   jax.ShapeDtypeStruct((B, Hp), jnp.float32)),
        grid_spec=pltpu.PrefetchScalarGridSpec(
            num_scalar_prefetch=0,
            grid=(nb, S // tc),
            in_specs=[
                pl.BlockSpec((tc, b_block, 4 * Hp), lambda b, t: (t, b, 0)),
                pl.BlockSpec((b_block, Hp), lambda b, t: (b, 0), **single),
                pl.BlockSpec((Hp, 4 * Hp), lambda b, t: (0, 0), **single),
                pl.BlockSpec((Hp, Op), lambda b, t: (0, 0), **single),
                pl.BlockSpec((1, Op), lambda b, t: (0, 0), **single),
            ],
            out_specs=(
                pl.BlockSpec((tc, b_block, Op), lambda b, t: (t, b, 0)),
                pl.BlockSpec((b_block, Hp), lambda b, t: (b, 0)),
            ),
            scratch_shapes=[
                pltpu.VMEM((b_block, Hp), jnp.float32),       # h state
                pltpu.VMEM((b_block, Hp), jnp.float32),       # c state
                pltpu.VMEM((tc, b_block, Hp), jnp.float32),   # chunk h history
            ],
        ),
        compiler_params=pltpu.CompilerParams(
            dimension_semantics=("parallel", "arbitrary"),
            vmem_limit_bytes=_VMEM_LIMIT),
    )(gx, h0_p, Wh_p, Wo_p, bo_p)

    # Drop padded output lanes / hidden lanes.
    return outs_p[..., :O], hT_p[:, :H]


# ---------------------------------------------------------------------------
# Pure-JAX reference matching the PyTorch forward (test=False).
# ---------------------------------------------------------------------------
def lstm2_reference(x, h0, Wi, Wh, bi, Wo, bo):
    H = Wh.shape[0]
    h = h0
    c = h0
    outs = []
    for i in range(x.shape[0]):
        gates = x[i] @ Wi + h @ Wh + bi
        i_g = jax.nn.sigmoid(gates[:, 0 * H:1 * H])
        f_g = jax.nn.sigmoid(gates[:, 1 * H:2 * H])
        g_g = jnp.tanh(gates[:, 2 * H:3 * H])
        o_g = jax.nn.sigmoid(gates[:, 3 * H:4 * H])
        c = c * f_g + i_g * g_g
        h = o_g * jnp.tanh(c)
        outs.append(h @ Wo + bo)
    return jnp.stack(outs), h


if __name__ == "__main__":
    # Small shapes consistent with the module's forward; seq/batch chosen so
    # both the multi-chunk time carry and the batch-block axis are exercised.
    seq_len, batch, input_size, hidden_size, output_size = 32, 16, 16, 32, 16

    key = jax.random.PRNGKey(0)
    kx, k1, k2, k3, k4, k5 = jax.random.split(key, 6)

    stdv = 1.0 / hidden_size ** 0.5
    Wi = jax.random.uniform(k1, (input_size, hidden_size * 4),
                            minval=-stdv, maxval=stdv, dtype=jnp.float32)
    Wh = jax.random.uniform(k2, (hidden_size, hidden_size * 4),
                            minval=-stdv, maxval=stdv, dtype=jnp.float32)
    Wo = jax.random.uniform(k3, (hidden_size, output_size),
                            minval=-stdv, maxval=stdv, dtype=jnp.float32)
    bi = jax.random.uniform(k4, (hidden_size * 4,),
                            minval=-stdv, maxval=stdv, dtype=jnp.float32)
    bo = jax.random.uniform(k5, (output_size,),
                            minval=-stdv, maxval=stdv, dtype=jnp.float32)

    x = jax.random.normal(kx, (seq_len, batch, input_size), dtype=jnp.float32)
    h0 = jnp.zeros((batch, hidden_size), dtype=jnp.float32)   # init_hidden

    with jax.default_matmul_precision("highest"):
        ref_outs, ref_hT = lstm2_reference(x, h0, Wi, Wh, bi, Wo, bo)

    # f32 path (v5e-style): tight check against the pure-JAX reference.
    outs, hT = lstm2_forward(x, h0, Wi, Wh, bi, Wo, bo)
    jax.block_until_ready((outs, hT))
    assert jnp.allclose(outs, ref_outs, atol=1e-3, rtol=1e-3)
    assert jnp.allclose(hT, ref_hT, atol=1e-3, rtol=1e-3)

    # bf16-weight path (v6e/v7x production setting): looser tolerance.
    outs_bf, hT_bf = lstm2_forward(x, h0, Wi, Wh, bi, Wo, bo,
                                   weights_dtype=jnp.bfloat16)
    jax.block_until_ready((outs_bf, hT_bf))
    assert jnp.allclose(outs_bf, ref_outs, atol=1e-1, rtol=1e-1)
    assert jnp.allclose(hT_bf, ref_hT, atol=1e-1, rtol=1e-1)

    print("KERNEL_OK")
</pallas_src>

<mosaic_0001>
module attributes {stable_mosaic.version = 11 : i64} {
  func.func @_proj_kernel(%arg0: i32, %arg1: i32, %arg2: i32, %arg3: memref<512x16xf32, #tpu.memory_space<vmem>>, %arg4: memref<16x512xf32, #tpu.memory_space<vmem>>, %arg5: memref<1x512xf32, #tpu.memory_space<vmem>>, %arg6: memref<512x512xf32, #tpu.memory_space<vmem>>, %arg7: memref<512x512xf32, #tpu.memory_space<vmem>>) attributes {dimension_semantics = [#tpu.dimension_semantics<parallel>, #tpu.dimension_semantics<parallel>, #tpu.dimension_semantics<arbitrary>], iteration_bounds = array<i64: 1, 1, 1>, scalar_prefetch = 0 : i64, scratch_operands = 1 : i64, tpu.core_type = #tpu.core_type<tc>, window_params = [{transform_indices = @transform_0, window_bounds = array<i64: 512, 16>}, {transform_indices = @transform_1, window_bounds = array<i64: 16, 512>}, {transform_indices = @transform_2, window_bounds = array<i64: 1, 512>}, {transform_indices = @transform_3, window_bounds = array<i64: 512, 512>}]} {
    %c0_i32 = arith.constant 0 : i32
    %0 = arith.cmpi eq, %arg2, %c0_i32 : i32
    %1 = arith.extui %0 : i1 to i32
    %c0_i32_0 = arith.constant 0 : i32
    %2 = arith.cmpi ne, %1, %c0_i32_0 : i32
    scf.if %2 {
      %cst_10 = arith.constant 0.000000e+00 : f32
      %12 = vector.broadcast %cst_10 : f32 to vector<512x512xf32>
      %c0_11 = arith.constant 0 : index
      %c0_12 = arith.constant 0 : index
      %13 = vector.load %arg7[%c0_11, %c0_12] : memref<512x512xf32, #tpu.memory_space<vmem>>, vector<512x512xf32>
      tpu.vector_store %arg7[%c0_11, %c0_12], %12 {strides = array<i32>} : memref<512x512xf32, #tpu.memory_space<vmem>>, vector<512x512xf32>,
    } else {
    }
    %c0 = arith.constant 0 : index
    %c0_1 = arith.constant 0 : index
    %3 = vector.load %arg4[%c0, %c0_1] : memref<16x512xf32, #tpu.memory_space<vmem>>, vector<16x512xf32>
    %c0_2 = arith.constant 0 : index
    %c0_3 = arith.constant 0 : index
    %4 = vector.load %arg7[%c0_2, %c0_3] : memref<512x512xf32, #tpu.memory_space<vmem>>, vector<512x512xf32>
    %c0_4 = arith.constant 0 : index
    %c0_5 = arith.constant 0 : index
    %5 = vector.load %arg3[%c0_4, %c0_5] : memref<512x16xf32, #tpu.memory_space<vmem>>, vector<512x16xf32>
    %cst = arith.constant dense<0.000000e+00> : vector<512x512xf32>
    %6 = tpu.matmul %5, %3, %cst {dimension_numbers = #tpu.dot_dimension_numbers<[1], [0], [0], [1], [0, 0, 1, 1], [], []>} : vector<512x16xf32>, vector<16x512xf32>, vector<512x512xf32> -> vector<512x512xf32>
    %7 = arith.addf %4, %6 : vector<512x512xf32>
    %c0_6 = arith.constant 0 : index
    %c0_7 = arith.constant 0 : index
    %8 = vector.load %arg7[%c0_6, %c0_7] : memref<512x512xf32, #tpu.memory_space<vmem>>, vector<512x512xf32>
    tpu.vector_store %arg7[%c0_6, %c0_7], %7 {strides = array<i32>} : memref<512x512xf32, #tpu.memory_space<vmem>>, vector<512x512xf32>,
    %c0_i32_8 = arith.constant 0 : i32
    %9 = arith.cmpi eq, %arg2, %c0_i32_8 : i32
    %10 = arith.extui %9 : i1 to i32
    %c0_i32_9 = arith.constant 0 : i32
    %11 = arith.cmpi ne, %10, %c0_i32_9 : i32
    scf.if %11 {
      %c0_10 = arith.constant 0 : index
      %c0_11 = arith.constant 0 : index
      %12 = vector.load %arg7[%c0_10, %c0_11] : memref<512x512xf32, #tpu.memory_space<vmem>>, vector<512x512xf32>
      %c0_12 = arith.constant 0 : index
      %c0_13 = arith.constant 0 : index
      %13 = vector.load %arg5[%c0_12, %c0_13] : memref<1x512xf32, #tpu.memory_space<vmem>>, vector<1x512xf32>
      %14 = vector.broadcast %13 : vector<1x512xf32> to vector<512x512xf32>
      %15 = arith.addf %12, %14 : vector<512x512xf32>
      %c0_14 = arith.constant 0 : index
      %c0_15 = arith.constant 0 : index
      %16 = vector.load %arg6[%c0_14, %c0_15] : memref<512x512xf32, #tpu.memory_space<vmem>>, vector<512x512xf32>
      tpu.vector_store %arg6[%c0_14, %c0_15], %15 {strides = array<i32>} : memref<512x512xf32, #tpu.memory_space<vmem>>, vector<512x512xf32>,
    } else {
    }
    return
  }
  func.func @transform_0(%arg0: i32, %arg1: i32, %arg2: i32) -> (i32, i32) {
    %c0_i32 = arith.constant 0 : i32
    return %arg0, %arg2 : i32, i32
  }
  func.func @transform_1(%arg0: i32, %arg1: i32, %arg2: i32) -> (i32, i32) {
    %c0_i32 = arith.constant 0 : i32
    return %arg2, %arg1 : i32, i32
  }
  func.func @transform_2(%arg0: i32, %arg1: i32, %arg2: i32) -> (i32, i32) {
    %c0_i32 = arith.constant 0 : i32
    %c0_i32_0 = arith.constant 0 : i32
    return %c0_i32, %arg1 : i32, i32
  }
  func.func @transform_3(%arg0: i32, %arg1: i32, %arg2: i32) -> (i32, i32) {
    %c0_i32 = arith.constant 0 : i32
    return %arg0, %arg1 : i32, i32
  }
}

</mosaic_0001>

<llo_original>
// kernel: tpu_custom_call.1
$region0: #{tpu_custom_call.1}
  #allocation0 [shape = 'u32[]', space=smem, size = 0x4, offset = 0x4, fixed_abs, tag = 'smem constant byte address 0x4 - core index']
  #allocation1 [shape = 'u32[144,128]{1,0:T(1,128)}', space=vmem, size = 0x12000, scoped, tag = 'internal scratch']
  #allocation2 [shape = 'f32[512,512]{1,0:T(8,128)}', space=vmem, size = 0x100000, scoped, tag = 'scratch operand']
  %s0 = inlined_call_operand.vmem [shape: f32[512,16], index: 0, kind: input, shape index: {}]
  %s1 = inlined_call_operand.vmem [shape: f32[16,512], index: 1, kind: input, shape index: {}]
  %s2 = inlined_call_operand.vmem [shape: f32[1,512], index: 2, kind: input, shape index: {}]
  %s3 = inlined_call_operand.hbm [shape: f32[512,512], index: 3, kind: output, shape index: {}]
  %s4 = sld [smem:[#allocation0]]
  $region30: #{tpu_custom_call.1} parent=0
    _
  %s6 = ssub.s32 1, %s4
  %s7 = scalar_select 0, %s6, %s4
  $region1: #{tpu_custom_call.1} parent=0
    #allocation3 [shape = 'u8[1048576]{0}', space=vmem, size = 0x100000, scoped, tag = 'output window, operand 0, single buffered']
    #allocation4 [shape = 's32[1]{0}', space=sflag, size = 0x4, scoped, tag = 'scoped memory for tpu_custom_call.1']
    %8 = vsyncpa [#allocation4], 0
    // Predicated region
    $region2: #{tpu_custom_call.1} parent=1 // pred_check
      _
    $region3: #{tpu_custom_call.1} parent=1 // pred_check_branch
      %10 = sbr.rel (0) target = $region5
    $region4: #{tpu_custom_call.1} parent=1 // pred_region
      _
    $region5: #{tpu_custom_call.1} parent=1 // pred_fallthru
      _
    // Predicated region
    $region6: #{tpu_custom_call.1} parent=1 // pred_check
      _
    $region7: #{tpu_custom_call.1} parent=1 // pred_check_branch
      %12 = sbr.rel (0) target = $region9
    $region8: #{tpu_custom_call.1} parent=1 // pred_region
      _
    $region9: #{tpu_custom_call.1} parent=1 // pred_fallthru
      _
    // Predicated region
    $region10: #{tpu_custom_call.1} parent=1 // pred_check
      _
    $region11: #{tpu_custom_call.1} parent=1 // pred_check_branch
      %14 = sbr.rel (0) target = $region13
    $region12: #{tpu_custom_call.1} parent=1 // pred_region
      _
    $region13: #{tpu_custom_call.1} parent=1 // pred_fallthru
      _
    %p15 = scmp.eq.s32.totalorder 0, 0
    // Predicated region
    $region14: #{tpu_custom_call.1} parent=1 // pred_check
      %p16 = pneg %p15
    $region15: #{tpu_custom_call.1} parent=1 // pred_check_branch
      %18 = sbr.rel (%p16) target = $region17
    $region16: #{tpu_custom_call.1} parent=1 // pred_region
      %19 = vst [vmem:[#allocation2] sm:$0xff] 0.0
      %20 = vst [vmem:[#allocation2 + $0x8] sm:$0xff] 0.0
      %21 = vst [vmem:[#allocation2 + $0x10] sm:$0xff] 0.0
      %22 = vst [vmem:[#allocation2 + $0x18] sm:$0xff] 0.0
      %23 = vst [vmem:[#allocation2 + $0x20] sm:$0xff] 0.0
      %24 = vst [vmem:[#allocation2 + $0x28] sm:$0xff] 0.0
      %25 = vst [vmem:[#allocation2 + $0x30] sm:$0xff] 0.0
      %26 = vst [vmem:[#allocation2 + $0x38] sm:$0xff] 0.0
      %27 = vst [vmem:[#allocation2 + $0x40] sm:$0xff] 0.0
      %28 = vst [vmem:[#allocation2 + $0x48] sm:$0xff] 0.0
      %29 = vst [vmem:[#allocation2 + $0x50] sm:$0xff] 0.0
      %30 = vst [vmem:[#allocation2 + $0x58] sm:$0xff] 0.0
      %31 = vst [vmem:[#allocation2 + $0x60] sm:$0xff] 0.0
      %32 = vst [vmem:[#allocation2 + $0x68] sm:$0xff] 0.0
      %33 = vst [vmem:[#allocation2 + $0x70] sm:$0xff] 0.0
      %34 = vst [vmem:[#allocation2 + $0x78] sm:$0xff] 0.0
      %35 = vst [vmem:[#allocation2 + $0x80] sm:$0xff] 0.0
      %36 = vst [vmem:[#allocation2 + $0x88] sm:$0xff] 0.0
      %37 = vst [vmem:[#allocation2 + $0x90] sm:$0xff] 0.0
      %38 = vst [vmem:[#allocation2 + $0x98] sm:$0xff] 0.0
      %39 = vst [vmem:[#allocation2 + $0xa0] sm:$0xff] 0.0
      %40 = vst [vmem:[#allocation2 + $0xa8] sm:$0xff] 0.0
      %41 = vst [vmem:[#allocation2 + $0xb0] sm:$0xff] 0.0
      %42 = vst [vmem:[#allocation2 + $0xb8] sm:$0xff] 0.0
      %43 = vst [vmem:[#allocation2 + $0xc0] sm:$0xff] 0.0
      %44 = vst [vmem:[#allocation2 + $0xc8] sm:$0xff] 0.0
      %45 = vst [vmem:[#allocation2 + $0xd0] sm:$0xff] 0.0
      %46 = vst [vmem:[#allocation2 + $0xd8] sm:$0xff] 0.0
      %47 = vst [vmem:[#allocation2 + $0xe0] sm:$0xff] 0.0
      %48 = vst [vmem:[#allocation2 + $0xe8] sm:$0xff] 0.0
      %49 = vst [vmem:[#allocation2 + $0xf0] sm:$0xff] 0.0
      %50 = vst [vmem:[#allocation2 + $0xf8] sm:$0xff] 0.0
      %51 = vst [vmem:[#allocation2 + $0x100] sm:$0xff] 0.0
      %52 = vst [vmem:[#allocation2 + $0x108] sm:$0xff] 0.0
      %53 = vst [vmem:[#allocation2 + $0x110] sm:$0xff] 0.0
      %54 = vst [vmem:[#allocation2 + $0x118] sm:$0xff] 0.0
      %55 = vst [vmem:[#allocation2 + $0x120] sm:$0xff] 0.0
      %56 = vst [vmem:[#allocation2 + $0x128] sm:$0xff] 0.0
      %57 = vst [vmem:[#allocation2 + $0x130] sm:$0xff] 0.0
      %58 = vst [vmem:[#allocation2 + $0x138] sm:$0xff] 0.0
      %59 = vst [vmem:[#allocation2 + $0x140] sm:$0xff] 0.0
      %60 = vst [vmem:[#allocation2 + $0x148] sm:$0xff] 0.0
      %61 = vst [vmem:[#allocation2 + $0x150] sm:$0xff] 0.0
      %62 = vst [vmem:[#allocation2 + $0x158] sm:$0xff] 0.0
      %63 = vst [vmem:[#allocation2 + $0x160] sm:$0xff] 0.0
      %64 = vst [vmem:[#allocation2 + $0x168] sm:$0xff] 0.0
      %65 = vst [vmem:[#allocation2 + $0x170] sm:$0xff] 0.0
      %66 = vst [vmem:[#allocation2 + $0x178] sm:$0xff] 0.0
      %67 = vst [vmem:[#allocation2 + $0x180] sm:$0xff] 0.0
      %68 = vst [vmem:[#allocation2 + $0x188] sm:$0xff] 0.0
      %69 = vst [vmem:[#allocation2 + $0x190] sm:$0xff] 0.0
      %70 = vst [vmem:[#allocation2 + $0x198] sm:$0xff] 0.0
      %71 = vst [vmem:[#allocation2 + $0x1a0] sm:$0xff] 0.0
      %72 = vst [vmem:[#allocation2 + $0x1a8] sm:$0xff] 0.0
      %73 = vst [vmem:[#allocation2 + $0x1b0] sm:$0xff] 0.0
      %74 = vst [vmem:[#allocation2 + $0x1b8] sm:$0xff] 0.0
      %75 = vst [vmem:[#allocation2 + $0x1c0] sm:$0xff] 0.0
      %76 = vst [vmem:[#allocation2 + $0x1c8] sm:$0xff] 0.0
      %77 = vst [vmem:[#allocation2 + $0x1d0] sm:$0xff] 0.0
      %78 = vst [vmem:[#allocation2 + $0x1d8] sm:$0xff] 0.0
      %79 = vst [vmem:[#allocation2 + $0x1e0] sm:$0xff] 0.0
      %80 = vst [vmem:[#allocation2 + $0x1e8] sm:$0xff] 0.0
      %81 = vst [vmem:[#allocation2 + $0x1f0] sm:$0xff] 0.0
      %82 = vst [vmem:[#allocation2 + $0x1f8] sm:$0xff] 0.0
      %83 = vst [vmem:[#allocation2 + $0x200] sm:$0xff] 0.0
      %84 = vst [vmem:[#allocation2 + $0x208] sm:$0xff] 0.0
      %85 = vst [vmem:[#allocation2 + $0x210] sm:$0xff] 0.0
      %86 = vst [vmem:[#allocation2 + $0x218] sm:$0xff] 0.0
      %87 = vst [vmem:[#allocation2 + $0x220] sm:$0xff] 0.0
      %88 = vst [vmem:[#allocation2 + $0x228] sm:$0xff] 0.0
      %89 = vst [vmem:[#allocation2 + $0x230] sm:$0xff] 0.0
      %90 = vst [vmem:[#allocation2 + $0x238] sm:$0xff] 0.0
      %91 = vst [vmem:[#allocation2 + $0x240] sm:$0xff] 0.0
      %92 = vst [vmem:[#allocation2 + $0x248] sm:$0xff] 0.0
      %93 = vst [vmem:[#allocation2 + $0x250] sm:$0xff] 0.0
      %94 = vst [vmem:[#allocation2 + $0x258] sm:$0xff] 0.0
      %95 = vst [vmem:[#allocation2 + $0x260] sm:$0xff] 0.0
      %96 = vst [vmem:[#allocation2 + $0x268] sm:$0xff] 0.0
      %97 = vst [vmem:[#allocation2 + $0x270] sm:$0xff] 0.0
      %98 = vst [vmem:[#allocation2 + $0x278] sm:$0xff] 0.0
      %99 = vst [vmem:[#allocation2 + $0x280] sm:$0xff] 0.0
      %100 = vst [vmem:[#allocation2 + $0x288] sm:$0xff] 0.0
      %101 = vst [vmem:[#allocation2 + $0x290] sm:$0xff] 0.0
      %102 = vst [vmem:[#allocation2 + $0x298] sm:$0xff] 0.0
      %103 = vst [vmem:[#allocation2 + $0x2a0] sm:$0xff] 0.0
      %104 = vst [vmem:[#allocation2 + $0x2a8] sm:$0xff] 0.0
      %105 = vst [vmem:[#allocation2 + $0x2b0] sm:$0xff] 0.0
      %106 = vst [vmem:[#allocation2 + $0x2b8] sm:$0xff] 0.0
      %107 = vst [vmem:[#allocation2 + $0x2c0] sm:$0xff] 0.0
      %108 = vst [vmem:[#allocation2 + $0x2c8] sm:$0xff] 0.0
      %109 = vst [vmem:[#allocation2 + $0x2d0] sm:$0xff] 0.0
      %110 = vst [vmem:[#allocation2 + $0x2d8] sm:$0xff] 0.0
      %111 = vst [vmem:[#allocation2 + $0x2e0] sm:$0xff] 0.0
      %112 = vst [vmem:[#allocation2 + $0x2e8] sm:$0xff] 0.0
      %113 = vst [vmem:[#allocation2 + $0x2f0] sm:$0xff] 0.0
      %114 = vst [vmem:[#allocation2 + $0x2f8] sm:$0xff] 0.0
      %115 = vst [vmem:[#allocation2 + $0x300] sm:$0xff] 0.0
      %116 = vst [vmem:[#allocation2 + $0x308] sm:$0xff] 0.0
      %117 = vst [vmem:[#allocation2 + $0x310] sm:$0xff] 0.0
      %118 = vst [vmem:[#allocation2 + $0x318] sm:$0xff] 0.0
      %119 = vst [vmem:[#allocation2 + $0x320] sm:$0xff] 0.0
      %120 = vst [vmem:[#allocation2 + $0x328] sm:$0xff] 0.0
      %121 = vst [vmem:[#allocation2 + $0x330] sm:$0xff] 0.0
      %122 = vst [vmem:[#allocation2 + $0x338] sm:$0xff] 0.0
      %123 = vst [vmem:[#allocation2 + $0x340] sm:$0xff] 0.0
      %124 = vst [vmem:[#allocation2 + $0x348] sm:$0xff] 0.0
      %125 = vst [vmem:[#allocation2 + $0x350] sm:$0xff] 0.0
      %126 = vst [vmem:[#allocation2 + $0x358] sm:$0xff] 0.0
      %127 = vst [vmem:[#allocation2 + $0x360] sm:$0xff] 0.0
      %128 = vst [vmem:[#allocation2 + $0x368] sm:$0xff] 0.0
      %129 = vst [vmem:[#allocation2 + $0x370] sm:$0xff] 0.0
      %130 = vst [vmem:[#allocation2 + $0x378] sm:$0xff] 0.0
      %131 = vst [vmem:[#allocation2 + $0x380] sm:$0xff] 0.0
      %132 = vst [vmem:[#allocation2 + $0x388] sm:$0xff] 0.0
      %133 = vst [vmem:[#allocation2 + $0x390] sm:$0xff] 0.0
      %134 = vst [vmem:[#allocation2 + $0x398] sm:$0xff] 0.0
      %135 = vst [vmem:[#allocation2 + $0x3a0] sm:$0xff] 0.0
      %136 = vst [vmem:[#allocation2 + $0x3a8] sm:$0xff] 0.0
      %137 = vst [vmem:[#allocation2 + $0x3b0] sm:$0xff] 0.0
      %138 = vst [vmem:[#allocation2 + $0x3b8] sm:$0xff] 0.0
      %139 = vst [vmem:[#allocation2 + $0x3c0] sm:$0xff] 0.0
      %140 = vst [vmem:[#allocation2 + $0x3c8] sm:$0xff] 0.0
      %141 = vst [vmem:[#allocation2 + $0x3d0] sm:$0xff] 0.0
      %142 = vst [vmem:[#allocation2 + $0x3d8] sm:$0xff] 0.0
      %143 = vst [vmem:[#allocation2 + $0x3e0] sm:$0xff] 0.0
      %144 = vst [vmem:[#allocation2 + $0x3e8] sm:$0xff] 0.0
      %145 = vst [vmem:[#allocation2 + $0x3f0] sm:$0xff] 0.0
      %146 = vst [vmem:[#allocation2 + $0x3f8] sm:$0xff] 0.0
      %147 = vst [vmem:[#allocation2 + $0x400] sm:$0xff] 0.0
      %148 = vst [vmem:[#allocation2 + $0x408] sm:$0xff] 0.0
      %149 = vst [vmem:[#allocation2 + $0x410] sm:$0xff] 0.0
      %150 = vst [vmem:[#allocation2 + $0x418] sm:$0xff] 0.0
      %151 = vst [vmem:[#allocation2 + $0x420] sm:$0xff] 0.0
      %152 = vst [vmem:[#allocation2 + $0x428] sm:$0xff] 0.0
      %153 = vst [vmem:[#allocation2 + $0x430] sm:$0xff] 0.0
      %154 = vst [vmem:[#allocation2 + $0x438] sm:$0xff] 0.0
      %155 = vst [vmem:[#allocation2 + $0x440] sm:$0xff] 0.0
      %156 = vst [vmem:[#allocation2 + $0x448] sm:$0xff] 0.0
      %157 = vst [vmem:[#allocation2 + $0x450] sm:$0xff] 0.0
      %158 = vst [vmem:[#allocation2 + $0x458] sm:$0xff] 0.0
      %159 = vst [vmem:[#allocation2 + $0x460] sm:$0xff] 0.0
      %160 = vst [vmem:[#allocation2 + $0x468] sm:$0xff] 0.0
      %161 = vst [vmem:[#allocation2 + $0x470] sm:$0xff] 0.0
      %162 = vst [vmem:[#allocation2 + $0x478] sm:$0xff] 0.0
      %163 = vst [vmem:[#allocation2 + $0x480] sm:$0xff] 0.0
      %164 = vst [vmem:[#allocation2 + $0x488] sm:$0xff] 0.0
      %165 = vst [vmem:[#allocation2 + $0x490] sm:$0xff] 0.0
      %166 = vst [vmem:[#allocation2 + $0x498] sm:$0xff] 0.0
      %167 = vst [vmem:[#allocation2 + $0x4a0] sm:$0xff] 0.0
      %168 = vst [vmem:[#allocation2 + $0x4a8] sm:$0xff] 0.0
      %169 = vst [vmem:[#allocation2 + $0x4b0] sm:$0xff] 0.0
      %170 = vst [vmem:[#allocation2 + $0x4b8] sm:$0xff] 0.0
      %171 = vst [vmem:[#allocation2 + $0x4c0] sm:$0xff] 0.0
      %172 = vst [vmem:[#allocation2 + $0x4c8] sm:$0xff] 0.0
      %173 = vst [vmem:[#allocation2 + $0x4d0] sm:$0xff] 0.0
      %174 = vst [vmem:[#allocation2 + $0x4d8] sm:$0xff] 0.0
      %175 = vst [vmem:[#allocation2 + $0x4e0] sm:$0xff] 0.0
      %176 = vst [vmem:[#allocation2 + $0x4e8] sm:$0xff] 0.0
      %177 = vst [vmem:[#allocation2 + $0x4f0] sm:$0xff] 0.0
      %178 = vst [vmem:[#allocation2 + $0x4f8] sm:$0xff] 0.0
      %179 = vst [vmem:[#allocation2 + $0x500] sm:$0xff] 0.0
      %180 = vst [vmem:[#allocation2 + $0x508] sm:$0xff] 0.0
      %181 = vst [vmem:[#allocation2 + $0x510] sm:$0xff] 0.0
      %182 = vst [vmem:[#allocation2 + $0x518] sm:$0xff] 0.0
      %183 = vst [vmem:[#allocation2 + $0x520] sm:$0xff] 0.0
      %184 = vst [vmem:[#allocation2 + $0x528] sm:$0xff] 0.0
      %185 = vst [vmem:[#allocation2 + $0x530] sm:$0xff] 0.0
      %186 = vst [vmem:[#allocation2 + $0x538] sm:$0xff] 0.0
      %187 = vst [vmem:[#allocation2 + $0x540] sm:$0xff] 0.0
      %188 = vst [vmem:[#allocation2 + $0x548] sm:$0xff] 0.0
      %189 = vst [vmem:[#allocation2 + $0x550] sm:$0xff] 0.0
      %190 = vst [vmem:[#allocation2 + $0x558] sm:$0xff] 0.0
      %191 = vst [vmem:[#allocation2 + $0x560] sm:$0xff] 0.0
      %192 = vst [vmem:[#allocation2 + $0x568] sm:$0xff] 0.0
      %193 = vst [vmem:[#allocation2 + $0x570] sm:$0xff] 0.0
      %194 = vst [vmem:[#allocation2 + $0x578] sm:$0xff] 0.0
      %195 = vst [vmem:[#allocation2 + $0x580] sm:$0xff] 0.0
      %196 = vst [vmem:[#allocation2 + $0x588] sm:$0xff] 0.0
      %197 = vst [vmem:[#allocation2 + $0x590] sm:$0xff] 0.0
      %198 = vst [vmem:[#allocation2 + $0x598] sm:$0xff] 0.0
      %199 = vst [vmem:[#allocation2 + $0x5a0] sm:$0xff] 0.0
      %200 = vst [vmem:[#allocation2 + $0x5a8] sm:$0xff] 0.0
      %201 = vst [vmem:[#allocation2 + $0x5b0] sm:$0xff] 0.0
      %202 = vst [vmem:[#allocation2 + $0x5b8] sm:$0xff] 0.0
      %203 = vst [vmem:[#allocation2 + $0x5c0] sm:$0xff] 0.0
      %204 = vst [vmem:[#allocation2 + $0x5c8] sm:$0xff] 0.0
      %205 = vst [vmem:[#allocation2 + $0x5d0] sm:$0xff] 0.0
      %206 = vst [vmem:[#allocation2 + $0x5d8] sm:$0xff] 0.0
      %207 = vst [vmem:[#allocation2 + $0x5e0] sm:$0xff] 0.0
      %208 = vst [vmem:[#allocation2 + $0x5e8] sm:$0xff] 0.0
      %209 = vst [vmem:[#allocation2 + $0x5f0] sm:$0xff] 0.0
      %210 = vst [vmem:[#allocation2 + $0x5f8] sm:$0xff] 0.0
      %211 = vst [vmem:[#allocation2 + $0x600] sm:$0xff] 0.0
      %212 = vst [vmem:[#allocation2 + $0x608] sm:$0xff] 0.0
      %213 = vst [vmem:[#allocation2 + $0x610] sm:$0xff] 0.0
      %214 = vst [vmem:[#allocation2 + $0x618] sm:$0xff] 0.0
      %215 = vst [vmem:[#allocation2 + $0x620] sm:$0xff] 0.0
      %216 = vst [vmem:[#allocation2 + $0x628] sm:$0xff] 0.0
      %217 = vst [vmem:[#allocation2 + $0x630] sm:$0xff] 0.0
      %218 = vst [vmem:[#allocation2 + $0x638] sm:$0xff] 0.0
      %219 = vst [vmem:[#allocation2 + $0x640] sm:$0xff] 0.0
      %220 = vst [vmem:[#allocation2 + $0x648] sm:$0xff] 0.0
      %221 = vst [vmem:[#allocation2 + $0x650] sm:$0xff] 0.0
      %222 = vst [vmem:[#allocation2 + $0x658] sm:$0xff] 0.0
      %223 = vst [vmem:[#allocation2 + $0x660] sm:$0xff] 0.0
      %224 = vst [vmem:[#allocation2 + $0x668] sm:$0xff] 0.0
      %225 = vst [vmem:[#allocation2 + $0x670] sm:$0xff] 0.0
      %226 = vst [vmem:[#allocation2 + $0x678] sm:$0xff] 0.0
      %227 = vst [vmem:[#allocation2 + $0x680] sm:$0xff] 0.0
      %228 = vst [vmem:[#allocation2 + $0x688] sm:$0xff] 0.0
      %229 = vst [vmem:[#allocation2 + $0x690] sm:$0xff] 0.0
      %230 = vst [vmem:[#allocation2 + $0x698] sm:$0xff] 0.0
      %231 = vst [vmem:[#allocation2 + $0x6a0] sm:$0xff] 0.0
      %232 = vst [vmem:[#allocation2 + $0x6a8] sm:$0xff] 0.0
      %233 = vst [vmem:[#allocation2 + $0x6b0] sm:$0xff] 0.0
      %234 = vst [vmem:[#allocation2 + $0x6b8] sm:$0xff] 0.0
      %235 = vst [vmem:[#allocation2 + $0x6c0] sm:$0xff] 0.0
      %236 = vst [vmem:[#allocation2 + $0x6c8] sm:$0xff] 0.0
      %237 = vst [vmem:[#allocation2 + $0x6d0] sm:$0xff] 0.0
      %238 = vst [vmem:[#allocation2 + $0x6d8] sm:$0xff] 0.0
      %239 = vst [vmem:[#allocation2 + $0x6e0] sm:$0xff] 0.0
      %240 = vst [vmem:[#allocation2 + $0x6e8] sm:$0xff] 0.0
      %241 = vst [vmem:[#allocation2 + $0x6f0] sm:$0xff] 0.0
      %242 = vst [vmem:[#allocation2 + $0x6f8] sm:$0xff] 0.0
      %243 = vst [vmem:[#allocation2 + $0x700] sm:$0xff] 0.0
      %244 = vst [vmem:[#allocation2 + $0x708] sm:$0xff] 0.0
      %245 = vst [vmem:[#allocation2 + $0x710] sm:$0xff] 0.0
      %246 = vst [vmem:[#allocation2 + $0x718] sm:$0xff] 0.0
      %247 = vst [vmem:[#allocation2 + $0x720] sm:$0xff] 0.0
      %248 = vst [vmem:[#allocation2 + $0x728] sm:$0xff] 0.0
      %249 = vst [vmem:[#allocation2 + $0x730] sm:$0xff] 0.0
      %250 = vst [vmem:[#allocation2 + $0x738] sm:$0xff] 0.0
      %251 = vst [vmem:[#allocation2 + $0x740] sm:$0xff] 0.0
      %252 = vst [vmem:[#allocation2 + $0x748] sm:$0xff] 0.0
      %253 = vst [vmem:[#allocation2 + $0x750] sm:$0xff] 0.0
      %254 = vst [vmem:[#allocation2 + $0x758] sm:$0xff] 0.0
      %255 = vst [vmem:[#allocation2 + $0x760] sm:$0xff] 0.0
      %256 = vst [vmem:[#allocation2 + $0x768] sm:$0xff] 0.0
      %257 = vst [vmem:[#allocation2 + $0x770] sm:$0xff] 0.0
      %258 = vst [vmem:[#allocation2 + $0x778] sm:$0xff] 0.0
      %259 = vst [vmem:[#allocation2 + $0x780] sm:$0xff] 0.0
      %260 = vst [vmem:[#allocation2 + $0x788] sm:$0xff] 0.0
      %261 = vst [vmem:[#allocation2 + $0x790] sm:$0xff] 0.0
      %262 = vst [vmem:[#allocation2 + $0x798] sm:$0xff] 0.0
      %263 = vst [vmem:[#allocation2 + $0x7a0] sm:$0xff] 0.0
      %264 = vst [vmem:[#allocation2 + $0x7a8] sm:$0xff] 0.0
      %265 = vst [vmem:[#allocation2 + $0x7b0] sm:$0xff] 0.0
      %266 = vst [vmem:[#allocation2 + $0x7b8] sm:$0xff] 0.0
      %267 = vst [vmem:[#allocation2 + $0x7c0] sm:$0xff] 0.0
      %268 = vst [vmem:[#allocation2 + $0x7c8] sm:$0xff] 0.0
      %269 = vst [vmem:[#allocation2 + $0x7d0] sm:$0xff] 0.0
      %270 = vst [vmem:[#allocation2 + $0x7d8] sm:$0xff] 0.0
      %271 = vst [vmem:[#allocation2 + $0x7e0] sm:$0xff] 0.0
      %272 = vst [vmem:[#allocation2 + $0x7e8] sm:$0xff] 0.0
      %273 = vst [vmem:[#allocation2 + $0x7f0] sm:$0xff] 0.0
      %274 = vst [vmem:[#allocation2 + $0x7f8] sm:$0xff] 0.0
    $region17: #{tpu_custom_call.1} parent=1 // pred_fallthru
      _
    %v275 = vld [vmem:[%s1] sm:$0xff]
    %v276 = vld [vmem:[%s1 + $0x8] sm:$0xff]
    %v277 = vld [vmem:[%s1 + $0x10] sm:$0xff]
    %v278 = vld [vmem:[%s1 + $0x18] sm:$0xff]
    %v279 = vld [vmem:[%s1 + $0x20] sm:$0xff]
    %v280 = vld [vmem:[%s1 + $0x28] sm:$0xff]
    %v281 = vld [vmem:[%s1 + $0x30] sm:$0xff]
    %v282 = vld [vmem:[%s1 + $0x38] sm:$0xff]
    %v283 = vld [vmem:[#allocation2] sm:$0xff]
    %v284 = vld [vmem:[#allocation2 + $0x8] sm:$0xff]
    %v285 = vld [vmem:[#allocation2 + $0x10] sm:$0xff]
    %v286 = vld [vmem:[#allocation2 + $0x18] sm:$0xff]
    %v287 = vld [vmem:[#allocation2 + $0x20] sm:$0xff]
    %v288 = vld [vmem:[#allocation2 + $0x28] sm:$0xff]
    %v289 = vld [vmem:[#allocation2 + $0x30] sm:$0xff]
    %v290 = vld [vmem:[#allocation2 + $0x38] sm:$0xff]
    %v291 = vld [vmem:[#allocation2 + $0x40] sm:$0xff]
    %v292 = vld [vmem:[#allocation2 + $0x48] sm:$0xff]
    %v293 = vld [vmem:[#allocation2 + $0x50] sm:$0xff]
    %v294 = vld [vmem:[#allocation2 + $0x58] sm:$0xff]
    %v295 = vld [vmem:[#allocation2 + $0x60] sm:$0xff]
    %v296 = vld [vmem:[#allocation2 + $0x68] sm:$0xff]
    %v297 = vld [vmem:[#allocation2 + $0x70] sm:$0xff]
    %v298 = vld [vmem:[#allocation2 + $0x78] sm:$0xff]
    %v299 = vld [vmem:[#allocation2 + $0x80] sm:$0xff]
    %v300 = vld [vmem:[#allocation2 + $0x88] sm:$0xff]
    %v301 = vld [vmem:[#allocation2 + $0x90] sm:$0xff]
    %v302 = vld [vmem:[#allocation2 + $0x98] sm:$0xff]
    %v303 = vld [vmem:[#allocation2 + $0xa0] sm:$0xff]
    %v304 = vld [vmem:[#allocation2 + $0xa8] sm:$0xff]
    %v305 = vld [vmem:[#allocation2 + $0xb0] sm:$0xff]
    %v306 = vld [vmem:[#allocation2 + $0xb8] sm:$0xff]
    %v307 = vld [vmem:[#allocation2 + $0xc0] sm:$0xff]
    %v308 = vld [vmem:[#allocation2 + $0xc8] sm:$0xff]
    %v309 = vld [vmem:[#allocation2 + $0xd0] sm:$0xff]
    %v310 = vld [vmem:[#allocation2 + $0xd8] sm:$0xff]
    %v311 = vld [vmem:[#allocation2 + $0xe0] sm:$0xff]
    %v312 = vld [vmem:[#allocation2 + $0xe8] sm:$0xff]
    %v313 = vld [vmem:[#allocation2 + $0xf0] sm:$0xff]
    %v314 = vld [vmem:[#allocation2 + $0xf8] sm:$0xff]
    %v315 = vld [vmem:[#allocation2 + $0x100] sm:$0xff]
    %v316 = vld [vmem:[#allocation2 + $0x108] sm:$0xff]
    %v317 = vld [vmem:[#allocation2 + $0x110] sm:$0xff]
    %v318 = vld [vmem:[#allocation2 + $0x118] sm:$0xff]
    %v319 = vld [vmem:[#allocation2 + $0x120] sm:$0xff]
    %v320 = vld [vmem:[#allocation2 + $0x128] sm:$0xff]
    %v321 = vld [vmem:[#allocation2 + $0x130] sm:$0xff]
    %v322 = vld [vmem:[#allocation2 + $0x138] sm:$0xff]
    %v323 = vld [vmem:[#allocation2 + $0x140] sm:$0xff]
    %v324 = vld [vmem:[#allocation2 + $0x148] sm:$0xff]
    %v325 = vld [vmem:[#allocation2 + $0x150] sm:$0xff]
    %v326 = vld [vmem:[#allocation2 + $0x158] sm:$0xff]
    %v327 = vld [vmem:[#allocation2 + $0x160] sm:$0xff]
    %v328 = vld [vmem:[#allocation2 + $0x168] sm:$0xff]
    %v329 = vld [vmem:[#allocation2 + $0x170] sm:$0xff]
    %v330 = vld [vmem:[#allocation2 + $0x178] sm:$0xff]
    %v331 = vld [vmem:[#allocation2 + $0x180] sm:$0xff]
    %v332 = vld [vmem:[#allocation2 + $0x188] sm:$0xff]
    %v333 = vld [vmem:[#allocation2 + $0x190] sm:$0xff]
    %v334 = vld [vmem:[#allocation2 + $0x198] sm:$0xff]
    %v335 = vld [vmem:[#allocation2 + $0x1a0] sm:$0xff]
    %v336 = vld [vmem:[#allocation2 + $0x1a8] sm:$0xff]
    %v337 = vld [vmem:[#allocation2 + $0x1b0] sm:$0xff]
    %v338 = vld [vmem:[#allocation2 + $0x1b8] sm:$0xff]
    %v339 = vld [vmem:[#allocation2 + $0x1c0] sm:$0xff]
    %v340 = vld [vmem:[#allocation2 + $0x1c8] sm:$0xff]
    %v341 = vld [vmem:[#allocation2 + $0x1d0] sm:$0xff]
    %v342 = vld [vmem:[#allocation2 + $0x1d8] sm:$0xff]
    %v343 = vld [vmem:[#allocation2 + $0x1e0] sm:$0xff]
    %v344 = vld [vmem:[#allocation2 + $0x1e8] sm:$0xff]
    %v345 = vld [vmem:[#allocation2 + $0x1f0] sm:$0xff]
    %v346 = vld [vmem:[#allocation2 + $0x1f8] sm:$0xff]
    %v347 = vld [vmem:[#allocation2 + $0x200] sm:$0xff]
    %v348 = vld [vmem:[#allocation2 + $0x208] sm:$0xff]
    %v349 = vld [vmem:[#allocation2 + $0x210] sm:$0xff]
    %v350 = vld [vmem:[#allocation2 + $0x218] sm:$0xff]
    %v351 = vld [vmem:[#allocation2 + $0x220] sm:$0xff]
    %v352 = vld [vmem:[#allocation2 + $0x228] sm:$0xff]
    %v353 = vld [vmem:[#allocation2 + $0x230] sm:$0xff]
    %v354 = vld [vmem:[#allocation2 + $0x238] sm:$0xff]
    %v355 = vld [vmem:[#allocation2 + $0x240] sm:$0xff]
    %v356 = vld [vmem:[#allocation2 + $0x248] sm:$0xff]
    %v357 = vld [vmem:[#allocation2 + $0x250] sm:$0xff]
    %v358 = vld [vmem:[#allocation2 + $0x258] sm:$0xff]
    %v359 = vld [vmem:[#allocation2 + $0x260] sm:$0xff]
    %v360 = vld [vmem:[#allocation2 + $0x268] sm:$0xff]
    %v361 = vld [vmem:[#allocation2 + $0x270] sm:$0xff]
    %v362 = vld [vmem:[#allocation2 + $0x278] sm:$0xff]
    %v363 = vld [vmem:[#allocation2 + $0x280] sm:$0xff]
    %v364 = vld [vmem:[#allocation2 + $0x288] sm:$0xff]
    %v365 = vld [vmem:[#allocation2 + $0x290] sm:$0xff]
    %v366 = vld [vmem:[#allocation2 + $0x298] sm:$0xff]
    %v367 = vld [vmem:[#allocation2 + $0x2a0] sm:$0xff]
    %v368 = vld [vmem:[#allocation2 + $0x2a8] sm:$0xff]
    %v369 = vld [vmem:[#allocation2 + $0x2b0] sm:$0xff]
    %v370 = vld [vmem:[#allocation2 + $0x2b8] sm:$0xff]
    %v371 = vld [vmem:[#allocation2 + $0x2c0] sm:$0xff]
    %v372 = vld [vmem:[#allocation2 + $0x2c8] sm:$0xff]
    %v373 = vld [vmem:[#allocation2 + $0x2d0] sm:$0xff]
    %v374 = vld [vmem:[#allocation2 + $0x2d8] sm:$0xff]
    %v375 = vld [vmem:[#allocation2 + $0x2e0] sm:$0xff]
    %v376 = vld [vmem:[#allocation2 + $0x2e8] sm:$0xff]
    %v377 = vld [vmem:[#allocation2 + $0x2f0] sm:$0xff]
    %v378 = vld [vmem:[#allocation2 + $0x2f8] sm:$0xff]
    %v379 = vld [vmem:[#allocation2 + $0x300] sm:$0xff]
    %v380 = vld [vmem:[#allocation2 + $0x308] sm:$0xff]
    %v381 = vld [vmem:[#allocation2 + $0x310] sm:$0xff]
    %v382 = vld [vmem:[#allocation2 + $0x318] sm:$0xff]
    %v383 = vld [vmem:[#allocation2 + $0x320] sm:$0xff]
    %v384 = vld [vmem:[#allocation2 + $0x328] sm:$0xff]
    %v385 = vld [vmem:[#allocation2 + $0x330] sm:$0xff]
    %v386 = vld [vmem:[#allocation2 + $0x338] sm:$0xff]
    %v387 = vld [vmem:[#allocation2 + $0x340] sm:$0xff]
    %v388 = vld [vmem:[#allocation2 + $0x348] sm:$0xff]
    %v389 = vld [vmem:[#allocation2 + $0x350] sm:$0xff]
    %v390 = vld [vmem:[#allocation2 + $0x358] sm:$0xff]
    %v391 = vld [vmem:[#allocation2 + $0x360] sm:$0xff]
    %v392 = vld [vmem:[#allocation2 + $0x368] sm:$0xff]
    %v393 = vld [vmem:[#allocation2 + $0x370] sm:$0xff]
    %v394 = vld [vmem:[#allocation2 + $0x378] sm:$0xff]
    %v395 = vld [vmem:[#allocation2 + $0x380] sm:$0xff]
    %v396 = vld [vmem:[#allocation2 + $0x388] sm:$0xff]
    %v397 = vld [vmem:[#allocation2 + $0x390] sm:$0xff]
    %v398 = vld [vmem:[#allocation2 + $0x398] sm:$0xff]
    %v399 = vld [vmem:[#allocation2 + $0x3a0] sm:$0xff]
    %v400 = vld [vmem:[#allocation2 + $0x3a8] sm:$0xff]
    %v401 = vld [vmem:[#allocation2 + $0x3b0] sm:$0xff]
    %v402 = vld [vmem:[#allocation2 + $0x3b8] sm:$0xff]
    %v403 = vld [vmem:[#allocation2 + $0x3c0] sm:$0xff]
    %v404 = vld [vmem:[#allocation2 + $0x3c8] sm:$0xff]
    %v405 = vld [vmem:[#allocation2 + $0x3d0] sm:$0xff]
    %v406 = vld [vmem:[#allocation2 + $0x3d8] sm:$0xff]
    %v407 = vld [vmem:[#allocation2 + $0x3e0] sm:$0xff]
    %v408 = vld [vmem:[#allocation2 + $0x3e8] sm:$0xff]
    %v409 = vld [vmem:[#allocation2 + $0x3f0] sm:$0xff]
    %v410 = vld [vmem:[#allocation2 + $0x3f8] sm:$0xff]
    %v411 = vld [vmem:[#allocation2 + $0x400] sm:$0xff]
    %v412 = vld [vmem:[#allocation2 + $0x408] sm:$0xff]
    %v413 = vld [vmem:[#allocation2 + $0x410] sm:$0xff]
    %v414 = vld [vmem:[#allocation2 + $0x418] sm:$0xff]
    %v415 = vld [vmem:[#allocation2 + $0x420] sm:$0xff]
    %v416 = vld [vmem:[#allocation2 + $0x428] sm:$0xff]
    %v417 = vld [vmem:[#allocation2 + $0x430] sm:$0xff]
    %v418 = vld [vmem:[#allocation2 + $0x438] sm:$0xff]
    %v419 = vld [vmem:[#allocation2 + $0x440] sm:$0xff]
    %v420 = vld [vmem:[#allocation2 + $0x448] sm:$0xff]
    %v421 = vld [vmem:[#allocation2 + $0x450] sm:$0xff]
    %v422 = vld [vmem:[#allocation2 + $0x458] sm:$0xff]
    %v423 = vld [vmem:[#allocation2 + $0x460] sm:$0xff]
    %v424 = vld [vmem:[#allocation2 + $0x468] sm:$0xff]
    %v425 = vld [vmem:[#allocation2 + $0x470] sm:$0xff]
    %v426 = vld [vmem:[#allocation2 + $0x478] sm:$0xff]
    %v427 = vld [vmem:[#allocation2 + $0x480] sm:$0xff]
    %v428 = vld [vmem:[#allocation2 + $0x488] sm:$0xff]
    %v429 = vld [vmem:[#allocation2 + $0x490] sm:$0xff]
    %v430 = vld [vmem:[#allocation2 + $0x498] sm:$0xff]
    %v431 = vld [vmem:[#allocation2 + $0x4a0] sm:$0xff]
    %v432 = vld [vmem:[#allocation2 + $0x4a8] sm:$0xff]
    %v433 = vld [vmem:[#allocation2 + $0x4b0] sm:$0xff]
    %v434 = vld [vmem:[#allocation2 + $0x4b8] sm:$0xff]
    %v435 = vld [vmem:[#allocation2 + $0x4c0] sm:$0xff]
    %v436 = vld [vmem:[#allocation2 + $0x4c8] sm:$0xff]
    %v437 = vld [vmem:[#allocation2 + $0x4d0] sm:$0xff]
    %v438 = vld [vmem:[#allocation2 + $0x4d8] sm:$0xff]
    %v439 = vld [vmem:[#allocation2 + $0x4e0] sm:$0xff]
    %v440 = vld [vmem:[#allocation2 + $0x4e8] sm:$0xff]
    %v441 = vld [vmem:[#allocation2 + $0x4f0] sm:$0xff]
    %v442 = vld [vmem:[#allocation2 + $0x4f8] sm:$0xff]
    %v443 = vld [vmem:[#allocation2 + $0x500] sm:$0xff]
    %v444 = vld [vmem:[#allocation2 + $0x508] sm:$0xff]
    %v445 = vld [vmem:[#allocation2 + $0x510] sm:$0xff]
    %v446 = vld [vmem:[#allocation2 + $0x518] sm:$0xff]
    %v447 = vld [vmem:[#allocation2 + $0x520] sm:$0xff]
    %v448 = vld [vmem:[#allocation2 + $0x528] sm:$0xff]
    %v449 = vld [vmem:[#allocation2 + $0x530] sm:$0xff]
    %v450 = vld [vmem:[#allocation2 + $0x538] sm:$0xff]
    %v451 = vld [vmem:[#allocation2 + $0x540] sm:$0xff]
    %v452 = vld [vmem:[#allocation2 + $0x548] sm:$0xff]
    %v453 = vld [vmem:[#allocation2 + $0x550] sm:$0xff]
    %v454 = vld [vmem:[#allocation2 + $0x558] sm:$0xff]
    %v455 = vld [vmem:[#allocation2 + $0x560] sm:$0xff]
    %v456 = vld [vmem:[#allocation2 + $0x568] sm:$0xff]
    %v457 = vld [vmem:[#allocation2 + $0x570] sm:$0xff]
    %v458 = vld [vmem:[#allocation2 + $0x578] sm:$0xff]
    %v459 = vld [vmem:[#allocation2 + $0x580] sm:$0xff]
    %v460 = vld [vmem:[#allocation2 + $0x588] sm:$0xff]
    %v461 = vld [vmem:[#allocation2 + $0x590] sm:$0xff]
    %v462 = vld [vmem:[#allocation2 + $0x598] sm:$0xff]
    %v463 = vld [vmem:[#allocation2 + $0x5a0] sm:$0xff]
    %v464 = vld [vmem:[#allocation2 + $0x5a8] sm:$0xff]
    %v465 = vld [vmem:[#allocation2 + $0x5b0] sm:$0xff]
    %v466 = vld [vmem:[#allocation2 + $0x5b8] sm:$0xff]
    %v467 = vld [vmem:[#allocation2 + $0x5c0] sm:$0xff]
    %v468 = vld [vmem:[#allocation2 + $0x5c8] sm:$0xff]
    %v469 = vld [vmem:[#allocation2 + $0x5d0] sm:$0xff]
    %v470 = vld [vmem:[#allocation2 + $0x5d8] sm:$0xff]
    %v471 = vld [vmem:[#allocation2 + $0x5e0] sm:$0xff]
    %v472 = vld [vmem:[#allocation2 + $0x5e8] sm:$0xff]
    %v473 = vld [vmem:[#allocation2 + $0x5f0] sm:$0xff]
    %v474 = vld [vmem:[#allocation2 + $0x5f8] sm:$0xff]
    %v475 = vld [vmem:[#allocation2 + $0x600] sm:$0xff]
    %v476 = vld [vmem:[#allocation2 + $0x608] sm:$0xff]
    %v477 = vld [vmem:[#allocation2 + $0x610] sm:$0xff]
    %v478 = vld [vmem:[#allocation2 + $0x618] sm:$0xff]
    %v479 = vld [vmem:[#allocation2 + $0x620] sm:$0xff]
    %v480 = vld [vmem:[#allocation2 + $0x628] sm:$0xff]
    %v481 = vld [vmem:[#allocation2 + $0x630] sm:$0xff]
    %v482 = vld [vmem:[#allocation2 + $0x638] sm:$0xff]
    %v483 = vld [vmem:[#allocation2 + $0x640] sm:$0xff]
    %v484 = vld [vmem:[#allocation2 + $0x648] sm:$0xff]
    %v485 = vld [vmem:[#allocation2 + $0x650] sm:$0xff]
    %v486 = vld [vmem:[#allocation2 + $0x658] sm:$0xff]
    %v487 = vld [vmem:[#allocation2 + $0x660] sm:$0xff]
    %v488 = vld [vmem:[#allocation2 + $0x668] sm:$0xff]
    %v489 = vld [vmem:[#allocation2 + $0x670] sm:$0xff]
    %v490 = vld [vmem:[#allocation2 + $0x678] sm:$0xff]
    %v491 = vld [vmem:[#allocation2 + $0x680] sm:$0xff]
    %v492 = vld [vmem:[#allocation2 + $0x688] sm:$0xff]
    %v493 = vld [vmem:[#allocation2 + $0x690] sm:$0xff]
    %v494 = vld [vmem:[#allocation2 + $0x698] sm:$0xff]
    %v495 = vld [vmem:[#allocation2 + $0x6a0] sm:$0xff]
    %v496 = vld [vmem:[#allocation2 + $0x6a8] sm:$0xff]
    %v497 = vld [vmem:[#allocation2 + $0x6b0] sm:$0xff]
    %v498 = vld [vmem:[#allocation2 + $0x6b8] sm:$0xff]
    %v499 = vld [vmem:[#allocation2 + $0x6c0] sm:$0xff]
    %v500 = vld [vmem:[#allocation2 + $0x6c8] sm:$0xff]
    %v501 = vld [vmem:[#allocation2 + $0x6d0] sm:$0xff]
    %v502 = vld [vmem:[#allocation2 + $0x6d8] sm:$0xff]
    %v503 = vld [vmem:[#allocation2 + $0x6e0] sm:$0xff]
    %v504 = vld [vmem:[#allocation2 + $0x6e8] sm:$0xff]
    %v505 = vld [vmem:[#allocation2 + $0x6f0] sm:$0xff]
    %v506 = vld [vmem:[#allocation2 + $0x6f8] sm:$0xff]
    %v507 = vld [vmem:[#allocation2 + $0x700] sm:$0xff]
    %v508 = vld [vmem:[#allocation2 + $0x708] sm:$0xff]
    %v509 = vld [vmem:[#allocation2 + $0x710] sm:$0xff]
    %v510 = vld [vmem:[#allocation2 + $0x718] sm:$0xff]
    %v511 = vld [vmem:[#allocation2 + $0x720] sm:$0xff]
    %v512 = vld [vmem:[#allocation2 + $0x728] sm:$0xff]
    %v513 = vld [vmem:[#allocation2 + $0x730] sm:$0xff]
    %v514 = vld [vmem:[#allocation2 + $0x738] sm:$0xff]
    %v515 = vld [vmem:[#allocation2 + $0x740] sm:$0xff]
    %v516 = vld [vmem:[#allocation2 + $0x748] sm:$0xff]
    %v517 = vld [vmem:[#allocation2 + $0x750] sm:$0xff]
    %v518 = vld [vmem:[#allocation2 + $0x758] sm:$0xff]
    %v519 = vld [vmem:[#allocation2 + $0x760] sm:$0xff]
    %v520 = vld [vmem:[#allocation2 + $0x768] sm:$0xff]
    %v521 = vld [vmem:[#allocation2 + $0x770] sm:$0xff]
    %v522 = vld [vmem:[#allocation2 + $0x778] sm:$0xff]
    %v523 = vld [vmem:[#allocation2 + $0x780] sm:$0xff]
    %v524 = vld [vmem:[#allocation2 + $0x788] sm:$0xff]
    %v525 = vld [vmem:[#allocation2 + $0x790] sm:$0xff]
    %v526 = vld [vmem:[#allocation2 + $0x798] sm:$0xff]
    %v527 = vld [vmem:[#allocation2 + $0x7a0] sm:$0xff]
    %v528 = vld [vmem:[#allocation2 + $0x7a8] sm:$0xff]
    %v529 = vld [vmem:[#allocation2 + $0x7b0] sm:$0xff]
    %v530 = vld [vmem:[#allocation2 + $0x7b8] sm:$0xff]
    %v531 = vld [vmem:[#allocation2 + $0x7c0] sm:$0xff]
    %v532 = vld [vmem:[#allocation2 + $0x7c8] sm:$0xff]
    %v533 = vld [vmem:[#allocation2 + $0x7d0] sm:$0xff]
    %v534 = vld [vmem:[#allocation2 + $0x7d8] sm:$0xff]
    %v535 = vld [vmem:[#allocation2 + $0x7e0] sm:$0xff]
    %v536 = vld [vmem:[#allocation2 + $0x7e8] sm:$0xff]
    %v537 = vld [vmem:[#allocation2 + $0x7f0] sm:$0xff]
    %v538 = vld [vmem:[#allocation2 + $0x7f8] sm:$0xff]
    %v539 = vld [vmem:[%s0] sm:$0xff]
    %v540 = vld [vmem:[%s0 + $0x8] sm:$0xff]
    %v541 = vld [vmem:[%s0 + $0x10] sm:$0xff]
    %v542 = vld [vmem:[%s0 + $0x18] sm:$0xff]
    %v543 = vld [vmem:[%s0 + $0x20] sm:$0xff]
    %v544 = vld [vmem:[%s0 + $0x28] sm:$0xff]
    %v545 = vld [vmem:[%s0 + $0x30] sm:$0xff]
    %v546 = vld [vmem:[%s0 + $0x38] sm:$0xff]
    %v547 = vld [vmem:[%s0 + $0x40] sm:$0xff]
    %v548 = vld [vmem:[%s0 + $0x48] sm:$0xff]
    %v549 = vld [vmem:[%s0 + $0x50] sm:$0xff]
    %v550 = vld [vmem:[%s0 + $0x58] sm:$0xff]
    %v551 = vld [vmem:[%s0 + $0x60] sm:$0xff]
    %v552 = vld [vmem:[%s0 + $0x68] sm:$0xff]
    %v553 = vld [vmem:[%s0 + $0x70] sm:$0xff]
    %v554 = vld [vmem:[%s0 + $0x78] sm:$0xff]
    %v555 = vld [vmem:[%s0 + $0x80] sm:$0xff]
    %v556 = vld [vmem:[%s0 + $0x88] sm:$0xff]
    %v557 = vld [vmem:[%s0 + $0x90] sm:$0xff]
    %v558 = vld [vmem:[%s0 + $0x98] sm:$0xff]
    %v559 = vld [vmem:[%s0 + $0xa0] sm:$0xff]
    %v560 = vld [vmem:[%s0 + $0xa8] sm:$0xff]
    %v561 = vld [vmem:[%s0 + $0xb0] sm:$0xff]
    %v562 = vld [vmem:[%s0 + $0xb8] sm:$0xff]
    %v563 = vld [vmem:[%s0 + $0xc0] sm:$0xff]
    %v564 = vld [vmem:[%s0 + $0xc8] sm:$0xff]
    %v565 = vld [vmem:[%s0 + $0xd0] sm:$0xff]
    %v566 = vld [vmem:[%s0 + $0xd8] sm:$0xff]
    %v567 = vld [vmem:[%s0 + $0xe0] sm:$0xff]
    %v568 = vld [vmem:[%s0 + $0xe8] sm:$0xff]
    %v569 = vld [vmem:[%s0 + $0xf0] sm:$0xff]
    %v570 = vld [vmem:[%s0 + $0xf8] sm:$0xff]
    %v571 = vld [vmem:[%s0 + $0x100] sm:$0xff]
    %v572 = vld [vmem:[%s0 + $0x108] sm:$0xff]
    %v573 = vld [vmem:[%s0 + $0x110] sm:$0xff]
    %v574 = vld [vmem:[%s0 + $0x118] sm:$0xff]
    %v575 = vld [vmem:[%s0 + $0x120] sm:$0xff]
    %v576 = vld [vmem:[%s0 + $0x128] sm:$0xff]
    %v577 = vld [vmem:[%s0 + $0x130] sm:$0xff]
    %v578 = vld [vmem:[%s0 + $0x138] sm:$0xff]
    %v579 = vld [vmem:[%s0 + $0x140] sm:$0xff]
    %v580 = vld [vmem:[%s0 + $0x148] sm:$0xff]
    %v581 = vld [vmem:[%s0 + $0x150] sm:$0xff]
    %v582 = vld [vmem:[%s0 + $0x158] sm:$0xff]
    %v583 = vld [vmem:[%s0 + $0x160] sm:$0xff]
    %v584 = vld [vmem:[%s0 + $0x168] sm:$0xff]
    %v585 = vld [vmem:[%s0 + $0x170] sm:$0xff]
    %v586 = vld [vmem:[%s0 + $0x178] sm:$0xff]
    %v587 = vld [vmem:[%s0 + $0x180] sm:$0xff]
    %v588 = vld [vmem:[%s0 + $0x188] sm:$0xff]
    %v589 = vld [vmem:[%s0 + $0x190] sm:$0xff]
    %v590 = vld [vmem:[%s0 + $0x198] sm:$0xff]
    %v591 = vld [vmem:[%s0 + $0x1a0] sm:$0xff]
    %v592 = vld [vmem:[%s0 + $0x1a8] sm:$0xff]
    %v593 = vld [vmem:[%s0 + $0x1b0] sm:$0xff]
    %v594 = vld [vmem:[%s0 + $0x1b8] sm:$0xff]
    %v595 = vld [vmem:[%s0 + $0x1c0] sm:$0xff]
    %v596 = vld [vmem:[%s0 + $0x1c8] sm:$0xff]
    %v597 = vld [vmem:[%s0 + $0x1d0] sm:$0xff]
    %v598 = vld [vmem:[%s0 + $0x1d8] sm:$0xff]
    %v599 = vld [vmem:[%s0 + $0x1e0] sm:$0xff]
    %v600 = vld [vmem:[%s0 + $0x1e8] sm:$0xff]
    %v601 = vld [vmem:[%s0 + $0x1f0] sm:$0xff]
    %v602 = vld [vmem:[%s0 + $0x1f8] sm:$0xff]
    %vm603 = vcmask 130048
    %v605 = vsel %vm603, %v539, 0
    %v608 = vsel %vm603, %v540, 0
    %v611 = vsel %vm603, %v541, 0
    %v614 = vsel %vm603, %v542, 0
    %v617 = vsel %vm603, %v543, 0
    %v620 = vsel %vm603, %v544, 0
    %v623 = vsel %vm603, %v545, 0
    %v626 = vsel %vm603, %v546, 0
    %v629 = vsel %vm603, %v547, 0
    %v632 = vsel %vm603, %v548, 0
    %v635 = vsel %vm603, %v549, 0
    %v638 = vsel %vm603, %v550, 0
    %v641 = vsel %vm603, %v551, 0
    %v644 = vsel %vm603, %v552, 0
    %v647 = vsel %vm603, %v553, 0
    %v650 = vsel %vm603, %v554, 0
    %v653 = vsel %vm603, %v555, 0
    %v656 = vsel %vm603, %v556, 0
    %v659 = vsel %vm603, %v557, 0
    %v662 = vsel %vm603, %v558, 0
    %v665 = vsel %vm603, %v559, 0
    %v668 = vsel %vm603, %v560, 0
    %v671 = vsel %vm603, %v561, 0
    %v674 = vsel %vm603, %v562, 0
    %v677 = vsel %vm603, %v563, 0
    %v680 = vsel %vm603, %v564, 0
    %v683 = vsel %vm603, %v565, 0
    %v686 = vsel %vm603, %v566, 0
    %v689 = vsel %vm603, %v567, 0
    %v692 = vsel %vm603, %v568, 0
    %v695 = vsel %vm603, %v569, 0
    %v698 = vsel %vm603, %v570, 0
    %v701 = vsel %vm603, %v571, 0
    %v704 = vsel %vm603, %v572, 0
    %v707 = vsel %vm603, %v573, 0
    %v710 = vsel %vm603, %v574, 0
    %v713 = vsel %vm603, %v575, 0
    %v716 = vsel %vm603, %v576, 0
    %v719 = vsel %vm603, %v577, 0
    %v722 = vsel %vm603, %v578, 0
    %v725 = vsel %vm603, %v579, 0
    %v728 = vsel %vm603, %v580, 0
    %v731 = vsel %vm603, %v581, 0
    %v734 = vsel %vm603, %v582, 0
    %v737 = vsel %vm603, %v583, 0
    %v740 = vsel %vm603, %v584, 0
    %v743 = vsel %vm603, %v585, 0
    %v746 = vsel %vm603, %v586, 0
    %v749 = vsel %vm603, %v587, 0
    %v752 = vsel %vm603, %v588, 0
    %v755 = vsel %vm603, %v589, 0
    %v758 = vsel %vm603, %v590, 0
    %v761 = vsel %vm603, %v591, 0
    %v764 = vsel %vm603, %v592, 0
    %v767 = vsel %vm603, %v593, 0
    %v770 = vsel %vm603, %v594, 0
    %v773 = vsel %vm603, %v595, 0
    %v776 = vsel %vm603, %v596, 0
    %v779 = vsel %vm603, %v597, 0
    %v782 = vsel %vm603, %v598, 0
    %v785 = vsel %vm603, %v599, 0
    %v788 = vsel %vm603, %v600, 0
    %v791 = vsel %vm603, %v601, 0
    %v794 = vsel %vm603, %v602, 0
    %796 = vmatprep.subr.mxu0 %v276
    %797 = vmatpush1.msra.mxu0 %v275
    %798 = vmatprep.subr.mxu0 %v280
    %799 = vmatpush1.msra.mxu0 %v279
    %800 = vmatprep.subr.mxu0 0.0
    %801 = vmatpush1.msra.mxu0 0.0
    %802 = vmatprep.subr.mxu0 0.0
    %803 = vmatpush1.msra.mxu0 0.0
    %804 = vmatprep.subr.mxu0 0.0
    %805 = vmatpush1.msra.mxu0 0.0
    %806 = vmatprep.subr.mxu0 0.0
    %807 = vmatpush1.msra.mxu0 0.0
    %808 = vmatprep.subr.mxu0 0.0
    %809 = vmatpush1.msra.mxu0 0.0
    %810 = vmatprep.subr.mxu0 0.0
    %811 = vmatpush1.msra.mxu0 0.0
    %812 = vmatprep.subr.mxu0 0.0
    %813 = vmatpush1.msra.mxu0 0.0
    %814 = vmatprep.subr.mxu0 0.0
    %815 = vmatpush1.msra.mxu0 0.0
    %816 = vmatprep.subr.mxu0 0.0
    %817 = vmatpush1.msra.mxu0 0.0
    %818 = vmatprep.subr.mxu0 0.0
    %819 = vmatpush1.msra.mxu0 0.0
    %820 = vmatprep.subr.mxu0 0.0
    %821 = vmatpush1.msra.mxu0 0.0
    %822 = vmatprep.subr.mxu0 0.0
    %823 = vmatpush1.msra.mxu0 0.0
    %824 = vmatprep.subr.mxu0 0.0
    %825 = vmatpush1.msra.mxu0 0.0
    %826 = vmatprep.subr.mxu0 0.0
    %827 = vmatpush1.msra.mxu0 0.0
    %828 = vmatprep.subr.mxu0 0.0
    %829 = vmatpush1.msra.mxu0 0.0
    %830 = vmatprep.subr.mxu0 0.0
    %831 = vmatpush1.msra.mxu0 0.0
    %832 = vmatprep.subr.mxu0 0.0
    %833 = vmatpush1.msra.mxu0 0.0
    %834 = vmatprep.subr.mxu0 0.0
    %835 = vmatpush1.msra.mxu0 0.0
    %836 = vmatprep.subr.mxu0 0.0
    %837 = vmatpush1.msra.mxu0 0.0
    %838 = vmatprep.subr.mxu0 0.0
    %839 = vmatpush1.msra.mxu0 0.0
    %840 = vmatprep.subr.mxu0 0.0
    %841 = vmatpush1.msra.mxu0 0.0
    %842 = vmatprep.subr.mxu0 0.0
    %843 = vmatpush1.msra.mxu0 0.0
    %844 = vmatprep.subr.mxu0 0.0
    %845 = vmatpush1.msra.mxu0 0.0
    %846 = vmatprep.subr.mxu0 0.0
    %847 = vmatpush1.msra.mxu0 0.0
    %848 = vmatprep.subr.mxu0 0.0
    %849 = vmatpush1.msra.mxu0 0.0
    %850 = vmatprep.subr.mxu0 0.0
    %851 = vmatpush1.msra.mxu0 0.0
    %852 = vmatprep.subr.mxu0 0.0
    %853 = vmatpush1.msra.mxu0 0.0
    %854 = vmatprep.subr.mxu0 0.0
    %855 = vmatpush1.msra.mxu0 0.0
    %856 = vmatprep.subr.mxu0 0.0
    %857 = vmatpush1.msra.mxu0 0.0
    %858 = vmatprep.subr.mxu0 0.0
    %859 = vmatpush1.msra.mxu0 0.0
    %860 = vmatprep.mubr.f32.mxu0 0.0
    %861 = vmatmul.mubr.f32.gmra.mrb[0].mxu0 %v605
    %v862 = vpop.f32.mrb[0].mxu0
    %v863 = vadd.f32 0.0, %v862
    %v864 = vpop.f32.mrb[0].mxu0
    %v865 = vadd.f32 0.0, %v864
    %866 = vmatprep.mubr.f32.mxu0 0.0
    %867 = vmatmul.mubr.f32.gmra.mrb[0].mxu0 %v608
    %v868 = vpop.f32.mrb[0].mxu0
    %v869 = vadd.f32 0.0, %v868
    %v870 = vpop.f32.mrb[0].mxu0
    %v871 = vadd.f32 0.0, %v870
    %872 = vmatprep.mubr.f32.mxu0 0.0
    %873 = vmatmul.mubr.f32.gmra.mrb[0].mxu0 %v611
    %v874 = vpop.f32.mrb[0].mxu0
    %v875 = vadd.f32 0.0, %v874
    %v876 = vpop.f32.mrb[0].mxu0
    %v877 = vadd.f32 0.0, %v876
    %878 = vmatprep.mubr.f32.mxu0 0.0
    %879 = vmatmul.mubr.f32.gmra.mrb[0].mxu0 %v614
    %v880 = vpop.f32.mrb[0].mxu0
    %v881 = vadd.f32 0.0, %v880
    %v882 = vpop.f32.mrb[0].mxu0
    %v883 = vadd.f32 0.0, %v882
    %884 = vmatprep.mubr.f32.mxu0 0.0
    %885 = vmatmul.mubr.f32.gmra.mrb[0].mxu0 %v617
    %v886 = vpop.f32.mrb[0].mxu0
    %v887 = vadd.f32 0.0, %v886
    %v888 = vpop.f32.mrb[0].mxu0
    %v889 = vadd.f32 0.0, %v888
    %890 = vmatprep.mubr.f32.mxu0 0.0
    %891 = vmatmul.mubr.f32.gmra.mrb[0].mxu0 %v620
    %v892 = vpop.f32.mrb[0].mxu0
    %v893 = vadd.f32 0.0, %v892
    %v894 = vpop.f32.mrb[0].mxu0
    %v895 = vadd.f32 0.0, %v894
    %896 = vmatprep.mubr.f32.mxu0 0.0
    %897 = vmatmul.mubr.f32.gmra.mrb[0].mxu0 %v623
    %v898 = vpop.f32.mrb[0].mxu0
    %v899 = vadd.f32 0.0, %v898
    %v900 = vpop.f32.mrb[0].mxu0
    %v901 = vadd.f32 0.0, %v900
    %902 = vmatprep.mubr.f32.mxu0 0.0
    %903 = vmatmul.mubr.f32.gmra.mrb[0].mxu0 %v626
    %v904 = vpop.f32.mrb[0].mxu0
    %v905 = vadd.f32 0.0, %v904
    %v906 = vpop.f32.mrb[0].mxu0
    %v907 = vadd.f32 0.0, %v906
    %908 = vmatprep.mubr.f32.mxu0 0.0
    %909 = vmatmul.mubr.f32.gmra.mrb[0].mxu0 %v629
    %v910 = vpop.f32.mrb[0].mxu0
    %v911 = vadd.f32 0.0, %v910
    %v912 = vpop.f32.mrb[0].mxu0
    %v913 = vadd.f32 0.0, %v912
    %914 = vmatprep.mubr.f32.mxu0 0.0
    %915 = vmatmul.mubr.f32.gmra.mrb[0].mxu0 %v632
    %v916 = vpop.f32.mrb[0].mxu0
    %v917 = vadd.f32 0.0, %v916
    %v918 = vpop.f32.mrb[0].mxu0
    %v919 = vadd.f32 0.0, %v918
    %920 = vmatprep.mubr.f32.mxu0 0.0
    %921 = vmatmul.mubr.f32.gmra.mrb[0].mxu0 %v635
    %v922 = vpop.f32.mrb[0].mxu0
    %v923 = vadd.f32 0.0, %v922
    %v924 = vpop.f32.mrb[0].mxu0
    %v925 = vadd.f32 0.0, %v924
    %926 = vmatprep.mubr.f32.mxu0 0.0
    %927 = vmatmul.mubr.f32.gmra.mrb[0].mxu0 %v638
    %v928 = vpop.f32.mrb[0].mxu0
    %v929 = vadd.f32 0.0, %v928
    %v930 = vpop.f32.mrb[0].mxu0
    %v931 = vadd.f32 0.0, %v930
    %932 = vmatprep.mubr.f32.mxu0 0.0
    %933 = vmatmul.mubr.f32.gmra.mrb[0].mxu0 %v641
    %v934 = vpop.f32.mrb[0].mxu0
    %v935 = vadd.f32 0.0, %v934
    %v936 = vpop.f32.mrb[0].mxu0
    %v937 = vadd.f32 0.0, %v936
    %938 = vmatprep.mubr.f32.mxu0 0.0
    %939 = vmatmul.mubr.f32.gmra.mrb[0].mxu0 %v644
    %v940 = vpop.f32.mrb[0].mxu0
    %v941 = vadd.f32 0.0, %v940
    %v942 = vpop.f32.mrb[0].mxu0
    %v943 = vadd.f32 0.0, %v942
    %944 = vmatprep.mubr.f32.mxu0 0.0
    %945 = vmatmul.mubr.f32.gmra.mrb[0].mxu0 %v647
    %v946 = vpop.f32.mrb[0].mxu0
    %v947 = vadd.f32 0.0, %v946
    %v948 = vpop.f32.mrb[0].mxu0
    %v949 = vadd.f32 0.0, %v948
    %950 = vmatprep.mubr.f32.mxu0 0.0
    %951 = vmatmul.mubr.f32.gmra.mrb[0].mxu0 %v650
    %v952 = vpop.f32.mrb[0].mxu0
    %v953 = vadd.f32 0.0, %v952
    %v954 = vpop.f32.mrb[0].mxu0
    %v955 = vadd.f32 0.0, %v954
    %956 = vmatprep.mubr.f32.mxu0 0.0
    %957 = vmatmul.mubr.f32.gmra.mrb[0].mxu0 %v653
    %v958 = vpop.f32.mrb[0].mxu0
    %v959 = vadd.f32 0.0, %v958
    %v960 = vpop.f32.mrb[0].mxu0
    %v961 = vadd.f32 0.0, %v960
    %962 = vmatprep.mubr.f32.mxu0 0.0
    %963 = vmatmul.mubr.f32.gmra.mrb[0].mxu0 %v656
    %v964 = vpop.f32.mrb[0].mxu0
    %v965 = vadd.f32 0.0, %v964
    %v966 = vpop.f32.mrb[0].mxu0
    %v967 = vadd.f32 0.0, %v966
    %968 = vmatprep.mubr.f32.mxu0 0.0
    %969 = vmatmul.mubr.f32.gmra.mrb[0].mxu0 %v659
    %v970 = vpop.f32.mrb[0].mxu0
    %v971 = vadd.f32 0.0, %v970
    %v972 = vpop.f32.mrb[0].mxu0
    %v973 = vadd.f32 0.0, %v972
    %974 = vmatprep.mubr.f32.mxu0 0.0
    %975 = vmatmul.mubr.f32.gmra.mrb[0].mxu0 %v662
    %v976 = vpop.f32.mrb[0].mxu0
    %v977 = vadd.f32 0.0, %v976
    %v978 = vpop.f32.mrb[0].mxu0
    %v979 = vadd.f32 0.0, %v978
    %980 = vmatprep.mubr.f32.mxu0 0.0
    %981 = vmatmul.mubr.f32.gmra.mrb[0].mxu0 %v665
    %v982 = vpop.f32.mrb[0].mxu0
    %v983 = vadd.f32 0.0, %v982
    %v984 = vpop.f32.mrb[0].mxu0
    %v985 = vadd.f32 0.0, %v984
    %986 = vmatprep.mubr.f32.mxu0 0.0
    %987 = vmatmul.mubr.f32.gmra.mrb[0].mxu0 %v668
    %v988 = vpop.f32.mrb[0].mxu0
    %v989 = vadd.f32 0.0, %v988
    %v990 = vpop.f32.mrb[0].mxu0
    %v991 = vadd.f32 0.0, %v990
    %992 = vmatprep.mubr.f32.mxu0 0.0
    %993 = vmatmul.mubr.f32.gmra.mrb[0].mxu0 %v671
    %v994 = vpop.f32.mrb[0].mxu0
    %v995 = vadd.f32 0.0, %v994
    %v996 = vpop.f32.mrb[0].mxu0
    %v997 = vadd.f32 0.0, %v996
    %998 = vmatprep.mubr.f32.mxu0 0.0
    %999 = vmatmul.mubr.f32.gmra.mrb[0].mxu0 %v674
    %v1000 = vpop.f32.mrb[0].mxu0
    %v1001 = vadd.f32 0.0, %v1000
    %v1002 = vpop.f32.mrb[0].mxu0
    %v1003 = vadd.f32 0.0, %v1002
    %1004 = vmatprep.mubr.f32.mxu0 0.0
    %1005 = vmatmul.mubr.f32.gmra.mrb[0].mxu0 %v677
    %v1006 = vpop.f32.mrb[0].mxu0
    %v1007 = vadd.f32 0.0, %v1006
    %v1008 = vpop.f32.mrb[0].mxu0
    %v1009 = vadd.f32 0.0, %v1008
    %1010 = vmatprep.mubr.f32.mxu0 0.0
    %1011 = vmatmul.mubr.f32.gmra.mrb[0].mxu0 %v680
    %v1012 = vpop.f32.mrb[0].mxu0
    %v1013 = vadd.f32 0.0, %v1012
    %v1014 = vpop.f32.mrb[0].mxu0
    %v1015 = vadd.f32 0.0, %v1014
    %1016 = vmatprep.mubr.f32.mxu0 0.0
    %1017 = vmatmul.mubr.f32.gmra.mrb[0].mxu0 %v683
    %v1018 = vpop.f32.mrb[0].mxu0
    %v1019 = vadd.f32 0.0, %v1018
    %v1020 = vpop.f32.mrb[0].mxu0
    %v1021 = vadd.f32 0.0, %v1020
    %1022 = vmatprep.mubr.f32.mxu0 0.0
    %1023 = vmatmul.mubr.f32.gmra.mrb[0].mxu0 %v686
    %v1024 = vpop.f32.mrb[0].mxu0
    %v1025 = vadd.f32 0.0, %v1024
    %v1026 = vpop.f32.mrb[0].mxu0
    %v1027 = vadd.f32 0.0, %v1026
    %1028 = vmatprep.mubr.f32.mxu0 0.0
    %1029 = vmatmul.mubr.f32.gmra.mrb[0].mxu0 %v689
    %v1030 = vpop.f32.mrb[0].mxu0
    %v1031 = vadd.f32 0.0, %v1030
    %v1032 = vpop.f32.mrb[0].mxu0
    %v1033 = vadd.f32 0.0, %v1032
    %1034 = vmatprep.mubr.f32.mxu0 0.0
    %1035 = vmatmul.mubr.f32.gmra.mrb[0].mxu0 %v692
    %v1036 = vpop.f32.mrb[0].mxu0
    %v1037 = vadd.f32 0.0, %v1036
    %v1038 = vpop.f32.mrb[0].mxu0
    %v1039 = vadd.f32 0.0, %v1038
    %1040 = vmatprep.mubr.f32.mxu0 0.0
    %1041 = vmatmul.mubr.f32.gmra.mrb[0].mxu0 %v695
    %v1042 = vpop.f32.mrb[0].mxu0
    %v1043 = vadd.f32 0.0, %v1042
    %v1044 = vpop.f32.mrb[0].mxu0
    %v1045 = vadd.f32 0.0, %v1044
    %1046 = vmatprep.mubr.f32.mxu0 0.0
    %1047 = vmatmul.mubr.f32.gmra.mrb[0].mxu0 %v698
    %v1048 = vpop.f32.mrb[0].mxu0
    %v1049 = vadd.f32 0.0, %v1048
    %v1050 = vpop.f32.mrb[0].mxu0
    %v1051 = vadd.f32 0.0, %v1050
    %1052 = vmatprep.mubr.f32.mxu0 0.0
    %1053 = vmatmul.mubr.f32.gmra.mrb[0].mxu0 %v701
    %v1054 = vpop.f32.mrb[0].mxu0
    %v1055 = vadd.f32 0.0, %v1054
    %v1056 = vpop.f32.mrb[0].mxu0
    %v1057 = vadd.f32 0.0, %v1056
    %1058 = vmatprep.mubr.f32.mxu0 0.0
    %1059 = vmatmul.mubr.f32.gmra.mrb[0].mxu0 %v704
    %v1060 = vpop.f32.mrb[0].mxu0
    %v1061 = vadd.f32 0.0, %v1060
    %v1062 = vpop.f32.mrb[0].mxu0
    %v1063 = vadd.f32 0.0, %v1062
    %1064 = vmatprep.mubr.f32.mxu0 0.0
    %1065 = vmatmul.mubr.f32.gmra.mrb[0].mxu0 %v707
    %v1066 = vpop.f32.mrb[0].mxu0
    %v1067 = vadd.f32 0.0, %v1066
    %v1068 = vpop.f32.mrb[0].mxu0
    %v1069 = vadd.f32 0.0, %v1068
    %1070 = vmatprep.mubr.f32.mxu0 0.0
    %1071 = vmatmul.mubr.f32.gmra.mrb[0].mxu0 %v710
    %v1072 = vpop.f32.mrb[0].mxu0
    %v1073 = vadd.f32 0.0, %v1072
    %v1074 = vpop.f32.mrb[0].mxu0
    %v1075 = vadd.f32 0.0, %v1074
    %1076 = vmatprep.mubr.f32.mxu0 0.0
    %1077 = vmatmul.mubr.f32.gmra.mrb[0].mxu0 %v713
    %v1078 = vpop.f32.mrb[0].mxu0
    %v1079 = vadd.f32 0.0, %v1078
    %v1080 = vpop.f32.mrb[0].mxu0
    %v1081 = vadd.f32 0.0, %v1080
    %1082 = vmatprep.mubr.f32.mxu0 0.0
    %1083 = vmatmul.mubr.f32.gmra.mrb[0].mxu0 %v716
    %v1084 = vpop.f32.mrb[0].mxu0
    %v1085 = vadd.f32 0.0, %v1084
    %v1086 = vpop.f32.mrb[0].mxu0
    %v1087 = vadd.f32 0.0, %v1086
    %1088 = vmatprep.mubr.f32.mxu0 0.0
    %1089 = vmatmul.mubr.f32.gmra.mrb[0].mxu0 %v719
    %v1090 = vpop.f32.mrb[0].mxu0
    %v1091 = vadd.f32 0.0, %v1090
    %v1092 = vpop.f32.mrb[0].mxu0
    %v1093 = vadd.f32 0.0, %v1092
    %1094 = vmatprep.mubr.f32.mxu0 0.0
    %1095 = vmatmul.mubr.f32.gmra.mrb[0].mxu0 %v722
    %v1096 = vpop.f32.mrb[0].mxu0
    %v1097 = vadd.f32 0.0, %v1096
    %v1098 = vpop.f32.mrb[0].mxu0
    %v1099 = vadd.f32 0.0, %v1098
    %1100 = vmatprep.mubr.f32.mxu0 0.0
    %1101 = vmatmul.mubr.f32.gmra.mrb[0].mxu0 %v725
    %v1102 = vpop.f32.mrb[0].mxu0
    %v1103 = vadd.f32 0.0, %v1102
    %v1104 = vpop.f32.mrb[0].mxu0
    %v1105 = vadd.f32 0.0, %v1104
    %1106 = vmatprep.mubr.f32.mxu0 0.0
    %1107 = vmatmul.mubr.f32.gmra.mrb[0].mxu0 %v728
    %v1108 = vpop.f32.mrb[0].mxu0
    %v1109 = vadd.f32 0.0, %v1108
    %v1110 = vpop.f32.mrb[0].mxu0
    %v1111 = vadd.f32 0.0, %v1110
    %1112 = vmatprep.mubr.f32.mxu0 0.0
    %1113 = vmatmul.mubr.f32.gmra.mrb[0].mxu0 %v731
    %v1114 = vpop.f32.mrb[0].mxu0
    %v1115 = vadd.f32 0.0, %v1114
    %v1116 = vpop.f32.mrb[0].mxu0
    %v1117 = vadd.f32 0.0, %v1116
    %1118 = vmatprep.mubr.f32.mxu0 0.0
    %1119 = vmatmul.mubr.f32.gmra.mrb[0].mxu0 %v734
    %v1120 = vpop.f32.mrb[0].mxu0
    %v1121 = vadd.f32 0.0, %v1120
    %v1122 = vpop.f32.mrb[0].mxu0
    %v1123 = vadd.f32 0.0, %v1122
    %1124 = vmatprep.mubr.f32.mxu0 0.0
    %1125 = vmatmul.mubr.f32.gmra.mrb[0].mxu0 %v737
    %v1126 = vpop.f32.mrb[0].mxu0
    %v1127 = vadd.f32 0.0, %v1126
    %v1128 = vpop.f32.mrb[0].mxu0
    %v1129 = vadd.f32 0.0, %v1128
    %1130 = vmatprep.mubr.f32.mxu0 0.0
    %1131 = vmatmul.mubr.f32.gmra.mrb[0].mxu0 %v740
    %v1132 = vpop.f32.mrb[0].mxu0
    %v1133 = vadd.f32 0.0, %v1132
    %v1134 = vpop.f32.mrb[0].mxu0
    %v1135 = vadd.f32 0.0, %v1134
    %1136 = vmatprep.mubr.f32.mxu0 0.0
    %1137 = vmatmul.mubr.f32.gmra.mrb[0].mxu0 %v743
    %v1138 = vpop.f32.mrb[0].mxu0
    %v1139 = vadd.f32 0.0, %v1138
    %v1140 = vpop.f32.mrb[0].mxu0
    %v1141 = vadd.f32 0.0, %v1140
    %1142 = vmatprep.mubr.f32.mxu0 0.0
    %1143 = vmatmul.mubr.f32.gmra.mrb[0].mxu0 %v746
    %v1144 = vpop.f32.mrb[0].mxu0
    %v1145 = vadd.f32 0.0, %v1144
    %v1146 = vpop.f32.mrb[0].mxu0
    %v1147 = vadd.f32 0.0, %v1146
    %1148 = vmatprep.mubr.f32.mxu0 0.0
    %1149 = vmatmul.mubr.f32.gmra.mrb[0].mxu0 %v749
    %v1150 = vpop.f32.mrb[0].mxu0
    %v1151 = vadd.f32 0.0, %v1150
    %v1152 = vpop.f32.mrb[0].mxu0
    %v1153 = vadd.f32 0.0, %v1152
    %1154 = vmatprep.mubr.f32.mxu0 0.0
    %1155 = vmatmul.mubr.f32.gmra.mrb[0].mxu0 %v752
    %v1156 = vpop.f32.mrb[0].mxu0
    %v1157 = vadd.f32 0.0, %v1156
    %v1158 = vpop.f32.mrb[0].mxu0
    %v1159 = vadd.f32 0.0, %v1158
    %1160 = vmatprep.mubr.f32.mxu0 0.0
    %1161 = vmatmul.mubr.f32.gmra.mrb[0].mxu0 %v755
    %v1162 = vpop.f32.mrb[0].mxu0
    %v1163 = vadd.f32 0.0, %v1162
    %v1164 = vpop.f32.mrb[0].mxu0
    %v1165 = vadd.f32 0.0, %v1164
    %1166 = vmatprep.mubr.f32.mxu0 0.0
    %1167 = vmatmul.mubr.f32.gmra.mrb[0].mxu0 %v758
    %v1168 = vpop.f32.mrb[0].mxu0
    %v1169 = vadd.f32 0.0, %v1168
    %v1170 = vpop.f32.mrb[0].mxu0
    %v1171 = vadd.f32 0.0, %v1170
    %1172 = vmatprep.mubr.f32.mxu0 0.0
    %1173 = vmatmul.mubr.f32.gmra.mrb[0].mxu0 %v761
    %v1174 = vpop.f32.mrb[0].mxu0
    %v1175 = vadd.f32 0.0, %v1174
    %v1176 = vpop.f32.mrb[0].mxu0
    %v1177 = vadd.f32 0.0, %v1176
    %1178 = vmatprep.mubr.f32.mxu0 0.0
    %1179 = vmatmul.mubr.f32.gmra.mrb[0].mxu0 %v764
    %v1180 = vpop.f32.mrb[0].mxu0
    %v1181 = vadd.f32 0.0, %v1180
    %v1182 = vpop.f32.mrb[0].mxu0
    %v1183 = vadd.f32 0.0, %v1182
    %1184 = vmatprep.mubr.f32.mxu0 0.0
    %1185 = vmatmul.mubr.f32.gmra.mrb[0].mxu0 %v767
    %v1186 = vpop.f32.mrb[0].mxu0
    %v1187 = vadd.f32 0.0, %v1186
    %v1188 = vpop.f32.mrb[0].mxu0
    %v1189 = vadd.f32 0.0, %v1188
    %1190 = vmatprep.mubr.f32.mxu0 0.0
    %1191 = vmatmul.mubr.f32.gmra.mrb[0].mxu0 %v770
    %v1192 = vpop.f32.mrb[0].mxu0
    %v1193 = vadd.f32 0.0, %v1192
    %v1194 = vpop.f32.mrb[0].mxu0
    %v1195 = vadd.f32 0.0, %v1194
    %1196 = vmatprep.mubr.f32.mxu0 0.0
    %1197 = vmatmul.mubr.f32.gmra.mrb[0].mxu0 %v773
    %v1198 = vpop.f32.mrb[0].mxu0
    %v1199 = vadd.f32 0.0, %v1198
    %v1200 = vpop.f32.mrb[0].mxu0
    %v1201 = vadd.f32 0.0, %v1200
    %1202 = vmatprep.mubr.f32.mxu0 0.0
    %1203 = vmatmul.mubr.f32.gmra.mrb[0].mxu0 %v776
    %v1204 = vpop.f32.mrb[0].mxu0
    %v1205 = vadd.f32 0.0, %v1204
    %v1206 = vpop.f32.mrb[0].mxu0
    %v1207 = vadd.f32 0.0, %v1206
    %1208 = vmatprep.mubr.f32.mxu0 0.0
    %1209 = vmatmul.mubr.f32.gmra.mrb[0].mxu0 %v779
    %v1210 = vpop.f32.mrb[0].mxu0
    %v1211 = vadd.f32 0.0, %v1210
    %v1212 = vpop.f32.mrb[0].mxu0
    %v1213 = vadd.f32 0.0, %v1212
    %1214 = vmatprep.mubr.f32.mxu0 0.0
    %1215 = vmatmul.mubr.f32.gmra.mrb[0].mxu0 %v782
    %v1216 = vpop.f32.mrb[0].mxu0
    %v1217 = vadd.f32 0.0, %v1216
    %v1218 = vpop.f32.mrb[0].mxu0
    %v1219 = vadd.f32 0.0, %v1218
    %1220 = vmatprep.mubr.f32.mxu0 0.0
    %1221 = vmatmul.mubr.f32.gmra.mrb[0].mxu0 %v785
    %v1222 = vpop.f32.mrb[0].mxu0
    %v1223 = vadd.f32 0.0, %v1222
    %v1224 = vpop.f32.mrb[0].mxu0
    %v1225 = vadd.f32 0.0, %v1224
    %1226 = vmatprep.mubr.f32.mxu0 0.0
    %1227 = vmatmul.mubr.f32.gmra.mrb[0].mxu0 %v788
    %v1228 = vpop.f32.mrb[0].mxu0
    %v1229 = vadd.f32 0.0, %v1228
    %v1230 = vpop.f32.mrb[0].mxu0
    %v1231 = vadd.f32 0.0, %v1230
    %1232 = vmatprep.mubr.f32.mxu0 0.0
    %1233 = vmatmul.mubr.f32.gmra.mrb[0].mxu0 %v791
    %v1234 = vpop.f32.mrb[0].mxu0
    %v1235 = vadd.f32 0.0, %v1234
    %v1236 = vpop.f32.mrb[0].mxu0
    %v1237 = vadd.f32 0.0, %v1236
    %1238 = vmatprep.mubr.f32.mxu0 0.0
    %1239 = vmatmul.mubr.f32.gmra.mrb[0].mxu0 %v794
    %v1240 = vpop.f32.mrb[0].mxu0
    %v1241 = vadd.f32 0.0, %v1240
    %v1242 = vpop.f32.mrb[0].mxu0
    %v1243 = vadd.f32 0.0, %v1242
    %1244 = vdwg.mxu0
    %1245 = vmatprep.subr.mxu0 %v278
    %1246 = vmatpush1.msra.mxu0 %v277
    %1247 = vmatprep.subr.mxu0 %v282
    %1248 = vmatpush1.msra.mxu0 %v281
    %1249 = vmatprep.subr.mxu0 0.0
    %1250 = vmatpush1.msra.mxu0 0.0
    %1251 = vmatprep.subr.mxu0 0.0
    %1252 = vmatpush1.msra.mxu0 0.0
    %1253 = vmatprep.subr.mxu0 0.0
    %1254 = vmatpush1.msra.mxu0 0.0
    %1255 = vmatprep.subr.mxu0 0.0
    %1256 = vmatpush1.msra.mxu0 0.0
    %1257 = vmatprep.subr.mxu0 0.0
    %1258 = vmatpush1.msra.mxu0 0.0
    %1259 = vmatprep.subr.mxu0 0.0
    %1260 = vmatpush1.msra.mxu0 0.0
    %1261 = vmatprep.subr.mxu0 0.0
    %1262 = vmatpush1.msra.mxu0 0.0
    %1263 = vmatprep.subr.mxu0 0.0
    %1264 = vmatpush1.msra.mxu0 0.0
    %1265 = vmatprep.subr.mxu0 0.0
    %1266 = vmatpush1.msra.mxu0 0.0
    %1267 = vmatprep.subr.mxu0 0.0
    %1268 = vmatpush1.msra.mxu0 0.0
    %1269 = vmatprep.subr.mxu0 0.0
    %1270 = vmatpush1.msra.mxu0 0.0
    %1271 = vmatprep.subr.mxu0 0.0
    %1272 = vmatpush1.msra.mxu0 0.0
    %1273 = vmatprep.subr.mxu0 0.0
    %1274 = vmatpush1.msra.mxu0 0.0
    %1275 = vmatprep.subr.mxu0 0.0
    %1276 = vmatpush1.msra.mxu0 0.0
    %1277 = vmatprep.subr.mxu0 0.0
    %1278 = vmatpush1.msra.mxu0 0.0
    %1279 = vmatprep.subr.mxu0 0.0
    %1280 = vmatpush1.msra.mxu0 0.0
    %1281 = vmatprep.subr.mxu0 0.0
    %1282 = vmatpush1.msra.mxu0 0.0
    %1283 = vmatprep.subr.mxu0 0.0
    %1284 = vmatpush1.msra.mxu0 0.0
    %1285 = vmatprep.subr.mxu0 0.0
    %1286 = vmatpush1.msra.mxu0 0.0
    %1287 = vmatprep.subr.mxu0 0.0
    %1288 = vmatpush1.msra.mxu0 0.0
    %1289 = vmatprep.subr.mxu0 0.0
    %1290 = vmatpush1.msra.mxu0 0.0
    %1291 = vmatprep.subr.mxu0 0.0
    %1292 = vmatpush1.msra.mxu0 0.0
    %1293 = vmatprep.subr.mxu0 0.0
    %1294 = vmatpush1.msra.mxu0 0.0
    %1295 = vmatprep.subr.mxu0 0.0
    %1296 = vmatpush1.msra.mxu0 0.0
    %1297 = vmatprep.subr.mxu0 0.0
    %1298 = vmatpush1.msra.mxu0 0.0
    %1299 = vmatprep.subr.mxu0 0.0
    %1300 = vmatpush1.msra.mxu0 0.0
    %1301 = vmatprep.subr.mxu0 0.0
    %1302 = vmatpush1.msra.mxu0 0.0
    %1303 = vmatprep.subr.mxu0 0.0
    %1304 = vmatpush1.msra.mxu0 0.0
    %1305 = vmatprep.subr.mxu0 0.0
    %1306 = vmatpush1.msra.mxu0 0.0
    %1307 = vmatprep.subr.mxu0 0.0
    %1308 = vmatpush1.msra.mxu0 0.0
    %1309 = vmatprep.mubr.f32.mxu0 0.0
    %1310 = vmatmul.mubr.f32.gmra.mrb[0].mxu0 %v605
    %v1311 = vpop.f32.mrb[0].mxu0
    %v1312 = vadd.f32 0.0, %v1311
    %v1313 = vpop.f32.mrb[0].mxu0
    %v1314 = vadd.f32 0.0, %v1313
    %1315 = vmatprep.mubr.f32.mxu0 0.0
    %1316 = vmatmul.mubr.f32.gmra.mrb[0].mxu0 %v608
    %v1317 = vpop.f32.mrb[0].mxu0
    %v1318 = vadd.f32 0.0, %v1317
    %v1319 = vpop.f32.mrb[0].mxu0
    %v1320 = vadd.f32 0.0, %v1319
    %1321 = vmatprep.mubr.f32.mxu0 0.0
    %1322 = vmatmul.mubr.f32.gmra.mrb[0].mxu0 %v611
    %v1323 = vpop.f32.mrb[0].mxu0
    %v1324 = vadd.f32 0.0, %v1323
    %v1325 = vpop.f32.mrb[0].mxu0
    %v1326 = vadd.f32 0.0, %v1325
    %1327 = vmatprep.mubr.f32.mxu0 0.0
    %1328 = vmatmul.mubr.f32.gmra.mrb[0].mxu0 %v614
    %v1329 = vpop.f32.mrb[0].mxu0
    %v1330 = vadd.f32 0.0, %v1329
    %v1331 = vpop.f32.mrb[0].mxu0
    %v1332 = vadd.f32 0.0, %v1331
    %1333 = vmatprep.mubr.f32.mxu0 0.0
    %1334 = vmatmul.mubr.f32.gmra.mrb[0].mxu0 %v617
    %v1335 = vpop.f32.mrb[0].mxu0
    %v1336 = vadd.f32 0.0, %v1335
    %v1337 = vpop.f32.mrb[0].mxu0
    %v1338 = vadd.f32 0.0, %v1337
    %1339 = vmatprep.mubr.f32.mxu0 0.0
    %1340 = vmatmul.mubr.f32.gmra.mrb[0].mxu0 %v620
    %v1341 = vpop.f32.mrb[0].mxu0
    %v1342 = vadd.f32 0.0, %v1341
    %v1343 = vpop.f32.mrb[0].mxu0
    %v1344 = vadd.f32 0.0, %v1343
    %1345 = vmatprep.mubr.f32.mxu0 0.0
    %1346 = vmatmul.mubr.f32.gmra.mrb[0].mxu0 %v623
    %v1347 = vpop.f32.mrb[0].mxu0
    %v1348 = vadd.f32 0.0, %v1347
    %v1349 = vpop.f32.mrb[0].mxu0
    %v1350 = vadd.f32 0.0, %v1349
    %1351 = vmatprep.mubr.f32.mxu0 0.0
    %1352 = vmatmul.mubr.f32.gmra.mrb[0].mxu0 %v626
    %v1353 = vpop.f32.mrb[0].mxu0
    %v1354 = vadd.f32 0.0, %v1353
    %v1355 = vpop.f32.mrb[0].mxu0
    %v1356 = vadd.f32 0.0, %v1355
    %1357 = vmatprep.mubr.f32.mxu0 0.0
    %1358 = vmatmul.mubr.f32.gmra.mrb[0].mxu0 %v629
    %v1359 = vpop.f32.mrb[0].mxu0
    %v1360 = vadd.f32 0.0, %v1359
    %v1361 = vpop.f32.mrb[0].mxu0
    %v1362 = vadd.f32 0.0, %v1361
    %1363 = vmatprep.mubr.f32.mxu0 0.0
    %1364 = vmatmul.mubr.f32.gmra.mrb[0].mxu0 %v632
    %v1365 = vpop.f32.mrb[0].mxu0
    %v1366 = vadd.f32 0.0, %v1365
    %v1367 = vpop.f32.mrb[0].mxu0
    %v1368 = vadd.f32 0.0, %v1367
    %1369 = vmatprep.mubr.f32.mxu0 0.0
    %1370 = vmatmul.mubr.f32.gmra.mrb[0].mxu0 %v635
    %v1371 = vpop.f32.mrb[0].mxu0
    %v1372 = vadd.f32 0.0, %v1371
    %v1373 = vpop.f32.mrb[0].mxu0
    %v1374 = vadd.f32 0.0, %v1373
    %1375 = vmatprep.mubr.f32.mxu0 0.0
    %1376 = vmatmul.mubr.f32.gmra.mrb[0].mxu0 %v638
    %v1377 = vpop.f32.mrb[0].mxu0
    %v1378 = vadd.f32 0.0, %v1377
    %v1379 = vpop.f32.mrb[0].mxu0
    %v1380 = vadd.f32 0.0, %v1379
    %1381 = vmatprep.mubr.f32.mxu0 0.0
    %1382 = vmatmul.mubr.f32.gmra.mrb[0].mxu0 %v641
    %v1383 = vpop.f32.mrb[0].mxu0
    %v1384 = vadd.f32 0.0, %v1383
    %v1385 = vpop.f32.mrb[0].mxu0
    %v1386 = vadd.f32 0.0, %v1385
    %1387 = vmatprep.mubr.f32.mxu0 0.0
    %1388 = vmatmul.mubr.f32.gmra.mrb[0].mxu0 %v644
    %v1389 = vpop.f32.mrb[0].mxu0
    %v1390 = vadd.f32 0.0, %v1389
    %v1391 = vpop.f32.mrb[0].mxu0
    %v1392 = vadd.f32 0.0, %v1391
    %1393 = vmatprep.mubr.f32.mxu0 0.0
    %1394 = vmatmul.mubr.f32.gmra.mrb[0].mxu0 %v647
    %v1395 = vpop.f32.mrb[0].mxu0
    %v1396 = vadd.f32 0.0, %v1395
    %v1397 = vpop.f32.mrb[0].mxu0
    %v1398 = vadd.f32 0.0, %v1397
    %1399 = vmatprep.mubr.f32.mxu0 0.0
    %1400 = vmatmul.mubr.f32.gmra.mrb[0].mxu0 %v650
    %v1401 = vpop.f32.mrb[0].mxu0
    %v1402 = vadd.f32 0.0, %v1401
    %v1403 = vpop.f32.mrb[0].mxu0
    %v1404 = vadd.f32 0.0, %v1403
    %1405 = vmatprep.mubr.f32.mxu0 0.0
    %1406 = vmatmul.mubr.f32.gmra.mrb[0].mxu0 %v653
    %v1407 = vpop.f32.mrb[0].mxu0
    %v1408 = vadd.f32 0.0, %v1407
    %v1409 = vpop.f32.mrb[0].mxu0
    %v1410 = vadd.f32 0.0, %v1409
    %1411 = vmatprep.mubr.f32.mxu0 0.0
    %1412 = vmatmul.mubr.f32.gmra.mrb[0].mxu0 %v656
    %v1413 = vpop.f32.mrb[0].mxu0
    %v1414 = vadd.f32 0.0, %v1413
    %v1415 = vpop.f32.mrb[0].mxu0
    %v1416 = vadd.f32 0.0, %v1415
    %1417 = vmatprep.mubr.f32.mxu0 0.0
    %1418 = vmatmul.mubr.f32.gmra.mrb[0].mxu0 %v659
    %v1419 = vpop.f32.mrb[0].mxu0
    %v1420 = vadd.f32 0.0, %v1419
    %v1421 = vpop.f32.mrb[0].mxu0
    %v1422 = vadd.f32 0.0, %v1421
    %1423 = vmatprep.mubr.f32.mxu0 0.0
    %1424 = vmatmul.mubr.f32.gmra.mrb[0].mxu0 %v662
    %v1425 = vpop.f32.mrb[0].mxu0
    %v1426 = vadd.f32 0.0, %v1425
    %v1427 = vpop.f32.mrb[0].mxu0
    %v1428 = vadd.f32 0.0, %v1427
    %1429 = vmatprep.mubr.f32.mxu0 0.0
    %1430 = vmatmul.mubr.f32.gmra.mrb[0].mxu0 %v665
    %v1431 = vpop.f32.mrb[0].mxu0
    %v1432 = vadd.f32 0.0, %v1431
    %v1433 = vpop.f32.mrb[0].mxu0
    %v1434 = vadd.f32 0.0, %v1433
    %1435 = vmatprep.mubr.f32.mxu0 0.0
    %1436 = vmatmul.mubr.f32.gmra.mrb[0].mxu0 %v668
    %v1437 = vpop.f32.mrb[0].mxu0
    %v1438 = vadd.f32 0.0, %v1437
    %v1439 = vpop.f32.mrb[0].mxu0
    %v1440 = vadd.f32 0.0, %v1439
    %1441 = vmatprep.mubr.f32.mxu0 0.0
    %1442 = vmatmul.mubr.f32.gmra.mrb[0].mxu0 %v671
    %v1443 = vpop.f32.mrb[0].mxu0
    %v1444 = vadd.f32 0.0, %v1443
    %v1445 = vpop.f32.mrb[0].mxu0
    %v1446 = vadd.f32 0.0, %v1445
    %1447 = vmatprep.mubr.f32.mxu0 0.0
    %1448 = vmatmul.mubr.f32.gmra.mrb[0].mxu0 %v674
    %v1449 = vpop.f32.mrb[0].mxu0
    %v1450 = vadd.f32 0.0, %v1449
    %v1451 = vpop.f32.mrb[0].mxu0
    %v1452 = vadd.f32 0.0, %v1451
    %1453 = vmatprep.mubr.f32.mxu0 0.0
    %1454 = vmatmul.mubr.f32.gmra.mrb[0].mxu0 %v677
    %v1455 = vpop.f32.mrb[0].mxu0
    %v1456 = vadd.f32 0.0, %v1455
    %v1457 = vpop.f32.mrb[0].mxu0
    %v1458 = vadd.f32 0.0, %v1457
    %1459 = vmatprep.mubr.f32.mxu0 0.0
    %1460 = vmatmul.mubr.f32.gmra.mrb[0].mxu0 %v680
    %v1461 = vpop.f32.mrb[0].mxu0
    %v1462 = vadd.f32 0.0, %v1461
    %v1463 = vpop.f32.mrb[0].mxu0
    %v1464 = vadd.f32 0.0, %v1463
    %1465 = vmatprep.mubr.f32.mxu0 0.0
    %1466 = vmatmul.mubr.f32.gmra.mrb[0].mxu0 %v683
    %v1467 = vpop.f32.mrb[0].mxu0
    %v1468 = vadd.f32 0.0, %v1467
    %v1469 = vpop.f32.mrb[0].mxu0
    %v1470 = vadd.f32 0.0, %v1469
    %1471 = vmatprep.mubr.f32.mxu0 0.0
    %1472 = vmatmul.mubr.f32.gmra.mrb[0].mxu0 %v686
    %v1473 = vpop.f32.mrb[0].mxu0
    %v1474 = vadd.f32 0.0, %v1473
    %v1475 = vpop.f32.mrb[0].mxu0
    %v1476 = vadd.f32 0.0, %v1475
    %1477 = vmatprep.mubr.f32.mxu0 0.0
    %1478 = vmatmul.mubr.f32.gmra.mrb[0].mxu0 %v689
    %v1479 = vpop.f32.mrb[0].mxu0
    %v1480 = vadd.f32 0.0, %v1479
    %v1481 = vpop.f32.mrb[0].mxu0
    %v1482 = vadd.f32 0.0, %v1481
    %1483 = vmatprep.mubr.f32.mxu0 0.0
    %1484 = vmatmul.mubr.f32.gmra.mrb[0].mxu0 %v692
    %v1485 = vpop.f32.mrb[0].mxu0
    %v1486 = vadd.f32 0.0, %v1485
    %v1487 = vpop.f32.mrb[0].mxu0
    %v1488 = vadd.f32 0.0, %v1487
    %1489 = vmatprep.mubr.f32.mxu0 0.0
    %1490 = vmatmul.mubr.f32.gmra.mrb[0].mxu0 %v695
    %v1491 = vpop.f32.mrb[0].mxu0
    %v1492 = vadd.f32 0.0, %v1491
    %v1493 = vpop.f32.mrb[0].mxu0
    %v1494 = vadd.f32 0.0, %v1493
    %1495 = vmatprep.mubr.f32.mxu0 0.0
    %1496 = vmatmul.mubr.f32.gmra.mrb[0].mxu0 %v698
    %v1497 = vpop.f32.mrb[0].mxu0
    %v1498 = vadd.f32 0.0, %v1497
    %v1499 = vpop.f32.mrb[0].mxu0
    %v1500 = vadd.f32 0.0, %v1499
    %1501 = vmatprep.mubr.f32.mxu0 0.0
    %1502 = vmatmul.mubr.f32.gmra.mrb[0].mxu0 %v701
    %v1503 = vpop.f32.mrb[0].mxu0
    %v1504 = vadd.f32 0.0, %v1503
    %v1505 = vpop.f32.mrb[0].mxu0
    %v1506 = vadd.f32 0.0, %v1505
    %1507 = vmatprep.mubr.f32.mxu0 0.0
    %1508 = vmatmul.mubr.f32.gmra.mrb[0].mxu0 %v704
    %v1509 = vpop.f32.mrb[0].mxu0
    %v1510 = vadd.f32 0.0, %v1509
    %v1511 = vpop.f32.mrb[0].mxu0
    %v1512 = vadd.f32 0.0, %v1511
    %1513 = vmatprep.mubr.f32.mxu0 0.0
    %1514 = vmatmul.mubr.f32.gmra.mrb[0].mxu0 %v707
    %v1515 = vpop.f32.mrb[0].mxu0
    %v1516 = vadd.f32 0.0, %v1515
    %v1517 = vpop.f32.mrb[0].mxu0
    %v1518 = vadd.f32 0.0, %v1517
    %1519 = vmatprep.mubr.f32.mxu0 0.0
    %1520 = vmatmul.mubr.f32.gmra.mrb[0].mxu0 %v710
    %v1521 = vpop.f32.mrb[0].mxu0
    %v1522 = vadd.f32 0.0, %v1521
    %v1523 = vpop.f32.mrb[0].mxu0
    %v1524 = vadd.f32 0.0, %v1523
    %1525 = vmatprep.mubr.f32.mxu0 0.0
    %1526 = vmatmul.mubr.f32.gmra.mrb[0].mxu0 %v713
    %v1527 = vpop.f32.mrb[0].mxu0
    %v1528 = vadd.f32 0.0, %v1527
    %v1529 = vpop.f32.mrb[0].mxu0
    %v1530 = vadd.f32 0.0, %v1529
    %1531 = vmatprep.mubr.f32.mxu0 0.0
    %1532 = vmatmul.mubr.f32.gmra.mrb[0].mxu0 %v716
    %v1533 = vpop.f32.mrb[0].mxu0
    %v1534 = vadd.f32 0.0, %v1533
    %v1535 = vpop.f32.mrb[0].mxu0
    %v1536 = vadd.f32 0.0, %v1535
    %1537 = vmatprep.mubr.f32.mxu0 0.0
    %1538 = vmatmul.mubr.f32.gmra.mrb[0].mxu0 %v719
    %v1539 = vpop.f32.mrb[0].mxu0
    %v1540 = vadd.f32 0.0, %v1539
    %v1541 = vpop.f32.mrb[0].mxu0
    %v1542 = vadd.f32 0.0, %v1541
    %1543 = vmatprep.mubr.f32.mxu0 0.0
    %1544 = vmatmul.mubr.f32.gmra.mrb[0].mxu0 %v722
    %v1545 = vpop.f32.mrb[0].mxu0
    %v1546 = vadd.f32 0.0, %v1545
    %v1547 = vpop.f32.mrb[0].mxu0
    %v1548 = vadd.f32 0.0, %v1547
    %1549 = vmatprep.mubr.f32.mxu0 0.0
    %1550 = vmatmul.mubr.f32.gmra.mrb[0].mxu0 %v725
    %v1551 = vpop.f32.mrb[0].mxu0
    %v1552 = vadd.f32 0.0, %v1551
    %v1553 = vpop.f32.mrb[0].mxu0
    %v1554 = vadd.f32 0.0, %v1553
    %1555 = vmatprep.mubr.f32.mxu0 0.0
    %1556 = vmatmul.mubr.f32.gmra.mrb[0].mxu0 %v728
    %v1557 = vpop.f32.mrb[0].mxu0
    %v1558 = vadd.f32 0.0, %v1557
    %v1559 = vpop.f32.mrb[0].mxu0
    %v1560 = vadd.f32 0.0, %v1559
    %1561 = vmatprep.mubr.f32.mxu0 0.0
    %1562 = vmatmul.mubr.f32.gmra.mrb[0].mxu0 %v731
    %v1563 = vpop.f32.mrb[0].mxu0
    %v1564 = vadd.f32 0.0, %v1563
    %v1565 = vpop.f32.mrb[0].mxu0
    %v1566 = vadd.f32 0.0, %v1565
    %1567 = vmatprep.mubr.f32.mxu0 0.0
    %1568 = vmatmul.mubr.f32.gmra.mrb[0].mxu0 %v734
    %v1569 = vpop.f32.mrb[0].mxu0
    %v1570 = vadd.f32 0.0, %v1569
    %v1571 = vpop.f32.mrb[0].mxu0
    %v1572 = vadd.f32 0.0, %v1571
    %1573 = vmatprep.mubr.f32.mxu0 0.0
    %1574 = vmatmul.mubr.f32.gmra.mrb[0].mxu0 %v737
    %v1575 = vpop.f32.mrb[0].mxu0
    %v1576 = vadd.f32 0.0, %v1575
    %v1577 = vpop.f32.mrb[0].mxu0
    %v1578 = vadd.f32 0.0, %v1577
    %1579 = vmatprep.mubr.f32.mxu0 0.0
    %1580 = vmatmul.mubr.f32.gmra.mrb[0].mxu0 %v740
    %v1581 = vpop.f32.mrb[0].mxu0
    %v1582 = vadd.f32 0.0, %v1581
    %v1583 = vpop.f32.mrb[0].mxu0
    %v1584 = vadd.f32 0.0, %v1583
    %1585 = vmatprep.mubr.f32.mxu0 0.0
    %1586 = vmatmul.mubr.f32.gmra.mrb[0].mxu0 %v743
    %v1587 = vpop.f32.mrb[0].mxu0
    %v1588 = vadd.f32 0.0, %v1587
    %v1589 = vpop.f32.mrb[0].mxu0
    %v1590 = vadd.f32 0.0, %v1589
    %1591 = vmatprep.mubr.f32.mxu0 0.0
    %1592 = vmatmul.mubr.f32.gmra.mrb[0].mxu0 %v746
    %v1593 = vpop.f32.mrb[0].mxu0
    %v1594 = vadd.f32 0.0, %v1593
    %v1595 = vpop.f32.mrb[0].mxu0
    %v1596 = vadd.f32 0.0, %v1595
    %1597 = vmatprep.mubr.f32.mxu0 0.0
    %1598 = vmatmul.mubr.f32.gmra.mrb[0].mxu0 %v749
    %v1599 = vpop.f32.mrb[0].mxu0
    %v1600 = vadd.f32 0.0, %v1599
    %v1601 = vpop.f32.mrb[0].mxu0
    %v1602 = vadd.f32 0.0, %v1601
    %1603 = vmatprep.mubr.f32.mxu0 0.0
    %1604 = vmatmul.mubr.f32.gmra.mrb[0].mxu0 %v752
    %v1605 = vpop.f32.mrb[0].mxu0
    %v1606 = vadd.f32 0.0, %v1605
    %v1607 = vpop.f32.mrb[0].mxu0
    %v1608 = vadd.f32 0.0, %v1607
    %1609 = vmatprep.mubr.f32.mxu0 0.0
    %1610 = vmatmul.mubr.f32.gmra.mrb[0].mxu0 %v755
    %v1611 = vpop.f32.mrb[0].mxu0
    %v1612 = vadd.f32 0.0, %v1611
    %v1613 = vpop.f32.mrb[0].mxu0
    %v1614 = vadd.f32 0.0, %v1613
    %1615 = vmatprep.mubr.f32.mxu0 0.0
    %1616 = vmatmul.mubr.f32.gmra.mrb[0].mxu0 %v758
    %v1617 = vpop.f32.mrb[0].mxu0
    %v1618 = vadd.f32 0.0, %v1617
    %v1619 = vpop.f32.mrb[0].mxu0
    %v1620 = vadd.f32 0.0, %v1619
    %1621 = vmatprep.mubr.f32.mxu0 0.0
    %1622 = vmatmul.mubr.f32.gmra.mrb[0].mxu0 %v761
    %v1623 = vpop.f32.mrb[0].mxu0
    %v1624 = vadd.f32 0.0, %v1623
    %v1625 = vpop.f32.mrb[0].mxu0
    %v1626 = vadd.f32 0.0, %v1625
    %1627 = vmatprep.mubr.f32.mxu0 0.0
    %1628 = vmatmul.mubr.f32.gmra.mrb[0].mxu0 %v764
    %v1629 = vpop.f32.mrb[0].mxu0
    %v1630 = vadd.f32 0.0, %v1629
    %v1631 = vpop.f32.mrb[0].mxu0
    %v1632 = vadd.f32 0.0, %v1631
    %1633 = vmatprep.mubr.f32.mxu0 0.0
    %1634 = vmatmul.mubr.f32.gmra.mrb[0].mxu0 %v767
    %v1635 = vpop.f32.mrb[0].mxu0
    %v1636 = vadd.f32 0.0, %v1635
    %v1637 = vpop.f32.mrb[0].mxu0
    %v1638 = vadd.f32 0.0, %v1637
    %1639 = vmatprep.mubr.f32.mxu0 0.0
    %1640 = vmatmul.mubr.f32.gmra.mrb[0].mxu0 %v770
    %v1641 = vpop.f32.mrb[0].mxu0
    %v1642 = vadd.f32 0.0, %v1641
    %v1643 = vpop.f32.mrb[0].mxu0
    %v1644 = vadd.f32 0.0, %v1643
    %1645 = vmatprep.mubr.f32.mxu0 0.0
    %1646 = vmatmul.mubr.f32.gmra.mrb[0].mxu0 %v773
    %v1647 = vpop.f32.mrb[0].mxu0
    %v1648 = vadd.f32 0.0, %v1647
    %v1649 = vpop.f32.mrb[0].mxu0
    %v1650 = vadd.f32 0.0, %v1649
    %1651 = vmatprep.mubr.f32.mxu0 0.0
    %1652 = vmatmul.mubr.f32.gmra.mrb[0].mxu0 %v776
    %v1653 = vpop.f32.mrb[0].mxu0
    %v1654 = vadd.f32 0.0, %v1653
    %v1655 = vpop.f32.mrb[0].mxu0
    %v1656 = vadd.f32 0.0, %v1655
    %1657 = vmatprep.mubr.f32.mxu0 0.0
    %1658 = vmatmul.mubr.f32.gmra.mrb[0].mxu0 %v779
    %v1659 = vpop.f32.mrb[0].mxu0
    %v1660 = vadd.f32 0.0, %v1659
    %v1661 = vpop.f32.mrb[0].mxu0
    %v1662 = vadd.f32 0.0, %v1661
    %1663 = vmatprep.mubr.f32.mxu0 0.0
    %1664 = vmatmul.mubr.f32.gmra.mrb[0].mxu0 %v782
    %v1665 = vpop.f32.mrb[0].mxu0
    %v1666 = vadd.f32 0.0, %v1665
    %v1667 = vpop.f32.mrb[0].mxu0
    %v1668 = vadd.f32 0.0, %v1667
    %1669 = vmatprep.mubr.f32.mxu0 0.0
    %1670 = vmatmul.mubr.f32.gmra.mrb[0].mxu0 %v785
    %v1671 = vpop.f32.mrb[0].mxu0
    %v1672 = vadd.f32 0.0, %v1671
    %v1673 = vpop.f32.mrb[0].mxu0
    %v1674 = vadd.f32 0.0, %v1673
    %1675 = vmatprep.mubr.f32.mxu0 0.0
    %1676 = vmatmul.mubr.f32.gmra.mrb[0].mxu0 %v788
    %v1677 = vpop.f32.mrb[0].mxu0
    %v1678 = vadd.f32 0.0, %v1677
    %v1679 = vpop.f32.mrb[0].mxu0
    %v1680 = vadd.f32 0.0, %v1679
    %1681 = vmatprep.mubr.f32.mxu0 0.0
    %1682 = vmatmul.mubr.f32.gmra.mrb[0].mxu0 %v791
    %v1683 = vpop.f32.mrb[0].mxu0
    %v1684 = vadd.f32 0.0, %v1683
    %v1685 = vpop.f32.mrb[0].mxu0
    %v1686 = vadd.f32 0.0, %v1685
    %1687 = vmatprep.mubr.f32.mxu0 0.0
    %1688 = vmatmul.mubr.f32.gmra.mrb[0].mxu0 %v794
    %v1689 = vpop.f32.mrb[0].mxu0
    %v1690 = vadd.f32 0.0, %v1689
    %v1691 = vpop.f32.mrb[0].mxu0
    %v1692 = vadd.f32 0.0, %v1691
    %1693 = vdwg.mxu0
    %v1694 = vadd.f32 %v283, %v863
    %v1695 = vadd.f32 %v284, %v865
    %v1696 = vadd.f32 %v285, %v1312
    %v1697 = vadd.f32 %v286, %v1314
    %v1698 = vadd.f32 %v287, %v869
    %v1699 = vadd.f32 %v288, %v871
    %v1700 = vadd.f32 %v289, %v1318
    %v1701 = vadd.f32 %v290, %v1320
    %v1702 = vadd.f32 %v291, %v875
    %v1703 = vadd.f32 %v292, %v877
    %v1704 = vadd.f32 %v293, %v1324
    %v1705 = vadd.f32 %v294, %v1326
    %v1706 = vadd.f32 %v295, %v881
    %v1707 = vadd.f32 %v296, %v883
    %v1708 = vadd.f32 %v297, %v1330
    %v1709 = vadd.f32 %v298, %v1332
    %v1710 = vadd.f32 %v299, %v887
    %v1711 = vadd.f32 %v300, %v889
    %v1712 = vadd.f32 %v301, %v1336
    %v1713 = vadd.f32 %v302, %v1338
    %v1714 = vadd.f32 %v303, %v893
    %v1715 = vadd.f32 %v304, %v895
    %v1716 = vadd.f32 %v305, %v1342
    %v1717 = vadd.f32 %v306, %v1344
    %v1718 = vadd.f32 %v307, %v899
    %v1719 = vadd.f32 %v308, %v901
    %v1720 = vadd.f32 %v309, %v1348
    %v1721 = vadd.f32 %v310, %v1350
    %v1722 = vadd.f32 %v311, %v905
    %v1723 = vadd.f32 %v312, %v907
    %v1724 = vadd.f32 %v313, %v1354
    %v1725 = vadd.f32 %v314, %v1356
    %v1726 = vadd.f32 %v315, %v911
    %v1727 = vadd.f32 %v316, %v913
    %v1728 = vadd.f32 %v317, %v1360
    %v1729 = vadd.f32 %v318, %v1362
    %v1730 = vadd.f32 %v319, %v917
    %v1731 = vadd.f32 %v320, %v919
    %v1732 = vadd.f32 %v321, %v1366
    %v1733 = vadd.f32 %v322, %v1368
    %v1734 = vadd.f32 %v323, %v923
    %v1735 = vadd.f32 %v324, %v925
    %v1736 = vadd.f32 %v325, %v1372
    %v1737 = vadd.f32 %v326, %v1374
    %v1738 = vadd.f32 %v327, %v929
    %v1739 = vadd.f32 %v328, %v931
    %v1740 = vadd.f32 %v329, %v1378
    %v1741 = vadd.f32 %v330, %v1380
    %v1742 = vadd.f32 %v331, %v935
    %v1743 = vadd.f32 %v332, %v937
    %v1744 = vadd.f32 %v333, %v1384
    %v1745 = vadd.f32 %v334, %v1386
    %v1746 = vadd.f32 %v335, %v941
    %v1747 = vadd.f32 %v336, %v943
    %v1748 = vadd.f32 %v337, %v1390
    %v1749 = vadd.f32 %v338, %v1392
    %v1750 = vadd.f32 %v339, %v947
    %v1751 = vadd.f32 %v340, %v949
    %v1752 = vadd.f32 %v341, %v1396
    %v1753 = vadd.f32 %v342, %v1398
    %v1754 = vadd.f32 %v343, %v953
    %v1755 = vadd.f32 %v344, %v955
    %v1756 = vadd.f32 %v345, %v1402
    %v1757 = vadd.f32 %v346, %v1404
    %v1758 = vadd.f32 %v347, %v959
    %v1759 = vadd.f32 %v348, %v961
    %v1760 = vadd.f32 %v349, %v1408
    %v1761 = vadd.f32 %v350, %v1410
    %v1762 = vadd.f32 %v351, %v965
    %v1763 = vadd.f32 %v352, %v967
    %v1764 = vadd.f32 %v353, %v1414
    %v1765 = vadd.f32 %v354, %v1416
    %v1766 = vadd.f32 %v355, %v971
    %v1767 = vadd.f32 %v356, %v973
    %v1768 = vadd.f32 %v357, %v1420
    %v1769 = vadd.f32 %v358, %v1422
    %v1770 = vadd.f32 %v359, %v977
    %v1771 = vadd.f32 %v360, %v979
    %v1772 = vadd.f32 %v361, %v1426
    %v1773 = vadd.f32 %v362, %v1428
    %v1774 = vadd.f32 %v363, %v983
    %v1775 = vadd.f32 %v364, %v985
    %v1776 = vadd.f32 %v365, %v1432
    %v1777 = vadd.f32 %v366, %v1434
    %v1778 = vadd.f32 %v367, %v989
    %v1779 = vadd.f32 %v368, %v991
    %v1780 = vadd.f32 %v369, %v1438
    %v1781 = vadd.f32 %v370, %v1440
    %v1782 = vadd.f32 %v371, %v995
    %v1783 = vadd.f32 %v372, %v997
    %v1784 = vadd.f32 %v373, %v1444
    %v1785 = vadd.f32 %v374, %v1446
    %v1786 = vadd.f32 %v375, %v1001
    %v1787 = vadd.f32 %v376, %v1003
    %v1788 = vadd.f32 %v377, %v1450
    %v1789 = vadd.f32 %v378, %v1452
    %v1790 = vadd.f32 %v379, %v1007
    %v1791 = vadd.f32 %v380, %v1009
    %v1792 = vadd.f32 %v381, %v1456
    %v1793 = vadd.f32 %v382, %v1458
    %v1794 = vadd.f32 %v383, %v1013
    %v1795 = vadd.f32 %v384, %v1015
    %v1796 = vadd.f32 %v385, %v1462
    %v1797 = vadd.f32 %v386, %v1464
    %v1798 = vadd.f32 %v387, %v1019
    %v1799 = vadd.f32 %v388, %v1021
    %v1800 = vadd.f32 %v389, %v1468
    %v1801 = vadd.f32 %v390, %v1470
    %v1802 = vadd.f32 %v391, %v1025
    %v1803 = vadd.f32 %v392, %v1027
    %v1804 = vadd.f32 %v393, %v1474
    %v1805 = vadd.f32 %v394, %v1476
    %v1806 = vadd.f32 %v395, %v1031
    %v1807 = vadd.f32 %v396, %v1033
    %v1808 = vadd.f32 %v397, %v1480
    %v1809 = vadd.f32 %v398, %v1482
    %v1810 = vadd.f32 %v399, %v1037
    %v1811 = vadd.f32 %v400, %v1039
    %v1812 = vadd.f32 %v401, %v1486
    %v1813 = vadd.f32 %v402, %v1488
    %v1814 = vadd.f32 %v403, %v1043
    %v1815 = vadd.f32 %v404, %v1045
    %v1816 = vadd.f32 %v405, %v1492
    %v1817 = vadd.f32 %v406, %v1494
    %v1818 = vadd.f32 %v407, %v1049
    %v1819 = vadd.f32 %v408, %v1051
    %v1820 = vadd.f32 %v409, %v1498
    %v1821 = vadd.f32 %v410, %v1500
    %v1822 = vadd.f32 %v411, %v1055
    %v1823 = vadd.f32 %v412, %v1057
    %v1824 = vadd.f32 %v413, %v1504
    %v1825 = vadd.f32 %v414, %v1506
    %v1826 = vadd.f32 %v415, %v1061
    %v1827 = vadd.f32 %v416, %v1063
    %v1828 = vadd.f32 %v417, %v1510
    %v1829 = vadd.f32 %v418, %v1512
    %v1830 = vadd.f32 %v419, %v1067
    %v1831 = vadd.f32 %v420, %v1069
    %v1832 = vadd.f32 %v421, %v1516
    %v1833 = vadd.f32 %v422, %v1518
    %v1834 = vadd.f32 %v423, %v1073
    %v1835 = vadd.f32 %v424, %v1075
    %v1836 = vadd.f32 %v425, %v1522
    %v1837 = vadd.f32 %v426, %v1524
    %v1838 = vadd.f32 %v427, %v1079
    %v1839 = vadd.f32 %v428, %v1081
    %v1840 = vadd.f32 %v429, %v1528
    %v1841 = vadd.f32 %v430, %v1530
    %v1842 = vadd.f32 %v431, %v1085
    %v1843 = vadd.f32 %v432, %v1087
    %v1844 = vadd.f32 %v433, %v1534
    %v1845 = vadd.f32 %v434, %v1536
    %v1846 = vadd.f32 %v435, %v1091
    %v1847 = vadd.f32 %v436, %v1093
    %v1848 = vadd.f32 %v437, %v1540
    %v1849 = vadd.f32 %v438, %v1542
    %v1850 = vadd.f32 %v439, %v1097
    %v1851 = vadd.f32 %v440, %v1099
    %v1852 = vadd.f32 %v441, %v1546
    %v1853 = vadd.f32 %v442, %v1548
    %v1854 = vadd.f32 %v443, %v1103
    %v1855 = vadd.f32 %v444, %v1105
    %v1856 = vadd.f32 %v445, %v1552
    %v1857 = vadd.f32 %v446, %v1554
    %v1858 = vadd.f32 %v447, %v1109
    %v1859 = vadd.f32 %v448, %v1111
    %v1860 = vadd.f32 %v449, %v1558
    %v1861 = vadd.f32 %v450, %v1560
    %v1862 = vadd.f32 %v451, %v1115
    %v1863 = vadd.f32 %v452, %v1117
    %v1864 = vadd.f32 %v453, %v1564
    %v1865 = vadd.f32 %v454, %v1566
    %v1866 = vadd.f32 %v455, %v1121
    %v1867 = vadd.f32 %v456, %v1123
    %v1868 = vadd.f32 %v457, %v1570
    %v1869 = vadd.f32 %v458, %v1572
    %v1870 = vadd.f32 %v459, %v1127
    %v1871 = vadd.f32 %v460, %v1129
    %v1872 = vadd.f32 %v461, %v1576
    %v1873 = vadd.f32 %v462, %v1578
    %v1874 = vadd.f32 %v463, %v1133
    %v1875 = vadd.f32 %v464, %v1135
    %v1876 = vadd.f32 %v465, %v1582
    %v1877 = vadd.f32 %v466, %v1584
    %v1878 = vadd.f32 %v467, %v1139
    %v1879 = vadd.f32 %v468, %v1141
    %v1880 = vadd.f32 %v469, %v1588
    %v1881 = vadd.f32 %v470, %v1590
    %v1882 = vadd.f32 %v471, %v1145
    %v1883 = vadd.f32 %v472, %v1147
    %v1884 = vadd.f32 %v473, %v1594
    %v1885 = vadd.f32 %v474, %v1596
    %v1886 = vadd.f32 %v475, %v1151
    %v1887 = vadd.f32 %v476, %v1153
    %v1888 = vadd.f32 %v477, %v1600
    %v1889 = vadd.f32 %v478, %v1602
    %v1890 = vadd.f32 %v479, %v1157
    %v1891 = vadd.f32 %v480, %v1159
    %v1892 = vadd.f32 %v481, %v1606
    %v1893 = vadd.f32 %v482, %v1608
    %v1894 = vadd.f32 %v483, %v1163
    %v1895 = vadd.f32 %v484, %v1165
    %v1896 = vadd.f32 %v485, %v1612
    %v1897 = vadd.f32 %v486, %v1614
    %v1898 = vadd.f32 %v487, %v1169
    %v1899 = vadd.f32 %v488, %v1171
    %v1900 = vadd.f32 %v489, %v1618
    %v1901 = vadd.f32 %v490, %v1620
    %v1902 = vadd.f32 %v491, %v1175
    %v1903 = vadd.f32 %v492, %v1177
    %v1904 = vadd.f32 %v493, %v1624
    %v1905 = vadd.f32 %v494, %v1626
    %v1906 = vadd.f32 %v495, %v1181
    %v1907 = vadd.f32 %v496, %v1183
    %v1908 = vadd.f32 %v497, %v1630
    %v1909 = vadd.f32 %v498, %v1632
    %v1910 = vadd.f32 %v499, %v1187
    %v1911 = vadd.f32 %v500, %v1189
    %v1912 = vadd.f32 %v501, %v1636
    %v1913 = vadd.f32 %v502, %v1638
    %v1914 = vadd.f32 %v503, %v1193
    %v1915 = vadd.f32 %v504, %v1195
    %v1916 = vadd.f32 %v505, %v1642
    %v1917 = vadd.f32 %v506, %v1644
    %v1918 = vadd.f32 %v507, %v1199
    %v1919 = vadd.f32 %v508, %v1201
    %v1920 = vadd.f32 %v509, %v1648
    %v1921 = vadd.f32 %v510, %v1650
    %v1922 = vadd.f32 %v511, %v1205
    %v1923 = vadd.f32 %v512, %v1207
    %v1924 = vadd.f32 %v513, %v1654
    %v1925 = vadd.f32 %v514, %v1656
    %v1926 = vadd.f32 %v515, %v1211
    %v1927 = vadd.f32 %v516, %v1213
    %v1928 = vadd.f32 %v517, %v1660
    %v1929 = vadd.f32 %v518, %v1662
    %v1930 = vadd.f32 %v519, %v1217
    %v1931 = vadd.f32 %v520, %v1219
    %v1932 = vadd.f32 %v521, %v1666
    %v1933 = vadd.f32 %v522, %v1668
    %v1934 = vadd.f32 %v523, %v1223
    %v1935 = vadd.f32 %v524, %v1225
    %v1936 = vadd.f32 %v525, %v1672
    %v1937 = vadd.f32 %v526, %v1674
    %v1938 = vadd.f32 %v527, %v1229
    %v1939 = vadd.f32 %v528, %v1231
    %v1940 = vadd.f32 %v529, %v1678
    %v1941 = vadd.f32 %v530, %v1680
    %v1942 = vadd.f32 %v531, %v1235
    %v1943 = vadd.f32 %v532, %v1237
    %v1944 = vadd.f32 %v533, %v1684
    %v1945 = vadd.f32 %v534, %v1686
    %v1946 = vadd.f32 %v535, %v1241
    %v1947 = vadd.f32 %v536, %v1243
    %v1948 = vadd.f32 %v537, %v1690
    %v1949 = vadd.f32 %v538, %v1692
    %1950 = vst [vmem:[#allocation2] sm:$0xff] %v1694
    %1951 = vst [vmem:[#allocation2 + $0x8] sm:$0xff] %v1695
    %1952 = vst [vmem:[#allocation2 + $0x10] sm:$0xff] %v1696
    %1953 = vst [vmem:[#allocation2 + $0x18] sm:$0xff] %v1697
    %1954 = vst [vmem:[#allocation2 + $0x20] sm:$0xff] %v1698
    %1955 = vst [vmem:[#allocation2 + $0x28] sm:$0xff] %v1699
    %1956 = vst [vmem:[#allocation2 + $0x30] sm:$0xff] %v1700
    %1957 = vst [vmem:[#allocation2 + $0x38] sm:$0xff] %v1701
    %1958 = vst [vmem:[#allocation2 + $0x40] sm:$0xff] %v1702
    %1959 = vst [vmem:[#allocation2 + $0x48] sm:$0xff] %v1703
    %1960 = vst [vmem:[#allocation2 + $0x50] sm:$0xff] %v1704
    %1961 = vst [vmem:[#allocation2 + $0x58] sm:$0xff] %v1705
    %1962 = vst [vmem:[#allocation2 + $0x60] sm:$0xff] %v1706
    %1963 = vst [vmem:[#allocation2 + $0x68] sm:$0xff] %v1707
    %1964 = vst [vmem:[#allocation2 + $0x70] sm:$0xff] %v1708
    %1965 = vst [vmem:[#allocation2 + $0x78] sm:$0xff] %v1709
    %1966 = vst [vmem:[#allocation2 + $0x80] sm:$0xff] %v1710
    %1967 = vst [vmem:[#allocation2 + $0x88] sm:$0xff] %v1711
    %1968 = vst [vmem:[#allocation2 + $0x90] sm:$0xff] %v1712
    %1969 = vst [vmem:[#allocation2 + $0x98] sm:$0xff] %v1713
    %1970 = vst [vmem:[#allocation2 + $0xa0] sm:$0xff] %v1714
    %1971 = vst [vmem:[#allocation2 + $0xa8] sm:$0xff] %v1715
    %1972 = vst [vmem:[#allocation2 + $0xb0] sm:$0xff] %v1716
    %1973 = vst [vmem:[#allocation2 + $0xb8] sm:$0xff] %v1717
    %1974 = vst [vmem:[#allocation2 + $0xc0] sm:$0xff] %v1718
    %1975 = vst [vmem:[#allocation2 + $0xc8] sm:$0xff] %v1719
    %1976 = vst [vmem:[#allocation2 + $0xd0] sm:$0xff] %v1720
    %1977 = vst [vmem:[#allocation2 + $0xd8] sm:$0xff] %v1721
    %1978 = vst [vmem:[#allocation2 + $0xe0] sm:$0xff] %v1722
    %1979 = vst [vmem:[#allocation2 + $0xe8] sm:$0xff] %v1723
    %1980 = vst [vmem:[#allocation2 + $0xf0] sm:$0xff] %v1724
    %1981 = vst [vmem:[#allocation2 + $0xf8] sm:$0xff] %v1725
    %1982 = vst [vmem:[#allocation2 + $0x100] sm:$0xff] %v1726
    %1983 = vst [vmem:[#allocation2 + $0x108] sm:$0xff] %v1727
    %1984 = vst [vmem:[#allocation2 + $0x110] sm:$0xff] %v1728
    %1985 = vst [vmem:[#allocation2 + $0x118] sm:$0xff] %v1729
    %1986 = vst [vmem:[#allocation2 + $0x120] sm:$0xff] %v1730
    %1987 = vst [vmem:[#allocation2 + $0x128] sm:$0xff] %v1731
    %1988 = vst [vmem:[#allocation2 + $0x130] sm:$0xff] %v1732
    %1989 = vst [vmem:[#allocation2 + $0x138] sm:$0xff] %v1733
    %1990 = vst [vmem:[#allocation2 + $0x140] sm:$0xff] %v1734
    %1991 = vst [vmem:[#allocation2 + $0x148] sm:$0xff] %v1735
    %1992 = vst [vmem:[#allocation2 + $0x150] sm:$0xff] %v1736
    %1993 = vst [vmem:[#allocation2 + $0x158] sm:$0xff] %v1737
    %1994 = vst [vmem:[#allocation2 + $0x160] sm:$0xff] %v1738
    %1995 = vst [vmem:[#allocation2 + $0x168] sm:$0xff] %v1739
    %1996 = vst [vmem:[#allocation2 + $0x170] sm:$0xff] %v1740
    %1997 = vst [vmem:[#allocation2 + $0x178] sm:$0xff] %v1741
    %1998 = vst [vmem:[#allocation2 + $0x180] sm:$0xff] %v1742
    %1999 = vst [vmem:[#allocation2 + $0x188] sm:$0xff] %v1743
    %2000 = vst [vmem:[#allocation2 + $0x190] sm:$0xff] %v1744
    %2001 = vst [vmem:[#allocation2 + $0x198] sm:$0xff] %v1745
    %2002 = vst [vmem:[#allocation2 + $0x1a0] sm:$0xff] %v1746
    %2003 = vst [vmem:[#allocation2 + $0x1a8] sm:$0xff] %v1747
    %2004 = vst [vmem:[#allocation2 + $0x1b0] sm:$0xff] %v1748
    %2005 = vst [vmem:[#allocation2 + $0x1b8] sm:$0xff] %v1749
    %2006 = vst [vmem:[#allocation2 + $0x1c0] sm:$0xff] %v1750
    %2007 = vst [vmem:[#allocation2 + $0x1c8] sm:$0xff] %v1751
    %2008 = vst [vmem:[#allocation2 + $0x1d0] sm:$0xff] %v1752
    %2009 = vst [vmem:[#allocation2 + $0x1d8] sm:$0xff] %v1753
    %2010 = vst [vmem:[#allocation2 + $0x1e0] sm:$0xff] %v1754
    %2011 = vst [vmem:[#allocation2 + $0x1e8] sm:$0xff] %v1755
    %2012 = vst [vmem:[#allocation2 + $0x1f0] sm:$0xff] %v1756
    %2013 = vst [vmem:[#allocation2 + $0x1f8] sm:$0xff] %v1757
    %2014 = vst [vmem:[#allocation2 + $0x200] sm:$0xff] %v1758
    %2015 = vst [vmem:[#allocation2 + $0x208] sm:$0xff] %v1759
    %2016 = vst [vmem:[#allocation2 + $0x210] sm:$0xff] %v1760
    %2017 = vst [vmem:[#allocation2 + $0x218] sm:$0xff] %v1761
    %2018 = vst [vmem:[#allocation2 + $0x220] sm:$0xff] %v1762
    %2019 = vst [vmem:[#allocation2 + $0x228] sm:$0xff] %v1763
    %2020 = vst [vmem:[#allocation2 + $0x230] sm:$0xff] %v1764
    %2021 = vst [vmem:[#allocation2 + $0x238] sm:$0xff] %v1765
    %2022 = vst [vmem:[#allocation2 + $0x240] sm:$0xff] %v1766
    %2023 = vst [vmem:[#allocation2 + $0x248] sm:$0xff] %v1767
    %2024 = vst [vmem:[#allocation2 + $0x250] sm:$0xff] %v1768
    %2025 = vst [vmem:[#allocation2 + $0x258] sm:$0xff] %v1769
    %2026 = vst [vmem:[#allocation2 + $0x260] sm:$0xff] %v1770
    %2027 = vst [vmem:[#allocation2 + $0x268] sm:$0xff] %v1771
    %2028 = vst [vmem:[#allocation2 + $0x270] sm:$0xff] %v1772
    %2029 = vst [vmem:[#allocation2 + $0x278] sm:$0xff] %v1773
    %2030 = vst [vmem:[#allocation2 + $0x280] sm:$0xff] %v1774
    %2031 = vst [vmem:[#allocation2 + $0x288] sm:$0xff] %v1775
    %2032 = vst [vmem:[#allocation2 + $0x290] sm:$0xff] %v1776
    %2033 = vst [vmem:[#allocation2 + $0x298] sm:$0xff] %v1777
    %2034 = vst [vmem:[#allocation2 + $0x2a0] sm:$0xff] %v1778
    %2035 = vst [vmem:[#allocation2 + $0x2a8] sm:$0xff] %v1779
    %2036 = vst [vmem:[#allocation2 + $0x2b0] sm:$0xff] %v1780
    %2037 = vst [vmem:[#allocation2 + $0x2b8] sm:$0xff] %v1781
    %2038 = vst [vmem:[#allocation2 + $0x2c0] sm:$0xff] %v1782
    %2039 = vst [vmem:[#allocation2 + $0x2c8] sm:$0xff] %v1783
    %2040 = vst [vmem:[#allocation2 + $0x2d0] sm:$0xff] %v1784
    %2041 = vst [vmem:[#allocation2 + $0x2d8] sm:$0xff] %v1785
    %2042 = vst [vmem:[#allocation2 + $0x2e0] sm:$0xff] %v1786
    %2043 = vst [vmem:[#allocation2 + $0x2e8] sm:$0xff] %v1787
    %2044 = vst [vmem:[#allocation2 + $0x2f0] sm:$0xff] %v1788
    %2045 = vst [vmem:[#allocation2 + $0x2f8] sm:$0xff] %v1789
    %2046 = vst [vmem:[#allocation2 + $0x300] sm:$0xff] %v1790
    %2047 = vst [vmem:[#allocation2 + $0x308] sm:$0xff] %v1791
    %2048 = vst [vmem:[#allocation2 + $0x310] sm:$0xff] %v1792
    %2049 = vst [vmem:[#allocation2 + $0x318] sm:$0xff] %v1793
    %2050 = vst [vmem:[#allocation2 + $0x320] sm:$0xff] %v1794
    %2051 = vst [vmem:[#allocation2 + $0x328] sm:$0xff] %v1795
    %2052 = vst [vmem:[#allocation2 + $0x330] sm:$0xff] %v1796
    %2053 = vst [vmem:[#allocation2 + $0x338] sm:$0xff] %v1797
    %2054 = vst [vmem:[#allocation2 + $0x340] sm:$0xff] %v1798
    %2055 = vst [vmem:[#allocation2 + $0x348] sm:$0xff] %v1799
    %2056 = vst [vmem:[#allocation2 + $0x350] sm:$0xff] %v1800
    %2057 = vst [vmem:[#allocation2 + $0x358] sm:$0xff] %v1801
    %2058 = vst [vmem:[#allocation2 + $0x360] sm:$0xff] %v1802
    %2059 = vst [vmem:[#allocation2 + $0x368] sm:$0xff] %v1803
    %2060 = vst [vmem:[#allocation2 + $0x370] sm:$0xff] %v1804
    %2061 = vst [vmem:[#allocation2 + $0x378] sm:$0xff] %v1805
    %2062 = vst [vmem:[#allocation2 + $0x380] sm:$0xff] %v1806
    %2063 = vst [vmem:[#allocation2 + $0x388] sm:$0xff] %v1807
    %2064 = vst [vmem:[#allocation2 + $0x390] sm:$0xff] %v1808
    %2065 = vst [vmem:[#allocation2 + $0x398] sm:$0xff] %v1809
    %2066 = vst [vmem:[#allocation2 + $0x3a0] sm:$0xff] %v1810
    %2067 = vst [vmem:[#allocation2 + $0x3a8] sm:$0xff] %v1811
    %2068 = vst [vmem:[#allocation2 + $0x3b0] sm:$0xff] %v1812
    %2069 = vst [vmem:[#allocation2 + $0x3b8] sm:$0xff] %v1813
    %2070 = vst [vmem:[#allocation2 + $0x3c0] sm:$0xff] %v1814
    %2071 = vst [vmem:[#allocation2 + $0x3c8] sm:$0xff] %v1815
    %2072 = vst [vmem:[#allocation2 + $0x3d0] sm:$0xff] %v1816
    %2073 = vst [vmem:[#allocation2 + $0x3d8] sm:$0xff] %v1817
    %2074 = vst [vmem:[#allocation2 + $0x3e0] sm:$0xff] %v1818
    %2075 = vst [vmem:[#allocation2 + $0x3e8] sm:$0xff] %v1819
    %2076 = vst [vmem:[#allocation2 + $0x3f0] sm:$0xff] %v1820
    %2077 = vst [vmem:[#allocation2 + $0x3f8] sm:$0xff] %v1821
    %2078 = vst [vmem:[#allocation2 + $0x400] sm:$0xff] %v1822
    %2079 = vst [vmem:[#allocation2 + $0x408] sm:$0xff] %v1823
    %2080 = vst [vmem:[#allocation2 + $0x410] sm:$0xff] %v1824
    %2081 = vst [vmem:[#allocation2 + $0x418] sm:$0xff] %v1825
    %2082 = vst [vmem:[#allocation2 + $0x420] sm:$0xff] %v1826
    %2083 = vst [vmem:[#allocation2 + $0x428] sm:$0xff] %v1827
    %2084 = vst [vmem:[#allocation2 + $0x430] sm:$0xff] %v1828
    %2085 = vst [vmem:[#allocation2 + $0x438] sm:$0xff] %v1829
    %2086 = vst [vmem:[#allocation2 + $0x440] sm:$0xff] %v1830
    %2087 = vst [vmem:[#allocation2 + $0x448] sm:$0xff] %v1831
    %2088 = vst [vmem:[#allocation2 + $0x450] sm:$0xff] %v1832
    %2089 = vst [vmem:[#allocation2 + $0x458] sm:$0xff] %v1833
    %2090 = vst [vmem:[#allocation2 + $0x460] sm:$0xff] %v1834
    %2091 = vst [vmem:[#allocation2 + $0x468] sm:$0xff] %v1835
    %2092 = vst [vmem:[#allocation2 + $0x470] sm:$0xff] %v1836
    %2093 = vst [vmem:[#allocation2 + $0x478] sm:$0xff] %v1837
    %2094 = vst [vmem:[#allocation2 + $0x480] sm:$0xff] %v1838
    %2095 = vst [vmem:[#allocation2 + $0x488] sm:$0xff] %v1839
    %2096 = vst [vmem:[#allocation2 + $0x490] sm:$0xff] %v1840
    %2097 = vst [vmem:[#allocation2 + $0x498] sm:$0xff] %v1841
    %2098 = vst [vmem:[#allocation2 + $0x4a0] sm:$0xff] %v1842
    %2099 = vst [vmem:[#allocation2 + $0x4a8] sm:$0xff] %v1843
    %2100 = vst [vmem:[#allocation2 + $0x4b0] sm:$0xff] %v1844
    %2101 = vst [vmem:[#allocation2 + $0x4b8] sm:$0xff] %v1845
    %2102 = vst [vmem:[#allocation2 + $0x4c0] sm:$0xff] %v1846
    %2103 = vst [vmem:[#allocation2 + $0x4c8] sm:$0xff] %v1847
    %2104 = vst [vmem:[#allocation2 + $0x4d0] sm:$0xff] %v1848
    %2105 = vst [vmem:[#allocation2 + $0x4d8] sm:$0xff] %v1849
    %2106 = vst [vmem:[#allocation2 + $0x4e0] sm:$0xff] %v1850
    %2107 = vst [vmem:[#allocation2 + $0x4e8] sm:$0xff] %v1851
    %2108 = vst [vmem:[#allocation2 + $0x4f0] sm:$0xff] %v1852
    %2109 = vst [vmem:[#allocation2 + $0x4f8] sm:$0xff] %v1853
    %2110 = vst [vmem:[#allocation2 + $0x500] sm:$0xff] %v1854
    %2111 = vst [vmem:[#allocation2 + $0x508] sm:$0xff] %v1855
    %2112 = vst [vmem:[#allocation2 + $0x510] sm:$0xff] %v1856
    %2113 = vst [vmem:[#allocation2 + $0x518] sm:$0xff] %v1857
    %2114 = vst [vmem:[#allocation2 + $0x520] sm:$0xff] %v1858
    %2115 = vst [vmem:[#allocation2 + $0x528] sm:$0xff] %v1859
    %2116 = vst [vmem:[#allocation2 + $0x530] sm:$0xff] %v1860
    %2117 = vst [vmem:[#allocation2 + $0x538] sm:$0xff] %v1861
    %2118 = vst [vmem:[#allocation2 + $0x540] sm:$0xff] %v1862
    %2119 = vst [vmem:[#allocation2 + $0x548] sm:$0xff] %v1863
    %2120 = vst [vmem:[#allocation2 + $0x550] sm:$0xff] %v1864
    %2121 = vst [vmem:[#allocation2 + $0x558] sm:$0xff] %v1865
    %2122 = vst [vmem:[#allocation2 + $0x560] sm:$0xff] %v1866
    %2123 = vst [vmem:[#allocation2 + $0x568] sm:$0xff] %v1867
    %2124 = vst [vmem:[#allocation2 + $0x570] sm:$0xff] %v1868
    %2125 = vst [vmem:[#allocation2 + $0x578] sm:$0xff] %v1869
    %2126 = vst [vmem:[#allocation2 + $0x580] sm:$0xff] %v1870
    %2127 = vst [vmem:[#allocation2 + $0x588] sm:$0xff] %v1871
    %2128 = vst [vmem:[#allocation2 + $0x590] sm:$0xff] %v1872
    %2129 = vst [vmem:[#allocation2 + $0x598] sm:$0xff] %v1873
    %2130 = vst [vmem:[#allocation2 + $0x5a0] sm:$0xff] %v1874
    %2131 = vst [vmem:[#allocation2 + $0x5a8] sm:$0xff] %v1875
    %2132 = vst [vmem:[#allocation2 + $0x5b0] sm:$0xff] %v1876
    %2133 = vst [vmem:[#allocation2 + $0x5b8] sm:$0xff] %v1877
    %2134 = vst [vmem:[#allocation2 + $0x5c0] sm:$0xff] %v1878
    %2135 = vst [vmem:[#allocation2 + $0x5c8] sm:$0xff] %v1879
    %2136 = vst [vmem:[#allocation2 + $0x5d0] sm:$0xff] %v1880
    %2137 = vst [vmem:[#allocation2 + $0x5d8] sm:$0xff] %v1881
    %2138 = vst [vmem:[#allocation2 + $0x5e0] sm:$0xff] %v1882
    %2139 = vst [vmem:[#allocation2 + $0x5e8] sm:$0xff] %v1883
    %2140 = vst [vmem:[#allocation2 + $0x5f0] sm:$0xff] %v1884
    %2141 = vst [vmem:[#allocation2 + $0x5f8] sm:$0xff] %v1885
    %2142 = vst [vmem:[#allocation2 + $0x600] sm:$0xff] %v1886
    %2143 = vst [vmem:[#allocation2 + $0x608] sm:$0xff] %v1887
    %2144 = vst [vmem:[#allocation2 + $0x610] sm:$0xff] %v1888
    %2145 = vst [vmem:[#allocation2 + $0x618] sm:$0xff] %v1889
    %2146 = vst [vmem:[#allocation2 + $0x620] sm:$0xff] %v1890
    %2147 = vst [vmem:[#allocation2 + $0x628] sm:$0xff] %v1891
    %2148 = vst [vmem:[#allocation2 + $0x630] sm:$0xff] %v1892
    %2149 = vst [vmem:[#allocation2 + $0x638] sm:$0xff] %v1893
    %2150 = vst [vmem:[#allocation2 + $0x640] sm:$0xff] %v1894
    %2151 = vst [vmem:[#allocation2 + $0x648] sm:$0xff] %v1895
    %2152 = vst [vmem:[#allocation2 + $0x650] sm:$0xff] %v1896
    %2153 = vst [vmem:[#allocation2 + $0x658] sm:$0xff] %v1897
    %2154 = vst [vmem:[#allocation2 + $0x660] sm:$0xff] %v1898
    %2155 = vst [vmem:[#allocation2 + $0x668] sm:$0xff] %v1899
    %2156 = vst [vmem:[#allocation2 + $0x670] sm:$0xff] %v1900
    %2157 = vst [vmem:[#allocation2 + $0x678] sm:$0xff] %v1901
    %2158 = vst [vmem:[#allocation2 + $0x680] sm:$0xff] %v1902
    %2159 = vst [vmem:[#allocation2 + $0x688] sm:$0xff] %v1903
    %2160 = vst [vmem:[#allocation2 + $0x690] sm:$0xff] %v1904
    %2161 = vst [vmem:[#allocation2 + $0x698] sm:$0xff] %v1905
    %2162 = vst [vmem:[#allocation2 + $0x6a0] sm:$0xff] %v1906
    %2163 = vst [vmem:[#allocation2 + $0x6a8] sm:$0xff] %v1907
    %2164 = vst [vmem:[#allocation2 + $0x6b0] sm:$0xff] %v1908
    %2165 = vst [vmem:[#allocation2 + $0x6b8] sm:$0xff] %v1909
    %2166 = vst [vmem:[#allocation2 + $0x6c0] sm:$0xff] %v1910
    %2167 = vst [vmem:[#allocation2 + $0x6c8] sm:$0xff] %v1911
    %2168 = vst [vmem:[#allocation2 + $0x6d0] sm:$0xff] %v1912
    %2169 = vst [vmem:[#allocation2 + $0x6d8] sm:$0xff] %v1913
    %2170 = vst [vmem:[#allocation2 + $0x6e0] sm:$0xff] %v1914
    %2171 = vst [vmem:[#allocation2 + $0x6e8] sm:$0xff] %v1915
    %2172 = vst [vmem:[#allocation2 + $0x6f0] sm:$0xff] %v1916
    %2173 = vst [vmem:[#allocation2 + $0x6f8] sm:$0xff] %v1917
    %2174 = vst [vmem:[#allocation2 + $0x700] sm:$0xff] %v1918
    %2175 = vst [vmem:[#allocation2 + $0x708] sm:$0xff] %v1919
    %2176 = vst [vmem:[#allocation2 + $0x710] sm:$0xff] %v1920
    %2177 = vst [vmem:[#allocation2 + $0x718] sm:$0xff] %v1921
    %2178 = vst [vmem:[#allocation2 + $0x720] sm:$0xff] %v1922
    %2179 = vst [vmem:[#allocation2 + $0x728] sm:$0xff] %v1923
    %2180 = vst [vmem:[#allocation2 + $0x730] sm:$0xff] %v1924
    %2181 = vst [vmem:[#allocation2 + $0x738] sm:$0xff] %v1925
    %2182 = vst [vmem:[#allocation2 + $0x740] sm:$0xff] %v1926
    %2183 = vst [vmem:[#allocation2 + $0x748] sm:$0xff] %v1927
    %2184 = vst [vmem:[#allocation2 + $0x750] sm:$0xff] %v1928
    %2185 = vst [vmem:[#allocation2 + $0x758] sm:$0xff] %v1929
    %2186 = vst [vmem:[#allocation2 + $0x760] sm:$0xff] %v1930
    %2187 = vst [vmem:[#allocation2 + $0x768] sm:$0xff] %v1931
    %2188 = vst [vmem:[#allocation2 + $0x770] sm:$0xff] %v1932
    %2189 = vst [vmem:[#allocation2 + $0x778] sm:$0xff] %v1933
    %2190 = vst [vmem:[#allocation2 + $0x780] sm:$0xff] %v1934
    %2191 = vst [vmem:[#allocation2 + $0x788] sm:$0xff] %v1935
    %2192 = vst [vmem:[#allocation2 + $0x790] sm:$0xff] %v1936
    %2193 = vst [vmem:[#allocation2 + $0x798] sm:$0xff] %v1937
    %2194 = vst [vmem:[#allocation2 + $0x7a0] sm:$0xff] %v1938
    %2195 = vst [vmem:[#allocation2 + $0x7a8] sm:$0xff] %v1939
    %2196 = vst [vmem:[#allocation2 + $0x7b0] sm:$0xff] %v1940
    %2197 = vst [vmem:[#allocation2 + $0x7b8] sm:$0xff] %v1941
    %2198 = vst [vmem:[#allocation2 + $0x7c0] sm:$0xff] %v1942
    %2199 = vst [vmem:[#allocation2 + $0x7c8] sm:$0xff] %v1943
    %2200 = vst [vmem:[#allocation2 + $0x7d0] sm:$0xff] %v1944
    %2201 = vst [vmem:[#allocation2 + $0x7d8] sm:$0xff] %v1945
    %2202 = vst [vmem:[#allocation2 + $0x7e0] sm:$0xff] %v1946
    %2203 = vst [vmem:[#allocation2 + $0x7e8] sm:$0xff] %v1947
    %2204 = vst [vmem:[#allocation2 + $0x7f0] sm:$0xff] %v1948
    %2205 = vst [vmem:[#allocation2 + $0x7f8] sm:$0xff] %v1949
    // Predicated region
    $region18: #{tpu_custom_call.1} parent=1 // pred_check
      %p2206 = pneg %p15
    $region19: #{tpu_custom_call.1} parent=1 // pred_check_branch
      %2208 = sbr.rel (%p2206) target = $region21
    $region20: #{tpu_custom_call.1} parent=1 // pred_region
      %v2209 = vld [vmem:[#allocation2] sm:$0xff]
      %v2210 = vld [vmem:[#allocation2 + $0x8] sm:$0xff]
      %v2211 = vld [vmem:[#allocation2 + $0x10] sm:$0xff]
      %v2212 = vld [vmem:[#allocation2 + $0x18] sm:$0xff]
      %v2213 = vld [vmem:[#allocation2 + $0x20] sm:$0xff]
      %v2214 = vld [vmem:[#allocation2 + $0x28] sm:$0xff]
      %v2215 = vld [vmem:[#allocation2 + $0x30] sm:$0xff]
      %v2216 = vld [vmem:[#allocation2 + $0x38] sm:$0xff]
      %v2217 = vld [vmem:[#allocation2 + $0x40] sm:$0xff]
      %v2218 = vld [vmem:[#allocation2 + $0x48] sm:$0xff]
      %v2219 = vld [vmem:[#allocation2 + $0x50] sm:$0xff]
      %v2220 = vld [vmem:[#allocation2 + $0x58] sm:$0xff]
      %v2221 = vld [vmem:[#allocation2 + $0x60] sm:$0xff]
      %v2222 = vld [vmem:[#allocation2 + $0x68] sm:$0xff]
      %v2223 = vld [vmem:[#allocation2 + $0x70] sm:$0xff]
      %v2224 = vld [vmem:[#allocation2 + $0x78] sm:$0xff]
      %v2225 = vld [vmem:[#allocation2 + $0x80] sm:$0xff]
      %v2226 = vld [vmem:[#allocation2 + $0x88] sm:$0xff]
      %v2227 = vld [vmem:[#allocation2 + $0x90] sm:$0xff]
      %v2228 = vld [vmem:[#allocation2 + $0x98] sm:$0xff]
      %v2229 = vld [vmem:[#allocation2 + $0xa0] sm:$0xff]
      %v2230 = vld [vmem:[#allocation2 + $0xa8] sm:$0xff]
      %v2231 = vld [vmem:[#allocation2 + $0xb0] sm:$0xff]
      %v2232 = vld [vmem:[#allocation2 + $0xb8] sm:$0xff]
      %v2233 = vld [vmem:[#allocation2 + $0xc0] sm:$0xff]
      %v2234 = vld [vmem:[#allocation2 + $0xc8] sm:$0xff]
      %v2235 = vld [vmem:[#allocation2 + $0xd0] sm:$0xff]
      %v2236 = vld [vmem:[#allocation2 + $0xd8] sm:$0xff]
      %v2237 = vld [vmem:[#allocation2 + $0xe0] sm:$0xff]
      %v2238 = vld [vmem:[#allocation2 + $0xe8] sm:$0xff]
      %v2239 = vld [vmem:[#allocation2 + $0xf0] sm:$0xff]
      %v2240 = vld [vmem:[#allocation2 + $0xf8] sm:$0xff]
      %v2241 = vld [vmem:[#allocation2 + $0x100] sm:$0xff]
      %v2242 = vld [vmem:[#allocation2 + $0x108] sm:$0xff]
      %v2243 = vld [vmem:[#allocation2 + $0x110] sm:$0xff]
      %v2244 = vld [vmem:[#allocation2 + $0x118] sm:$0xff]
      %v2245 = vld [vmem:[#allocation2 + $0x120] sm:$0xff]
      %v2246 = vld [vmem:[#allocation2 + $0x128] sm:$0xff]
      %v2247 = vld [vmem:[#allocation2 + $0x130] sm:$0xff]
      %v2248 = vld [vmem:[#allocation2 + $0x138] sm:$0xff]
      %v2249 = vld [vmem:[#allocation2 + $0x140] sm:$0xff]
      %v2250 = vld [vmem:[#allocation2 + $0x148] sm:$0xff]
      %v2251 = vld [vmem:[#allocation2 + $0x150] sm:$0xff]
      %v2252 = vld [vmem:[#allocation2 + $0x158] sm:$0xff]
      %v2253 = vld [vmem:[#allocation2 + $0x160] sm:$0xff]
      %v2254 = vld [vmem:[#allocation2 + $0x168] sm:$0xff]
      %v2255 = vld [vmem:[#allocation2 + $0x170] sm:$0xff]
      %v2256 = vld [vmem:[#allocation2 + $0x178] sm:$0xff]
      %v2257 = vld [vmem:[#allocation2 + $0x180] sm:$0xff]
      %v2258 = vld [vmem:[#allocation2 + $0x188] sm:$0xff]
      %v2259 = vld [vmem:[#allocation2 + $0x190] sm:$0xff]
      %v2260 = vld [vmem:[#allocation2 + $0x198] sm:$0xff]
      %v2261 = vld [vmem:[#allocation2 + $0x1a0] sm:$0xff]
      %v2262 = vld [vmem:[#allocation2 + $0x1a8] sm:$0xff]
      %v2263 = vld [vmem:[#allocation2 + $0x1b0] sm:$0xff]
      %v2264 = vld [vmem:[#allocation2 + $0x1b8] sm:$0xff]
      %v2265 = vld [vmem:[#allocation2 + $0x1c0] sm:$0xff]
      %v2266 = vld [vmem:[#allocation2 + $0x1c8] sm:$0xff]
      %v2267 = vld [vmem:[#allocation2 + $0x1d0] sm:$0xff]
      %v2268 = vld [vmem:[#allocation2 + $0x1d8] sm:$0xff]
      %v2269 = vld [vmem:[#allocation2 + $0x1e0] sm:$0xff]
      %v2270 = vld [vmem:[#allocation2 + $0x1e8] sm:$0xff]
      %v2271 = vld [vmem:[#allocation2 + $0x1f0] sm:$0xff]
      %v2272 = vld [vmem:[#allocation2 + $0x1f8] sm:$0xff]
      %v2273 = vld [vmem:[#allocation2 + $0x200] sm:$0xff]
      %v2274 = vld [vmem:[#allocation2 + $0x208] sm:$0xff]
      %v2275 = vld [vmem:[#allocation2 + $0x210] sm:$0xff]
      %v2276 = vld [vmem:[#allocation2 + $0x218] sm:$0xff]
      %v2277 = vld [vmem:[#allocation2 + $0x220] sm:$0xff]
      %v2278 = vld [vmem:[#allocation2 + $0x228] sm:$0xff]
      %v2279 = vld [vmem:[#allocation2 + $0x230] sm:$0xff]
      %v2280 = vld [vmem:[#allocation2 + $0x238] sm:$0xff]
      %v2281 = vld [vmem:[#allocation2 + $0x240] sm:$0xff]
      %v2282 = vld [vmem:[#allocation2 + $0x248] sm:$0xff]
      %v2283 = vld [vmem:[#allocation2 + $0x250] sm:$0xff]
      %v2284 = vld [vmem:[#allocation2 + $0x258] sm:$0xff]
      %v2285 = vld [vmem:[#allocation2 + $0x260] sm:$0xff]
      %v2286 = vld [vmem:[#allocation2 + $0x268] sm:$0xff]
      %v2287 = vld [vmem:[#allocation2 + $0x270] sm:$0xff]
      %v2288 = vld [vmem:[#allocation2 + $0x278] sm:$0xff]
      %v2289 = vld [vmem:[#allocation2 + $0x280] sm:$0xff]
      %v2290 = vld [vmem:[#allocation2 + $0x288] sm:$0xff]
      %v2291 = vld [vmem:[#allocation2 + $0x290] sm:$0xff]
      %v2292 = vld [vmem:[#allocation2 + $0x298] sm:$0xff]
      %v2293 = vld [vmem:[#allocation2 + $0x2a0] sm:$0xff]
      %v2294 = vld [vmem:[#allocation2 + $0x2a8] sm:$0xff]
      %v2295 = vld [vmem:[#allocation2 + $0x2b0] sm:$0xff]
      %v2296 = vld [vmem:[#allocation2 + $0x2b8] sm:$0xff]
      %v2297 = vld [vmem:[#allocation2 + $0x2c0] sm:$0xff]
      %v2298 = vld [vmem:[#allocation2 + $0x2c8] sm:$0xff]
      %v2299 = vld [vmem:[#allocation2 + $0x2d0] sm:$0xff]
      %v2300 = vld [vmem:[#allocation2 + $0x2d8] sm:$0xff]
      %v2301 = vld [vmem:[#allocation2 + $0x2e0] sm:$0xff]
      %v2302 = vld [vmem:[#allocation2 + $0x2e8] sm:$0xff]
      %v2303 = vld [vmem:[#allocation2 + $0x2f0] sm:$0xff]
      %v2304 = vld [vmem:[#allocation2 + $0x2f8] sm:$0xff]
      %v2305 = vld [vmem:[#allocation2 + $0x300] sm:$0xff]
      %v2306 = vld [vmem:[#allocation2 + $0x308] sm:$0xff]
      %v2307 = vld [vmem:[#allocation2 + $0x310] sm:$0xff]
      %v2308 = vld [vmem:[#allocation2 + $0x318] sm:$0xff]
      %v2309 = vld [vmem:[#allocation2 + $0x320] sm:$0xff]
      %v2310 = vld [vmem:[#allocation2 + $0x328] sm:$0xff]
      %v2311 = vld [vmem:[#allocation2 + $0x330] sm:$0xff]
      %v2312 = vld [vmem:[#allocation2 + $0x338] sm:$0xff]
      %v2313 = vld [vmem:[#allocation2 + $0x340] sm:$0xff]
      %v2314 = vld [vmem:[#allocation2 + $0x348] sm:$0xff]
      %v2315 = vld [vmem:[#allocation2 + $0x350] sm:$0xff]
      %v2316 = vld [vmem:[#allocation2 + $0x358] sm:$0xff]
      %v2317 = vld [vmem:[#allocation2 + $0x360] sm:$0xff]
      %v2318 = vld [vmem:[#allocation2 + $0x368] sm:$0xff]
      %v2319 = vld [vmem:[#allocation2 + $0x370] sm:$0xff]
      %v2320 = vld [vmem:[#allocation2 + $0x378] sm:$0xff]
      %v2321 = vld [vmem:[#allocation2 + $0x380] sm:$0xff]
      %v2322 = vld [vmem:[#allocation2 + $0x388] sm:$0xff]
      %v2323 = vld [vmem:[#allocation2 + $0x390] sm:$0xff]
      %v2324 = vld [vmem:[#allocation2 + $0x398] sm:$0xff]
      %v2325 = vld [vmem:[#allocation2 + $0x3a0] sm:$0xff]
      %v2326 = vld [vmem:[#allocation2 + $0x3a8] sm:$0xff]
      %v2327 = vld [vmem:[#allocation2 + $0x3b0] sm:$0xff]
      %v2328 = vld [vmem:[#allocation2 + $0x3b8] sm:$0xff]
      %v2329 = vld [vmem:[#allocation2 + $0x3c0] sm:$0xff]
      %v2330 = vld [vmem:[#allocation2 + $0x3c8] sm:$0xff]
      %v2331 = vld [vmem:[#allocation2 + $0x3d0] sm:$0xff]
      %v2332 = vld [vmem:[#allocation2 + $0x3d8] sm:$0xff]
      %v2333 = vld [vmem:[#allocation2 + $0x3e0] sm:$0xff]
      %v2334 = vld [vmem:[#allocation2 + $0x3e8] sm:$0xff]
      %v2335 = vld [vmem:[#allocation2 + $0x3f0] sm:$0xff]
      %v2336 = vld [vmem:[#allocation2 + $0x3f8] sm:$0xff]
      %v2337 = vld [vmem:[#allocation2 + $0x400] sm:$0xff]
      %v2338 = vld [vmem:[#allocation2 + $0x408] sm:$0xff]
      %v2339 = vld [vmem:[#allocation2 + $0x410] sm:$0xff]
      %v2340 = vld [vmem:[#allocation2 + $0x418] sm:$0xff]
      %v2341 = vld [vmem:[#allocation2 + $0x420] sm:$0xff]
      %v2342 = vld [vmem:[#allocation2 + $0x428] sm:$0xff]
      %v2343 = vld [vmem:[#allocation2 + $0x430] sm:$0xff]
      %v2344 = vld [vmem:[#allocation2 + $0x438] sm:$0xff]
      %v2345 = vld [vmem:[#allocation2 + $0x440] sm:$0xff]
      %v2346 = vld [vmem:[#allocation2 + $0x448] sm:$0xff]
      %v2347 = vld [vmem:[#allocation2 + $0x450] sm:$0xff]
      %v2348 = vld [vmem:[#allocation2 + $0x458] sm:$0xff]
      %v2349 = vld [vmem:[#allocation2 + $0x460] sm:$0xff]
      %v2350 = vld [vmem:[#allocation2 + $0x468] sm:$0xff]
      %v2351 = vld [vmem:[#allocation2 + $0x470] sm:$0xff]
      %v2352 = vld [vmem:[#allocation2 + $0x478] sm:$0xff]
      %v2353 = vld [vmem:[#allocation2 + $0x480] sm:$0xff]
      %v2354 = vld [vmem:[#allocation2 + $0x488] sm:$0xff]
      %v2355 = vld [vmem:[#allocation2 + $0x490] sm:$0xff]
      %v2356 = vld [vmem:[#allocation2 + $0x498] sm:$0xff]
      %v2357 = vld [vmem:[#allocation2 + $0x4a0] sm:$0xff]
      %v2358 = vld [vmem:[#allocation2 + $0x4a8] sm:$0xff]
      %v2359 = vld [vmem:[#allocation2 + $0x4b0] sm:$0xff]
      %v2360 = vld [vmem:[#allocation2 + $0x4b8] sm:$0xff]
      %v2361 = vld [vmem:[#allocation2 + $0x4c0] sm:$0xff]
      %v2362 = vld [vmem:[#allocation2 + $0x4c8] sm:$0xff]
      %v2363 = vld [vmem:[#allocation2 + $0x4d0] sm:$0xff]
      %v2364 = vld [vmem:[#allocation2 + $0x4d8] sm:$0xff]
      %v2365 = vld [vmem:[#allocation2 + $0x4e0] sm:$0xff]
      %v2366 = vld [vmem:[#allocation2 + $0x4e8] sm:$0xff]
      %v2367 = vld [vmem:[#allocation2 + $0x4f0] sm:$0xff]
      %v2368 = vld [vmem:[#allocation2 + $0x4f8] sm:$0xff]
      %v2369 = vld [vmem:[#allocation2 + $0x500] sm:$0xff]
      %v2370 = vld [vmem:[#allocation2 + $0x508] sm:$0xff]
      %v2371 = vld [vmem:[#allocation2 + $0x510] sm:$0xff]
      %v2372 = vld [vmem:[#allocation2 + $0x518] sm:$0xff]
      %v2373 = vld [vmem:[#allocation2 + $0x520] sm:$0xff]
      %v2374 = vld [vmem:[#allocation2 + $0x528] sm:$0xff]
      %v2375 = vld [vmem:[#allocation2 + $0x530] sm:$0xff]
      %v2376 = vld [vmem:[#allocation2 + $0x538] sm:$0xff]
      %v2377 = vld [vmem:[#allocation2 + $0x540] sm:$0xff]
      %v2378 = vld [vmem:[#allocation2 + $0x548] sm:$0xff]
      %v2379 = vld [vmem:[#allocation2 + $0x550] sm:$0xff]
      %v2380 = vld [vmem:[#allocation2 + $0x558] sm:$0xff]
      %v2381 = vld [vmem:[#allocation2 + $0x560] sm:$0xff]
      %v2382 = vld [vmem:[#allocation2 + $0x568] sm:$0xff]
      %v2383 = vld [vmem:[#allocation2 + $0x570] sm:$0xff]
      %v2384 = vld [vmem:[#allocation2 + $0x578] sm:$0xff]
      %v2385 = vld [vmem:[#allocation2 + $0x580] sm:$0xff]
      %v2386 = vld [vmem:[#allocation2 + $0x588] sm:$0xff]
      %v2387 = vld [vmem:[#allocation2 + $0x590] sm:$0xff]
      %v2388 = vld [vmem:[#allocation2 + $0x598] sm:$0xff]
      %v2389 = vld [vmem:[#allocation2 + $0x5a0] sm:$0xff]
      %v2390 = vld [vmem:[#allocation2 + $0x5a8] sm:$0xff]
      %v2391 = vld [vmem:[#allocation2 + $0x5b0] sm:$0xff]
      %v2392 = vld [vmem:[#allocation2 + $0x5b8] sm:$0xff]
      %v2393 = vld [vmem:[#allocation2 + $0x5c0] sm:$0xff]
      %v2394 = vld [vmem:[#allocation2 + $0x5c8] sm:$0xff]
      %v2395 = vld [vmem:[#allocation2 + $0x5d0] sm:$0xff]
      %v2396 = vld [vmem:[#allocation2 + $0x5d8] sm:$0xff]
      %v2397 = vld [vmem:[#allocation2 + $0x5e0] sm:$0xff]
      %v2398 = vld [vmem:[#allocation2 + $0x5e8] sm:$0xff]
      %v2399 = vld [vmem:[#allocation2 + $0x5f0] sm:$0xff]
      %v2400 = vld [vmem:[#allocation2 + $0x5f8] sm:$0xff]
      %v2401 = vld [vmem:[#allocation2 + $0x600] sm:$0xff]
      %v2402 = vld [vmem:[#allocation2 + $0x608] sm:$0xff]
      %v2403 = vld [vmem:[#allocation2 + $0x610] sm:$0xff]
      %v2404 = vld [vmem:[#allocation2 + $0x618] sm:$0xff]
      %v2405 = vld [vmem:[#allocation2 + $0x620] sm:$0xff]
      %v2406 = vld [vmem:[#allocation2 + $0x628] sm:$0xff]
      %v2407 = vld [vmem:[#allocation2 + $0x630] sm:$0xff]
      %v2408 = vld [vmem:[#allocation2 + $0x638] sm:$0xff]
      %v2409 = vld [vmem:[#allocation2 + $0x640] sm:$0xff]
      %v2410 = vld [vmem:[#allocation2 + $0x648] sm:$0xff]
      %v2411 = vld [vmem:[#allocation2 + $0x650] sm:$0xff]
      %v2412 = vld [vmem:[#allocation2 + $0x658] sm:$0xff]
      %v2413 = vld [vmem:[#allocation2 + $0x660] sm:$0xff]
      %v2414 = vld [vmem:[#allocation2 + $0x668] sm:$0xff]
      %v2415 = vld [vmem:[#allocation2 + $0x670] sm:$0xff]
      %v2416 = vld [vmem:[#allocation2 + $0x678] sm:$0xff]
      %v2417 = vld [vmem:[#allocation2 + $0x680] sm:$0xff]
      %v2418 = vld [vmem:[#allocation2 + $0x688] sm:$0xff]
      %v2419 = vld [vmem:[#allocation2 + $0x690] sm:$0xff]
      %v2420 = vld [vmem:[#allocation2 + $0x698] sm:$0xff]
      %v2421 = vld [vmem:[#allocation2 + $0x6a0] sm:$0xff]
      %v2422 = vld [vmem:[#allocation2 + $0x6a8] sm:$0xff]
      %v2423 = vld [vmem:[#allocation2 + $0x6b0] sm:$0xff]
      %v2424 = vld [vmem:[#allocation2 + $0x6b8] sm:$0xff]
      %v2425 = vld [vmem:[#allocation2 + $0x6c0] sm:$0xff]
      %v2426 = vld [vmem:[#allocation2 + $0x6c8] sm:$0xff]
      %v2427 = vld [vmem:[#allocation2 + $0x6d0] sm:$0xff]
      %v2428 = vld [vmem:[#allocation2 + $0x6d8] sm:$0xff]
      %v2429 = vld [vmem:[#allocation2 + $0x6e0] sm:$0xff]
      %v2430 = vld [vmem:[#allocation2 + $0x6e8] sm:$0xff]
      %v2431 = vld [vmem:[#allocation2 + $0x6f0] sm:$0xff]
      %v2432 = vld [vmem:[#allocation2 + $0x6f8] sm:$0xff]
      %v2433 = vld [vmem:[#allocation2 + $0x700] sm:$0xff]
      %v2434 = vld [vmem:[#allocation2 + $0x708] sm:$0xff]
      %v2435 = vld [vmem:[#allocation2 + $0x710] sm:$0xff]
      %v2436 = vld [vmem:[#allocation2 + $0x718] sm:$0xff]
      %v2437 = vld [vmem:[#allocation2 + $0x720] sm:$0xff]
      %v2438 = vld [vmem:[#allocation2 + $0x728] sm:$0xff]
      %v2439 = vld [vmem:[#allocation2 + $0x730] sm:$0xff]
      %v2440 = vld [vmem:[#allocation2 + $0x738] sm:$0xff]
      %v2441 = vld [vmem:[#allocation2 + $0x740] sm:$0xff]
      %v2442 = vld [vmem:[#allocation2 + $0x748] sm:$0xff]
      %v2443 = vld [vmem:[#allocation2 + $0x750] sm:$0xff]
      %v2444 = vld [vmem:[#allocation2 + $0x758] sm:$0xff]
      %v2445 = vld [vmem:[#allocation2 + $0x760] sm:$0xff]
      %v2446 = vld [vmem:[#allocation2 + $0x768] sm:$0xff]
      %v2447 = vld [vmem:[#allocation2 + $0x770] sm:$0xff]
      %v2448 = vld [vmem:[#allocation2 + $0x778] sm:$0xff]
      %v2449 = vld [vmem:[#allocation2 + $0x780] sm:$0xff]
      %v2450 = vld [vmem:[#allocation2 + $0x788] sm:$0xff]
      %v2451 = vld [vmem:[#allocation2 + $0x790] sm:$0xff]
      %v2452 = vld [vmem:[#allocation2 + $0x798] sm:$0xff]
      %v2453 = vld [vmem:[#allocation2 + $0x7a0] sm:$0xff]
      %v2454 = vld [vmem:[#allocation2 + $0x7a8] sm:$0xff]
      %v2455 = vld [vmem:[#allocation2 + $0x7b0] sm:$0xff]
      %v2456 = vld [vmem:[#allocation2 + $0x7b8] sm:$0xff]
      %v2457 = vld [vmem:[#allocation2 + $0x7c0] sm:$0xff]
      %v2458 = vld [vmem:[#allocation2 + $0x7c8] sm:$0xff]
      %v2459 = vld [vmem:[#allocation2 + $0x7d0] sm:$0xff]
      %v2460 = vld [vmem:[#allocation2 + $0x7d8] sm:$0xff]
      %v2461 = vld [vmem:[#allocation2 + $0x7e0] sm:$0xff]
      %v2462 = vld [vmem:[#allocation2 + $0x7e8] sm:$0xff]
      %v2463 = vld [vmem:[#allocation2 + $0x7f0] sm:$0xff]
      %v2464 = vld [vmem:[#allocation2 + $0x7f8] sm:$0xff]
      %v2465 = vld [vmem:[%s2] sm:$0xf]
      %v2467 = vlaneseq
      %v2468 = vshrl.u32 %v2467, 7
      %v2469 = vsub.s32 0, %v2468
      %v2470 = vrot.slane %v2465, %v2469
      %v2471 = vlaneseq
      %v2472 = vshrl.u32 %v2471, 7
      %v2473 = vsub.s32 1, %v2472
      %v2474 = vrot.slane %v2465, %v2473
      %v2475 = vlaneseq
      %v2476 = vshrl.u32 %v2475, 7
      %v2477 = vsub.s32 2, %v2476
      %v2478 = vrot.slane %v2465, %v2477
      %v2479 = vlaneseq
      %v2480 = vshrl.u32 %v2479, 7
      %v2481 = vsub.s32 3, %v2480
      %v2482 = vrot.slane %v2465, %v2481
      %v2487 = vadd.f32 %v2209, %v2470
      %v2488 = vadd.f32 %v2210, %v2474
      %v2489 = vadd.f32 %v2211, %v2478
      %v2490 = vadd.f32 %v2212, %v2482
      %v2491 = vadd.f32 %v2213, %v2470
      %v2492 = vadd.f32 %v2214, %v2474
      %v2493 = vadd.f32 %v2215, %v2478
      %v2494 = vadd.f32 %v2216, %v2482
      %v2495 = vadd.f32 %v2217, %v2470
      %v2496 = vadd.f32 %v2218, %v2474
      %v2497 = vadd.f32 %v2219, %v2478
      %v2498 = vadd.f32 %v2220, %v2482
      %v2499 = vadd.f32 %v2221, %v2470
      %v2500 = vadd.f32 %v2222, %v2474
      %v2501 = vadd.f32 %v2223, %v2478
      %v2502 = vadd.f32 %v2224, %v2482
      %v2503 = vadd.f32 %v2225, %v2470
      %v2504 = vadd.f32 %v2226, %v2474
      %v2505 = vadd.f32 %v2227, %v2478
      %v2506 = vadd.f32 %v2228, %v2482
      %v2507 = vadd.f32 %v2229, %v2470
      %v2508 = vadd.f32 %v2230, %v2474
      %v2509 = vadd.f32 %v2231, %v2478
      %v2510 = vadd.f32 %v2232, %v2482
      %v2511 = vadd.f32 %v2233, %v2470
      %v2512 = vadd.f32 %v2234, %v2474
      %v2513 = vadd.f32 %v2235, %v2478
      %v2514 = vadd.f32 %v2236, %v2482
      %v2515 = vadd.f32 %v2237, %v2470
      %v2516 = vadd.f32 %v2238, %v2474
      %v2517 = vadd.f32 %v2239, %v2478
      %v2518 = vadd.f32 %v2240, %v2482
      %v2519 = vadd.f32 %v2241, %v2470
      %v2520 = vadd.f32 %v2242, %v2474
      %v2521 = vadd.f32 %v2243, %v2478
      %v2522 = vadd.f32 %v2244, %v2482
      %v2523 = vadd.f32 %v2245, %v2470
      %v2524 = vadd.f32 %v2246, %v2474
      %v2525 = vadd.f32 %v2247, %v2478
      %v2526 = vadd.f32 %v2248, %v2482
      %v2527 = vadd.f32 %v2249, %v2470
      %v2528 = vadd.f32 %v2250, %v2474
      %v2529 = vadd.f32 %v2251, %v2478
      %v2530 = vadd.f32 %v2252, %v2482
      %v2531 = vadd.f32 %v2253, %v2470
      %v2532 = vadd.f32 %v2254, %v2474
      %v2533 = vadd.f32 %v2255, %v2478
      %v2534 = vadd.f32 %v2256, %v2482
      %v2535 = vadd.f32 %v2257, %v2470
      %v2536 = vadd.f32 %v2258, %v2474
      %v2537 = vadd.f32 %v2259, %v2478
      %v2538 = vadd.f32 %v2260, %v2482
      %v2539 = vadd.f32 %v2261, %v2470
      %v2540 = vadd.f32 %v2262, %v2474
      %v2541 = vadd.f32 %v2263, %v2478
      %v2542 = vadd.f32 %v2264, %v2482
      %v2543 = vadd.f32 %v2265, %v2470
      %v2544 = vadd.f32 %v2266, %v2474
      %v2545 = vadd.f32 %v2267, %v2478
      %v2546 = vadd.f32 %v2268, %v2482
      %v2547 = vadd.f32 %v2269, %v2470
      %v2548 = vadd.f32 %v2270, %v2474
      %v2549 = vadd.f32 %v2271, %v2478
      %v2550 = vadd.f32 %v2272, %v2482
      %v2551 = vadd.f32 %v2273, %v2470
      %v2552 = vadd.f32 %v2274, %v2474
      %v2553 = vadd.f32 %v2275, %v2478
      %v2554 = vadd.f32 %v2276, %v2482
      %v2555 = vadd.f32 %v2277, %v2470
      %v2556 = vadd.f32 %v2278, %v2474
      %v2557 = vadd.f32 %v2279, %v2478
      %v2558 = vadd.f32 %v2280, %v2482
      %v2559 = vadd.f32 %v2281, %v2470
      %v2560 = vadd.f32 %v2282, %v2474
      %v2561 = vadd.f32 %v2283, %v2478
      %v2562 = vadd.f32 %v2284, %v2482
      %v2563 = vadd.f32 %v2285, %v2470
      %v2564 = vadd.f32 %v2286, %v2474
      %v2565 = vadd.f32 %v2287, %v2478
      %v2566 = vadd.f32 %v2288, %v2482
      %v2567 = vadd.f32 %v2289, %v2470
      %v2568 = vadd.f32 %v2290, %v2474
      %v2569 = vadd.f32 %v2291, %v2478
      %v2570 = vadd.f32 %v2292, %v2482
      %v2571 = vadd.f32 %v2293, %v2470
      %v2572 = vadd.f32 %v2294, %v2474
      %v2573 = vadd.f32 %v2295, %v2478
      %v2574 = vadd.f32 %v2296, %v2482
      %v2575 = vadd.f32 %v2297, %v2470
      %v2576 = vadd.f32 %v2298, %v2474
      %v2577 = vadd.f32 %v2299, %v2478
      %v2578 = vadd.f32 %v2300, %v2482
      %v2579 = vadd.f32 %v2301, %v2470
      %v2580 = vadd.f32 %v2302, %v2474
      %v2581 = vadd.f32 %v2303, %v2478
      %v2582 = vadd.f32 %v2304, %v2482
      %v2583 = vadd.f32 %v2305, %v2470
      %v2584 = vadd.f32 %v2306, %v2474
      %v2585 = vadd.f32 %v2307, %v2478
      %v2586 = vadd.f32 %v2308, %v2482
      %v2587 = vadd.f32 %v2309, %v2470
      %v2588 = vadd.f32 %v2310, %v2474
      %v2589 = vadd.f32 %v2311, %v2478
      %v2590 = vadd.f32 %v2312, %v2482
      %v2591 = vadd.f32 %v2313, %v2470
      %v2592 = vadd.f32 %v2314, %v2474
      %v2593 = vadd.f32 %v2315, %v2478
      %v2594 = vadd.f32 %v2316, %v2482
      %v2595 = vadd.f32 %v2317, %v2470
      %v2596 = vadd.f32 %v2318, %v2474
      %v2597 = vadd.f32 %v2319, %v2478
      %v2598 = vadd.f32 %v2320, %v2482
      %v2599 = vadd.f32 %v2321, %v2470
      %v2600 = vadd.f32 %v2322, %v2474
      %v2601 = vadd.f32 %v2323, %v2478
      %v2602 = vadd.f32 %v2324, %v2482
      %v2603 = vadd.f32 %v2325, %v2470
      %v2604 = vadd.f32 %v2326, %v2474
      %v2605 = vadd.f32 %v2327, %v2478
      %v2606 = vadd.f32 %v2328, %v2482
      %v2607 = vadd.f32 %v2329, %v2470
      %v2608 = vadd.f32 %v2330, %v2474
      %v2609 = vadd.f32 %v2331, %v2478
      %v2610 = vadd.f32 %v2332, %v2482
      %v2611 = vadd.f32 %v2333, %v2470
      %v2612 = vadd.f32 %v2334, %v2474
      %v2613 = vadd.f32 %v2335, %v2478
      %v2614 = vadd.f32 %v2336, %v2482
      %v2615 = vadd.f32 %v2337, %v2470
      %v2616 = vadd.f32 %v2338, %v2474
      %v2617 = vadd.f32 %v2339, %v2478
      %v2618 = vadd.f32 %v2340, %v2482
      %v2619 = vadd.f32 %v2341, %v2470
      %v2620 = vadd.f32 %v2342, %v2474
      %v2621 = vadd.f32 %v2343, %v2478
      %v2622 = vadd.f32 %v2344, %v2482
      %v2623 = vadd.f32 %v2345, %v2470
      %v2624 = vadd.f32 %v2346, %v2474
      %v2625 = vadd.f32 %v2347, %v2478
      %v2626 = vadd.f32 %v2348, %v2482
      %v2627 = vadd.f32 %v2349, %v2470
      %v2628 = vadd.f32 %v2350, %v2474
      %v2629 = vadd.f32 %v2351, %v2478
      %v2630 = vadd.f32 %v2352, %v2482
      %v2631 = vadd.f32 %v2353, %v2470
      %v2632 = vadd.f32 %v2354, %v2474
      %v2633 = vadd.f32 %v2355, %v2478
      %v2634 = vadd.f32 %v2356, %v2482
      %v2635 = vadd.f32 %v2357, %v2470
      %v2636 = vadd.f32 %v2358, %v2474
      %v2637 = vadd.f32 %v2359, %v2478
      %v2638 = vadd.f32 %v2360, %v2482
      %v2639 = vadd.f32 %v2361, %v2470
      %v2640 = vadd.f32 %v2362, %v2474
      %v2641 = vadd.f32 %v2363, %v2478
      %v2642 = vadd.f32 %v2364, %v2482
      %v2643 = vadd.f32 %v2365, %v2470
      %v2644 = vadd.f32 %v2366, %v2474
      %v2645 = vadd.f32 %v2367, %v2478
      %v2646 = vadd.f32 %v2368, %v2482
      %v2647 = vadd.f32 %v2369, %v2470
      %v2648 = vadd.f32 %v2370, %v2474
      %v2649 = vadd.f32 %v2371, %v2478
      %v2650 = vadd.f32 %v2372, %v2482
      %v2651 = vadd.f32 %v2373, %v2470
      %v2652 = vadd.f32 %v2374, %v2474
      %v2653 = vadd.f32 %v2375, %v2478
      %v2654 = vadd.f32 %v2376, %v2482
      %v2655 = vadd.f32 %v2377, %v2470
      %v2656 = vadd.f32 %v2378, %v2474
      %v2657 = vadd.f32 %v2379, %v2478
      %v2658 = vadd.f32 %v2380, %v2482
      %v2659 = vadd.f32 %v2381, %v2470
      %v2660 = vadd.f32 %v2382, %v2474
      %v2661 = vadd.f32 %v2383, %v2478
      %v2662 = vadd.f32 %v2384, %v2482
      %v2663 = vadd.f32 %v2385, %v2470
      %v2664 = vadd.f32 %v2386, %v2474
      %v2665 = vadd.f32 %v2387, %v2478
      %v2666 = vadd.f32 %v2388, %v2482
      %v2667 = vadd.f32 %v2389, %v2470
      %v2668 = vadd.f32 %v2390, %v2474
      %v2669 = vadd.f32 %v2391, %v2478
      %v2670 = vadd.f32 %v2392, %v2482
      %v2671 = vadd.f32 %v2393, %v2470
      %v2672 = vadd.f32 %v2394, %v2474
      %v2673 = vadd.f32 %v2395, %v2478
      %v2674 = vadd.f32 %v2396, %v2482
      %v2675 = vadd.f32 %v2397, %v2470
      %v2676 = vadd.f32 %v2398, %v2474
      %v2677 = vadd.f32 %v2399, %v2478
      %v2678 = vadd.f32 %v2400, %v2482
      %v2679 = vadd.f32 %v2401, %v2470
      %v2680 = vadd.f32 %v2402, %v2474
      %v2681 = vadd.f32 %v2403, %v2478
      %v2682 = vadd.f32 %v2404, %v2482
      %v2683 = vadd.f32 %v2405, %v2470
      %v2684 = vadd.f32 %v2406, %v2474
      %v2685 = vadd.f32 %v2407, %v2478
      %v2686 = vadd.f32 %v2408, %v2482
      %v2687 = vadd.f32 %v2409, %v2470
      %v2688 = vadd.f32 %v2410, %v2474
      %v2689 = vadd.f32 %v2411, %v2478
      %v2690 = vadd.f32 %v2412, %v2482
      %v2691 = vadd.f32 %v2413, %v2470
      %v2692 = vadd.f32 %v2414, %v2474
      %v2693 = vadd.f32 %v2415, %v2478
      %v2694 = vadd.f32 %v2416, %v2482
      %v2695 = vadd.f32 %v2417, %v2470
      %v2696 = vadd.f32 %v2418, %v2474
      %v2697 = vadd.f32 %v2419, %v2478
      %v2698 = vadd.f32 %v2420, %v2482
      %v2699 = vadd.f32 %v2421, %v2470
      %v2700 = vadd.f32 %v2422, %v2474
      %v2701 = vadd.f32 %v2423, %v2478
      %v2702 = vadd.f32 %v2424, %v2482
      %v2703 = vadd.f32 %v2425, %v2470
      %v2704 = vadd.f32 %v2426, %v2474
      %v2705 = vadd.f32 %v2427, %v2478
      %v2706 = vadd.f32 %v2428, %v2482
      %v2707 = vadd.f32 %v2429, %v2470
      %v2708 = vadd.f32 %v2430, %v2474
      %v2709 = vadd.f32 %v2431, %v2478
      %v2710 = vadd.f32 %v2432, %v2482
      %v2711 = vadd.f32 %v2433, %v2470
      %v2712 = vadd.f32 %v2434, %v2474
      %v2713 = vadd.f32 %v2435, %v2478
      %v2714 = vadd.f32 %v2436, %v2482
      %v2715 = vadd.f32 %v2437, %v2470
      %v2716 = vadd.f32 %v2438, %v2474
      %v2717 = vadd.f32 %v2439, %v2478
      %v2718 = vadd.f32 %v2440, %v2482
      %v2719 = vadd.f32 %v2441, %v2470
      %v2720 = vadd.f32 %v2442, %v2474
      %v2721 = vadd.f32 %v2443, %v2478
      %v2722 = vadd.f32 %v2444, %v2482
      %v2723 = vadd.f32 %v2445, %v2470
      %v2724 = vadd.f32 %v2446, %v2474
      %v2725 = vadd.f32 %v2447, %v2478
      %v2726 = vadd.f32 %v2448, %v2482
      %v2727 = vadd.f32 %v2449, %v2470
      %v2728 = vadd.f32 %v2450, %v2474
      %v2729 = vadd.f32 %v2451, %v2478
      %v2730 = vadd.f32 %v2452, %v2482
      %v2731 = vadd.f32 %v2453, %v2470
      %v2732 = vadd.f32 %v2454, %v2474
      %v2733 = vadd.f32 %v2455, %v2478
      %v2734 = vadd.f32 %v2456, %v2482
      %v2735 = vadd.f32 %v2457, %v2470
      %v2736 = vadd.f32 %v2458, %v2474
      %v2737 = vadd.f32 %v2459, %v2478
      %v2738 = vadd.f32 %v2460, %v2482
      %v2739 = vadd.f32 %v2461, %v2470
      %v2740 = vadd.f32 %v2462, %v2474
      %v2741 = vadd.f32 %v2463, %v2478
      %v2742 = vadd.f32 %v2464, %v2482
      %2743 = vst [vmem:[#allocation3] sm:$0xff] %v2487
      %2744 = vst [vmem:[#allocation3 + $0x8] sm:$0xff] %v2488
      %2745 = vst [vmem:[#allocation3 + $0x10] sm:$0xff] %v2489
      %2746 = vst [vmem:[#allocation3 + $0x18] sm:$0xff] %v2490
      %2747 = vst [vmem:[#allocation3 + $0x20] sm:$0xff] %v2491
      %2748 = vst [vmem:[#allocation3 + $0x28] sm:$0xff] %v2492
      %2749 = vst [vmem:[#allocation3 + $0x30] sm:$0xff] %v2493
      %2750 = vst [vmem:[#allocation3 + $0x38] sm:$0xff] %v2494
      %2751 = vst [vmem:[#allocation3 + $0x40] sm:$0xff] %v2495
      %2752 = vst [vmem:[#allocation3 + $0x48] sm:$0xff] %v2496
      %2753 = vst [vmem:[#allocation3 + $0x50] sm:$0xff] %v2497
      %2754 = vst [vmem:[#allocation3 + $0x58] sm:$0xff] %v2498
      %2755 = vst [vmem:[#allocation3 + $0x60] sm:$0xff] %v2499
      %2756 = vst [vmem:[#allocation3 + $0x68] sm:$0xff] %v2500
      %2757 = vst [vmem:[#allocation3 + $0x70] sm:$0xff] %v2501
      %2758 = vst [vmem:[#allocation3 + $0x78] sm:$0xff] %v2502
      %2759 = vst [vmem:[#allocation3 + $0x80] sm:$0xff] %v2503
      %2760 = vst [vmem:[#allocation3 + $0x88] sm:$0xff] %v2504
      %2761 = vst [vmem:[#allocation3 + $0x90] sm:$0xff] %v2505
      %2762 = vst [vmem:[#allocation3 + $0x98] sm:$0xff] %v2506
      %2763 = vst [vmem:[#allocation3 + $0xa0] sm:$0xff] %v2507
      %2764 = vst [vmem:[#allocation3 + $0xa8] sm:$0xff] %v2508
      %2765 = vst [vmem:[#allocation3 + $0xb0] sm:$0xff] %v2509
      %2766 = vst [vmem:[#allocation3 + $0xb8] sm:$0xff] %v2510
      %2767 = vst [vmem:[#allocation3 + $0xc0] sm:$0xff] %v2511
      %2768 = vst [vmem:[#allocation3 + $0xc8] sm:$0xff] %v2512
      %2769 = vst [vmem:[#allocation3 + $0xd0] sm:$0xff] %v2513
      %2770 = vst [vmem:[#allocation3 + $0xd8] sm:$0xff] %v2514
      %2771 = vst [vmem:[#allocation3 + $0xe0] sm:$0xff] %v2515
      %2772 = vst [vmem:[#allocation3 + $0xe8] sm:$0xff] %v2516
      %2773 = vst [vmem:[#allocation3 + $0xf0] sm:$0xff] %v2517
      %2774 = vst [vmem:[#allocation3 + $0xf8] sm:$0xff] %v2518
      %2775 = vst [vmem:[#allocation3 + $0x100] sm:$0xff] %v2519
      %2776 = vst [vmem:[#allocation3 + $0x108] sm:$0xff] %v2520
      %2777 = vst [vmem:[#allocation3 + $0x110] sm:$0xff] %v2521
      %2778 = vst [vmem:[#allocation3 + $0x118] sm:$0xff] %v2522
      %2779 = vst [vmem:[#allocation3 + $0x120] sm:$0xff] %v2523
      %2780 = vst [vmem:[#allocation3 + $0x128] sm:$0xff] %v2524
      %2781 = vst [vmem:[#allocation3 + $0x130] sm:$0xff] %v2525
      %2782 = vst [vmem:[#allocation3 + $0x138] sm:$0xff] %v2526
      %2783 = vst [vmem:[#allocation3 + $0x140] sm:$0xff] %v2527
      %2784 = vst [vmem:[#allocation3 + $0x148] sm:$0xff] %v2528
      %2785 = vst [vmem:[#allocation3 + $0x150] sm:$0xff] %v2529
      %2786 = vst [vmem:[#allocation3 + $0x158] sm:$0xff] %v2530
      %2787 = vst [vmem:[#allocation3 + $0x160] sm:$0xff] %v2531
      %2788 = vst [vmem:[#allocation3 + $0x168] sm:$0xff] %v2532
      %2789 = vst [vmem:[#allocation3 + $0x170] sm:$0xff] %v2533
      %2790 = vst [vmem:[#allocation3 + $0x178] sm:$0xff] %v2534
      %2791 = vst [vmem:[#allocation3 + $0x180] sm:$0xff] %v2535
      %2792 = vst [vmem:[#allocation3 + $0x188] sm:$0xff] %v2536
      %2793 = vst [vmem:[#allocation3 + $0x190] sm:$0xff] %v2537
      %2794 = vst [vmem:[#allocation3 + $0x198] sm:$0xff] %v2538
      %2795 = vst [vmem:[#allocation3 + $0x1a0] sm:$0xff] %v2539
      %2796 = vst [vmem:[#allocation3 + $0x1a8] sm:$0xff] %v2540
      %2797 = vst [vmem:[#allocation3 + $0x1b0] sm:$0xff] %v2541
      %2798 = vst [vmem:[#allocation3 + $0x1b8] sm:$0xff] %v2542
      %2799 = vst [vmem:[#allocation3 + $0x1c0] sm:$0xff] %v2543
      %2800 = vst [vmem:[#allocation3 + $0x1c8] sm:$0xff] %v2544
      %2801 = vst [vmem:[#allocation3 + $0x1d0] sm:$0xff] %v2545
      %2802 = vst [vmem:[#allocation3 + $0x1d8] sm:$0xff] %v2546
      %2803 = vst [vmem:[#allocation3 + $0x1e0] sm:$0xff] %v2547
      %2804 = vst [vmem:[#allocation3 + $0x1e8] sm:$0xff] %v2548
      %2805 = vst [vmem:[#allocation3 + $0x1f0] sm:$0xff] %v2549
      %2806 = vst [vmem:[#allocation3 + $0x1f8] sm:$0xff] %v2550
      %2807 = vst [vmem:[#allocation3 + $0x200] sm:$0xff] %v2551
      %2808 = vst [vmem:[#allocation3 + $0x208] sm:$0xff] %v2552
      %2809 = vst [vmem:[#allocation3 + $0x210] sm:$0xff] %v2553
      %2810 = vst [vmem:[#allocation3 + $0x218] sm:$0xff] %v2554
      %2811 = vst [vmem:[#allocation3 + $0x220] sm:$0xff] %v2555
      %2812 = vst [vmem:[#allocation3 + $0x228] sm:$0xff] %v2556
      %2813 = vst [vmem:[#allocation3 + $0x230] sm:$0xff] %v2557
      %2814 = vst [vmem:[#allocation3 + $0x238] sm:$0xff] %v2558
      %2815 = vst [vmem:[#allocation3 + $0x240] sm:$0xff] %v2559
      %2816 = vst [vmem:[#allocation3 + $0x248] sm:$0xff] %v2560
      %2817 = vst [vmem:[#allocation3 + $0x250] sm:$0xff] %v2561
      %2818 = vst [vmem:[#allocation3 + $0x258] sm:$0xff] %v2562
      %2819 = vst [vmem:[#allocation3 + $0x260] sm:$0xff] %v2563
      %2820 = vst [vmem:[#allocation3 + $0x268] sm:$0xff] %v2564
      %2821 = vst [vmem:[#allocation3 + $0x270] sm:$0xff] %v2565
      %2822 = vst [vmem:[#allocation3 + $0x278] sm:$0xff] %v2566
      %2823 = vst [vmem:[#allocation3 + $0x280] sm:$0xff] %v2567
      %2824 = vst [vmem:[#allocation3 + $0x288] sm:$0xff] %v2568
      %2825 = vst [vmem:[#allocation3 + $0x290] sm:$0xff] %v2569
      %2826 = vst [vmem:[#allocation3 + $0x298] sm:$0xff] %v2570
      %2827 = vst [vmem:[#allocation3 + $0x2a0] sm:$0xff] %v2571
      %2828 = vst [vmem:[#allocation3 + $0x2a8] sm:$0xff] %v2572
      %2829 = vst [vmem:[#allocation3 + $0x2b0] sm:$0xff] %v2573
      %2830 = vst [vmem:[#allocation3 + $0x2b8] sm:$0xff] %v2574
      %2831 = vst [vmem:[#allocation3 + $0x2c0] sm:$0xff] %v2575
      %2832 = vst [vmem:[#allocation3 + $0x2c8] sm:$0xff] %v2576
      %2833 = vst [vmem:[#allocation3 + $0x2d0] sm:$0xff] %v2577
      %2834 = vst [vmem:[#allocation3 + $0x2d8] sm:$0xff] %v2578
      %2835 = vst [vmem:[#allocation3 + $0x2e0] sm:$0xff] %v2579
      %2836 = vst [vmem:[#allocation3 + $0x2e8] sm:$0xff] %v2580
      %2837 = vst [vmem:[#allocation3 + $0x2f0] sm:$0xff] %v2581
      %2838 = vst [vmem:[#allocation3 + $0x2f8] sm:$0xff] %v2582
      %2839 = vst [vmem:[#allocation3 + $0x300] sm:$0xff] %v2583
      %2840 = vst [vmem:[#allocation3 + $0x308] sm:$0xff] %v2584
      %2841 = vst [vmem:[#allocation3 + $0x310] sm:$0xff] %v2585
      %2842 = vst [vmem:[#allocation3 + $0x318] sm:$0xff] %v2586
      %2843 = vst [vmem:[#allocation3 + $0x320] sm:$0xff] %v2587
      %2844 = vst [vmem:[#allocation3 + $0x328] sm:$0xff] %v2588
      %2845 = vst [vmem:[#allocation3 + $0x330] sm:$0xff] %v2589
      %2846 = vst [vmem:[#allocation3 + $0x338] sm:$0xff] %v2590
      %2847 = vst [vmem:[#allocation3 + $0x340] sm:$0xff] %v2591
      %2848 = vst [vmem:[#allocation3 + $0x348] sm:$0xff] %v2592
      %2849 = vst [vmem:[#allocation3 + $0x350] sm:$0xff] %v2593
      %2850 = vst [vmem:[#allocation3 + $0x358] sm:$0xff] %v2594
      %2851 = vst [vmem:[#allocation3 + $0x360] sm:$0xff] %v2595
      %2852 = vst [vmem:[#allocation3 + $0x368] sm:$0xff] %v2596
      %2853 = vst [vmem:[#allocation3 + $0x370] sm:$0xff] %v2597
      %2854 = vst [vmem:[#allocation3 + $0x378] sm:$0xff] %v2598
      %2855 = vst [vmem:[#allocation3 + $0x380] sm:$0xff] %v2599
      %2856 = vst [vmem:[#allocation3 + $0x388] sm:$0xff] %v2600
      %2857 = vst [vmem:[#allocation3 + $0x390] sm:$0xff] %v2601
      %2858 = vst [vmem:[#allocation3 + $0x398] sm:$0xff] %v2602
      %2859 = vst [vmem:[#allocation3 + $0x3a0] sm:$0xff] %v2603
      %2860 = vst [vmem:[#allocation3 + $0x3a8] sm:$0xff] %v2604
      %2861 = vst [vmem:[#allocation3 + $0x3b0] sm:$0xff] %v2605
      %2862 = vst [vmem:[#allocation3 + $0x3b8] sm:$0xff] %v2606
      %2863 = vst [vmem:[#allocation3 + $0x3c0] sm:$0xff] %v2607
      %2864 = vst [vmem:[#allocation3 + $0x3c8] sm:$0xff] %v2608
      %2865 = vst [vmem:[#allocation3 + $0x3d0] sm:$0xff] %v2609
      %2866 = vst [vmem:[#allocation3 + $0x3d8] sm:$0xff] %v2610
      %2867 = vst [vmem:[#allocation3 + $0x3e0] sm:$0xff] %v2611
      %2868 = vst [vmem:[#allocation3 + $0x3e8] sm:$0xff] %v2612
      %2869 = vst [vmem:[#allocation3 + $0x3f0] sm:$0xff] %v2613
      %2870 = vst [vmem:[#allocation3 + $0x3f8] sm:$0xff] %v2614
      %2871 = vst [vmem:[#allocation3 + $0x400] sm:$0xff] %v2615
      %2872 = vst [vmem:[#allocation3 + $0x408] sm:$0xff] %v2616
      %2873 = vst [vmem:[#allocation3 + $0x410] sm:$0xff] %v2617
      %2874 = vst [vmem:[#allocation3 + $0x418] sm:$0xff] %v2618
      %2875 = vst [vmem:[#allocation3 + $0x420] sm:$0xff] %v2619
      %2876 = vst [vmem:[#allocation3 + $0x428] sm:$0xff] %v2620
      %2877 = vst [vmem:[#allocation3 + $0x430] sm:$0xff] %v2621
      %2878 = vst [vmem:[#allocation3 + $0x438] sm:$0xff] %v2622
      %2879 = vst [vmem:[#allocation3 + $0x440] sm:$0xff] %v2623
      %2880 = vst [vmem:[#allocation3 + $0x448] sm:$0xff] %v2624
      %2881 = vst [vmem:[#allocation3 + $0x450] sm:$0xff] %v2625
      %2882 = vst [vmem:[#allocation3 + $0x458] sm:$0xff] %v2626
      %2883 = vst [vmem:[#allocation3 + $0x460] sm:$0xff] %v2627
      %2884 = vst [vmem:[#allocation3 + $0x468] sm:$0xff] %v2628
      %2885 = vst [vmem:[#allocation3 + $0x470] sm:$0xff] %v2629
      %2886 = vst [vmem:[#allocation3 + $0x478] sm:$0xff] %v2630
      %2887 = vst [vmem:[#allocation3 + $0x480] sm:$0xff] %v2631
      %2888 = vst [vmem:[#allocation3 + $0x488] sm:$0xff] %v2632
      %2889 = vst [vmem:[#allocation3 + $0x490] sm:$0xff] %v2633
      %2890 = vst [vmem:[#allocation3 + $0x498] sm:$0xff] %v2634
      %2891 = vst [vmem:[#allocation3 + $0x4a0] sm:$0xff] %v2635
      %2892 = vst [vmem:[#allocation3 + $0x4a8] sm:$0xff] %v2636
      %2893 = vst [vmem:[#allocation3 + $0x4b0] sm:$0xff] %v2637
      %2894 = vst [vmem:[#allocation3 + $0x4b8] sm:$0xff] %v2638
      %2895 = vst [vmem:[#allocation3 + $0x4c0] sm:$0xff] %v2639
      %2896 = vst [vmem:[#allocation3 + $0x4c8] sm:$0xff] %v2640
      %2897 = vst [vmem:[#allocation3 + $0x4d0] sm:$0xff] %v2641
      %2898 = vst [vmem:[#allocation3 + $0x4d8] sm:$0xff] %v2642
      %2899 = vst [vmem:[#allocation3 + $0x4e0] sm:$0xff] %v2643
      %2900 = vst [vmem:[#allocation3 + $0x4e8] sm:$0xff] %v2644
      %2901 = vst [vmem:[#allocation3 + $0x4f0] sm:$0xff] %v2645
      %2902 = vst [vmem:[#allocation3 + $0x4f8] sm:$0xff] %v2646
      %2903 = vst [vmem:[#allocation3 + $0x500] sm:$0xff] %v2647
      %2904 = vst [vmem:[#allocation3 + $0x508] sm:$0xff] %v2648
      %2905 = vst [vmem:[#allocation3 + $0x510] sm:$0xff] %v2649
      %2906 = vst [vmem:[#allocation3 + $0x518] sm:$0xff] %v2650
      %2907 = vst [vmem:[#allocation3 + $0x520] sm:$0xff] %v2651
      %2908 = vst [vmem:[#allocation3 + $0x528] sm:$0xff] %v2652
      %2909 = vst [vmem:[#allocation3 + $0x530] sm:$0xff] %v2653
      %2910 = vst [vmem:[#allocation3 + $0x538] sm:$0xff] %v2654
      %2911 = vst [vmem:[#allocation3 + $0x540] sm:$0xff] %v2655
      %2912 = vst [vmem:[#allocation3 + $0x548] sm:$0xff] %v2656
      %2913 = vst [vmem:[#allocation3 + $0x550] sm:$0xff] %v2657
      %2914 = vst [vmem:[#allocation3 + $0x558] sm:$0xff] %v2658
      %2915 = vst [vmem:[#allocation3 + $0x560] sm:$0xff] %v2659
      %2916 = vst [vmem:[#allocation3 + $0x568] sm:$0xff] %v2660
      %2917 = vst [vmem:[#allocation3 + $0x570] sm:$0xff] %v2661
      %2918 = vst [vmem:[#allocation3 + $0x578] sm:$0xff] %v2662
      %2919 = vst [vmem:[#allocation3 + $0x580] sm:$0xff] %v2663
      %2920 = vst [vmem:[#allocation3 + $0x588] sm:$0xff] %v2664
      %2921 = vst [vmem:[#allocation3 + $0x590] sm:$0xff] %v2665
      %2922 = vst [vmem:[#allocation3 + $0x598] sm:$0xff] %v2666
      %2923 = vst [vmem:[#allocation3 + $0x5a0] sm:$0xff] %v2667
      %2924 = vst [vmem:[#allocation3 + $0x5a8] sm:$0xff] %v2668
      %2925 = vst [vmem:[#allocation3 + $0x5b0] sm:$0xff] %v2669
      %2926 = vst [vmem:[#allocation3 + $0x5b8] sm:$0xff] %v2670
      %2927 = vst [vmem:[#allocation3 + $0x5c0] sm:$0xff] %v2671
      %2928 = vst [vmem:[#allocation3 + $0x5c8] sm:$0xff] %v2672
      %2929 = vst [vmem:[#allocation3 + $0x5d0] sm:$0xff] %v2673
      %2930 = vst [vmem:[#allocation3 + $0x5d8] sm:$0xff] %v2674
      %2931 = vst [vmem:[#allocation3 + $0x5e0] sm:$0xff] %v2675
      %2932 = vst [vmem:[#allocation3 + $0x5e8] sm:$0xff] %v2676
      %2933 = vst [vmem:[#allocation3 + $0x5f0] sm:$0xff] %v2677
      %2934 = vst [vmem:[#allocation3 + $0x5f8] sm:$0xff] %v2678
      %2935 = vst [vmem:[#allocation3 + $0x600] sm:$0xff] %v2679
      %2936 = vst [vmem:[#allocation3 + $0x608] sm:$0xff] %v2680
      %2937 = vst [vmem:[#allocation3 + $0x610] sm:$0xff] %v2681
      %2938 = vst [vmem:[#allocation3 + $0x618] sm:$0xff] %v2682
      %2939 = vst [vmem:[#allocation3 + $0x620] sm:$0xff] %v2683
      %2940 = vst [vmem:[#allocation3 + $0x628] sm:$0xff] %v2684
      %2941 = vst [vmem:[#allocation3 + $0x630] sm:$0xff] %v2685
      %2942 = vst [vmem:[#allocation3 + $0x638] sm:$0xff] %v2686
      %2943 = vst [vmem:[#allocation3 + $0x640] sm:$0xff] %v2687
      %2944 = vst [vmem:[#allocation3 + $0x648] sm:$0xff] %v2688
      %2945 = vst [vmem:[#allocation3 + $0x650] sm:$0xff] %v2689
      %2946 = vst [vmem:[#allocation3 + $0x658] sm:$0xff] %v2690
      %2947 = vst [vmem:[#allocation3 + $0x660] sm:$0xff] %v2691
      %2948 = vst [vmem:[#allocation3 + $0x668] sm:$0xff] %v2692
      %2949 = vst [vmem:[#allocation3 + $0x670] sm:$0xff] %v2693
      %2950 = vst [vmem:[#allocation3 + $0x678] sm:$0xff] %v2694
      %2951 = vst [vmem:[#allocation3 + $0x680] sm:$0xff] %v2695
      %2952 = vst [vmem:[#allocation3 + $0x688] sm:$0xff] %v2696
      %2953 = vst [vmem:[#allocation3 + $0x690] sm:$0xff] %v2697
      %2954 = vst [vmem:[#allocation3 + $0x698] sm:$0xff] %v2698
      %2955 = vst [vmem:[#allocation3 + $0x6a0] sm:$0xff] %v2699
      %2956 = vst [vmem:[#allocation3 + $0x6a8] sm:$0xff] %v2700
      %2957 = vst [vmem:[#allocation3 + $0x6b0] sm:$0xff] %v2701
      %2958 = vst [vmem:[#allocation3 + $0x6b8] sm:$0xff] %v2702
      %2959 = vst [vmem:[#allocation3 + $0x6c0] sm:$0xff] %v2703
      %2960 = vst [vmem:[#allocation3 + $0x6c8] sm:$0xff] %v2704
      %2961 = vst [vmem:[#allocation3 + $0x6d0] sm:$0xff] %v2705
      %2962 = vst [vmem:[#allocation3 + $0x6d8] sm:$0xff] %v2706
      %2963 = vst [vmem:[#allocation3 + $0x6e0] sm:$0xff] %v2707
      %2964 = vst [vmem:[#allocation3 + $0x6e8] sm:$0xff] %v2708
      %2965 = vst [vmem:[#allocation3 + $0x6f0] sm:$0xff] %v2709
      %2966 = vst [vmem:[#allocation3 + $0x6f8] sm:$0xff] %v2710
      %2967 = vst [vmem:[#allocation3 + $0x700] sm:$0xff] %v2711
      %2968 = vst [vmem:[#allocation3 + $0x708] sm:$0xff] %v2712
      %2969 = vst [vmem:[#allocation3 + $0x710] sm:$0xff] %v2713
      %2970 = vst [vmem:[#allocation3 + $0x718] sm:$0xff] %v2714
      %2971 = vst [vmem:[#allocation3 + $0x720] sm:$0xff] %v2715
      %2972 = vst [vmem:[#allocation3 + $0x728] sm:$0xff] %v2716
      %2973 = vst [vmem:[#allocation3 + $0x730] sm:$0xff] %v2717
      %2974 = vst [vmem:[#allocation3 + $0x738] sm:$0xff] %v2718
      %2975 = vst [vmem:[#allocation3 + $0x740] sm:$0xff] %v2719
      %2976 = vst [vmem:[#allocation3 + $0x748] sm:$0xff] %v2720
      %2977 = vst [vmem:[#allocation3 + $0x750] sm:$0xff] %v2721
      %2978 = vst [vmem:[#allocation3 + $0x758] sm:$0xff] %v2722
      %2979 = vst [vmem:[#allocation3 + $0x760] sm:$0xff] %v2723
      %2980 = vst [vmem:[#allocation3 + $0x768] sm:$0xff] %v2724
      %2981 = vst [vmem:[#allocation3 + $0x770] sm:$0xff] %v2725
      %2982 = vst [vmem:[#allocation3 + $0x778] sm:$0xff] %v2726
      %2983 = vst [vmem:[#allocation3 + $0x780] sm:$0xff] %v2727
      %2984 = vst [vmem:[#allocation3 + $0x788] sm:$0xff] %v2728
      %2985 = vst [vmem:[#allocation3 + $0x790] sm:$0xff] %v2729
      %2986 = vst [vmem:[#allocation3 + $0x798] sm:$0xff] %v2730
      %2987 = vst [vmem:[#allocation3 + $0x7a0] sm:$0xff] %v2731
      %2988 = vst [vmem:[#allocation3 + $0x7a8] sm:$0xff] %v2732
      %2989 = vst [vmem:[#allocation3 + $0x7b0] sm:$0xff] %v2733
      %2990 = vst [vmem:[#allocation3 + $0x7b8] sm:$0xff] %v2734
      %2991 = vst [vmem:[#allocation3 + $0x7c0] sm:$0xff] %v2735
      %2992 = vst [vmem:[#allocation3 + $0x7c8] sm:$0xff] %v2736
      %2993 = vst [vmem:[#allocation3 + $0x7d0] sm:$0xff] %v2737
      %2994 = vst [vmem:[#allocation3 + $0x7d8] sm:$0xff] %v2738
      %2995 = vst [vmem:[#allocation3 + $0x7e0] sm:$0xff] %v2739
      %2996 = vst [vmem:[#allocation3 + $0x7e8] sm:$0xff] %v2740
      %2997 = vst [vmem:[#allocation3 + $0x7f0] sm:$0xff] %v2741
      %2998 = vst [vmem:[#allocation3 + $0x7f8] sm:$0xff] %v2742
    $region21: #{tpu_custom_call.1} parent=1 // pred_fallthru
      _
    // Predicated region
    $region22: #{tpu_custom_call.1} parent=1 // pred_check
      _
    $region23: #{tpu_custom_call.1} parent=1 // pred_check_branch
      %3000 = sbr.rel (0) target = $region25
    $region24: #{tpu_custom_call.1} parent=1 // pred_region
      %s3002 = ssub.s32 32768, 32768
      %3003 = vsyncadd [#allocation4], %s3002
      %s3004 = sshll.u32 [#allocation3], 4
      %s3005 = int_to_ptr.vmem [resolvable:$true] %s3004
      %3010 = dma.vmem_to_hbm [thread:$0]  %s3005, 32768, %s3, [#allocation4], 512, 512, 32
    $region25: #{tpu_custom_call.1} parent=1 // pred_fallthru
      _
    // Predicated region
    $region26: #{tpu_custom_call.1} parent=1 // pred_check
      _
    $region27: #{tpu_custom_call.1} parent=1 // pred_check_branch
      %3012 = sbr.rel (0) target = $region29
    $region28: #{tpu_custom_call.1} parent=1 // pred_region
      %3013 = dma.done [#allocation4], 32768
    $region29: #{tpu_custom_call.1} parent=1 // pred_fallthru
      _
    %3014 = vsyncpa [#allocation4], 1

</llo_original>
